<compile_context>
chip_gen: v7x
topology: tpu7x:2x2x1
jax: 0.10.0
libtpu: 0.0.40
codegen_flags: <defaults>
</compile_context>

<pallas_src>
import jax
import jax.numpy as jnp
import numpy as np
from jax import lax
from jax.experimental import pallas as pl
from jax.experimental.pallas import tpu as pltpu

HIDDEN = 64
NUM_LAYERS = 3
INPUT_SIZE = 1

# Column permutation PyTorch [i, f, g, o] -> kernel [i, f, o, g].
_GATE_PERM = np.concatenate([
    np.arange(0 * HIDDEN, 1 * HIDDEN),   # i
    np.arange(1 * HIDDEN, 2 * HIDDEN),   # f
    np.arange(3 * HIDDEN, 4 * HIDDEN),   # o
    np.arange(2 * HIDDEN, 3 * HIDDEN),   # g
])


# ------------------------------ fused kernel --------------------------------

def _fused_stock_lstm_kernel(x_ref,
                             wih0_ref, whh0_ref, b0_ref,
                             wih1_ref, whh1_ref, b1_ref,
                             wih2_ref, whh2_ref, b2_ref,
                             fcw_ref, fcb_ref,
                             out_ref,
                             gx_ref):
    """Fused 3-layer LSTM + Linear(H, 1).  No grid; everything VMEM-resident.

    x_ref   : (T, B, 1)   time-major input
    wih*_ref: (D, 4H)     input->gates weights (transposed, gate-permuted)
    whh*_ref: (H, 4H)     hidden->gates weights (transposed, gate-permuted)
    b*_ref  : (1, 4H)     b_ih + b_hh (gate-permuted)
    fcw_ref : (1, H)      FC weight row,  fcb_ref: (1, 1)
    out_ref : (B, 1)      final prediction (only HBM write of the kernel)
    gx_ref  : (T, B, 4H)  VMEM scratch: hoisted per-step gate inputs,
                          reused in-place layer-to-layer.
    Gate column order inside the kernel: [i | f | o | g].
    """
    T, B, _ = x_ref.shape
    H = whh0_ref.shape[0]

    def run_layer(whh_ref_l, wih_next_ref=None, b_next_ref=None):
        # Hoist all weight loads out of the recurrence.
        whh = whh_ref_l[...]
        wih_next = None if wih_next_ref is None else wih_next_ref[...]
        b_next = None if b_next_ref is None else b_next_ref[...]

        h0 = jnp.zeros((B, H), jnp.float32)
        c0 = jnp.zeros((B, H), jnp.float32)

        def step(t, carry):
            h, c = carry
            gates = gx_ref[t] + jnp.dot(h, whh,
                                        preferred_element_type=jnp.float32)
            sig = jax.nn.sigmoid(gates[:, :3 * H])     # [i | f | o] in one op
            g = jnp.tanh(gates[:, 3 * H:])             # [g]
            i_g = sig[:, 0 * H:1 * H]
            f_g = sig[:, 1 * H:2 * H]
            o_g = sig[:, 2 * H:3 * H]
            c_new = f_g * c + i_g * g
            h_new = o_g * jnp.tanh(c_new)
            if wih_next is not None:
                # Next layer's hoisted gate input.  Independent of the (h, c)
                # carry -> off the recurrence critical path; overwrites the gx
                # slot that was just consumed (safe: read-before-write at t).
                gx_ref[t] = (jnp.dot(h_new, wih_next,
                                     preferred_element_type=jnp.float32)
                             + b_next)
            return (h_new, c_new)

        h_last, _ = lax.fori_loop(0, T, step, (h0, c0), unroll=True)
        return h_last

    # ---- layer 0: D == 1 -> input projection is a broadcast scale (all T) ---
    gx_ref[...] = x_ref[...] * wih0_ref[...] + b0_ref[...]

    # ---- layer 0 recurrence, fused projection for layer 1 --------------------
    run_layer(whh0_ref, wih1_ref, b1_ref)
    # ---- layer 1 recurrence, fused projection for layer 2 --------------------
    run_layer(whh1_ref, wih2_ref, b2_ref)
    # ---- layer 2: only h[T-1] feeds the FC ------------------------------------
    h_last = run_layer(whh2_ref)

    # ---- FC head: VPU multiply + XLU lane reduction (no 1-col MXU matmul) ---
    out_ref[...] = (jnp.sum(h_last * fcw_ref[...], axis=-1, keepdims=True)
                    + fcb_ref[...])


# -------------------------------- wrappers -----------------------------------

def _stock_lstm_pallas(x_tm, kp):
    """x_tm: (T, B, 1) time-major -> (B, 1)."""
    T, B, _ = x_tm.shape
    H = HIDDEN

    def full(shape):
        zeros = (0,) * len(shape)
        return pl.BlockSpec(shape, lambda: zeros)

    return pl.pallas_call(
        _fused_stock_lstm_kernel,
        out_shape=jax.ShapeDtypeStruct((B, 1), jnp.float32),
        in_specs=[
            full((T, B, INPUT_SIZE)),
            full((INPUT_SIZE, 4 * H)), full((H, 4 * H)), full((1, 4 * H)),  # L0
            full((H, 4 * H)),          full((H, 4 * H)), full((1, 4 * H)),  # L1
            full((H, 4 * H)),          full((H, 4 * H)), full((1, 4 * H)),  # L2
            full((1, H)), full((1, 1)),                                      # FC
        ],
        out_specs=full((B, 1)),
        scratch_shapes=[
            pltpu.VMEM((T, B, 4 * H), jnp.float32),   # gx: hoisted gate inputs
        ],
        compiler_params=pltpu.CompilerParams(
            vmem_limit_bytes=32 * 1024 * 1024),
    )(x_tm,
      kp["l0"]["wih"], kp["l0"]["whh"], kp["l0"]["b"],
      kp["l1"]["wih"], kp["l1"]["whh"], kp["l1"]["b"],
      kp["l2"]["wih"], kp["l2"]["whh"], kp["l2"]["b"],
      kp["fc_w"], kp["fc_b"])


@jax.jit
def stock_lstm_forward(kp, x):
    """x: (B, T, 1) batch_first, float32 -> (B, 1)."""
    x_tm = jnp.transpose(x, (1, 0, 2)).astype(jnp.float32)   # (T, B, 1)
    return _stock_lstm_pallas(x_tm, kp)


# --------------------------------- params ------------------------------------

def init_params(key):
    """Raw params mirroring PyTorch nn.LSTM / nn.Linear shapes & gate order."""
    k = 1.0 / np.sqrt(HIDDEN)
    raw = {"layers": []}
    for layer in range(NUM_LAYERS):
        d_in = INPUT_SIZE if layer == 0 else HIDDEN
        key, k1, k2, k3, k4 = jax.random.split(key, 5)
        raw["layers"].append({
            "w_ih": jax.random.uniform(k1, (4 * HIDDEN, d_in), jnp.float32, -k, k),
            "w_hh": jax.random.uniform(k2, (4 * HIDDEN, HIDDEN), jnp.float32, -k, k),
            "b_ih": jax.random.uniform(k3, (4 * HIDDEN,), jnp.float32, -k, k),
            "b_hh": jax.random.uniform(k4, (4 * HIDDEN,), jnp.float32, -k, k),
        })
    key, k5, k6 = jax.random.split(key, 3)
    raw["fc_w"] = jax.random.uniform(k5, (1, HIDDEN), jnp.float32, -k, k)
    raw["fc_b"] = jax.random.uniform(k6, (1,), jnp.float32, -k, k)
    return raw


def kernel_params(raw):
    """Transpose weights, permute gate columns to [i,f,o,g], fold biases."""
    perm = jnp.asarray(_GATE_PERM)
    kp = {}
    for idx, lyr in enumerate(raw["layers"]):
        kp[f"l{idx}"] = {
            "wih": lyr["w_ih"].T[:, perm],                               # (D, 4H)
            "whh": lyr["w_hh"].T[:, perm],                               # (H, 4H)
            "b": (lyr["b_ih"] + lyr["b_hh"])[perm].reshape(1, 4 * HIDDEN),
        }
    kp["fc_w"] = raw["fc_w"].reshape(1, HIDDEN)                          # (1, H)
    kp["fc_b"] = raw["fc_b"].reshape(1, 1)
    return kp


# -------------------------------- reference -----------------------------------

def _reference_forward(raw, x):
    """Pure-JAX LSTM reference with PyTorch gate order [i, f, g, o]."""
    x_tm = jnp.transpose(x, (1, 0, 2)).astype(jnp.float32)
    H = HIDDEN
    h_seq = x_tm
    for lyr in raw["layers"]:
        T, B, _ = h_seq.shape
        w_ih_t, w_hh_t = lyr["w_ih"].T, lyr["w_hh"].T
        b = (lyr["b_ih"] + lyr["b_hh"]).reshape(1, -1)
        h = jnp.zeros((B, H), jnp.float32)
        c = jnp.zeros((B, H), jnp.float32)
        outs = []
        for t in range(T):
            gates = h_seq[t] @ w_ih_t + h @ w_hh_t + b
            i = jax.nn.sigmoid(gates[:, 0 * H:1 * H])
            f = jax.nn.sigmoid(gates[:, 1 * H:2 * H])
            g = jnp.tanh(gates[:, 2 * H:3 * H])
            o = jax.nn.sigmoid(gates[:, 3 * H:4 * H])
            c = f * c + i * g
            h = o * jnp.tanh(c)
            outs.append(h)
        h_seq = jnp.stack(outs, axis=0)
    return h_seq[-1] @ raw["fc_w"].T + raw["fc_b"]


# ---------------------------------- main --------------------------------------

if __name__ == "__main__":
    key = jax.random.PRNGKey(0)
    key, pkey, xkey = jax.random.split(key, 3)

    raw_params = init_params(pkey)
    kparams = kernel_params(raw_params)

    B, T = 2, 8
    x = jax.random.normal(xkey, (B, T, INPUT_SIZE), dtype=jnp.float32)

    out = stock_lstm_forward(kparams, x)
    out = jax.block_until_ready(out)

    ref = _reference_forward(raw_params, x)
    np.testing.assert_allclose(np.asarray(out), np.asarray(ref),
                               rtol=1e-5, atol=1e-5)
    assert out.shape == (B, 1)

    print("KERNEL_OK")
</pallas_src>

<mosaic_0001>
module attributes {stable_mosaic.version = 11 : i64} {
  func.func @_fused_stock_lstm_kernel(%arg0: memref<8x2x1xf32, #tpu.memory_space<vmem>>, %arg1: memref<1x256xf32, #tpu.memory_space<vmem>>, %arg2: memref<64x256xf32, #tpu.memory_space<vmem>>, %arg3: memref<1x256xf32, #tpu.memory_space<vmem>>, %arg4: memref<64x256xf32, #tpu.memory_space<vmem>>, %arg5: memref<64x256xf32, #tpu.memory_space<vmem>>, %arg6: memref<1x256xf32, #tpu.memory_space<vmem>>, %arg7: memref<64x256xf32, #tpu.memory_space<vmem>>, %arg8: memref<64x256xf32, #tpu.memory_space<vmem>>, %arg9: memref<1x256xf32, #tpu.memory_space<vmem>>, %arg10: memref<1x64xf32, #tpu.memory_space<vmem>>, %arg11: memref<1x1xf32, #tpu.memory_space<vmem>>, %arg12: memref<2x1xf32, #tpu.memory_space<vmem>>, %arg13: memref<8x2x256xf32, #tpu.memory_space<vmem>>) attributes {dimension_semantics = [], scalar_prefetch = 0 : i64, scratch_operands = 1 : i64, tpu.core_type = #tpu.core_type<tc>} {
    %c0 = arith.constant 0 : index
    %c0_0 = arith.constant 0 : index
    %c0_1 = arith.constant 0 : index
    %0 = vector.load %arg0[%c0, %c0_0, %c0_1] : memref<8x2x1xf32, #tpu.memory_space<vmem>>, vector<8x2x1xf32>
    %c0_2 = arith.constant 0 : index
    %c0_3 = arith.constant 0 : index
    %1 = vector.load %arg1[%c0_2, %c0_3] : memref<1x256xf32, #tpu.memory_space<vmem>>, vector<1x256xf32>
    %2 = vector.shape_cast %1 : vector<1x256xf32> to vector<1x1x256xf32>
    %3 = vector.broadcast %0 : vector<8x2x1xf32> to vector<8x2x256xf32>
    %4 = vector.broadcast %2 : vector<1x1x256xf32> to vector<8x2x256xf32>
    %5 = arith.mulf %3, %4 : vector<8x2x256xf32>
    %c0_4 = arith.constant 0 : index
    %c0_5 = arith.constant 0 : index
    %6 = vector.load %arg3[%c0_4, %c0_5] : memref<1x256xf32, #tpu.memory_space<vmem>>, vector<1x256xf32>
    %7 = vector.shape_cast %6 : vector<1x256xf32> to vector<1x1x256xf32>
    %8 = vector.broadcast %7 : vector<1x1x256xf32> to vector<8x2x256xf32>
    %9 = arith.addf %5, %8 : vector<8x2x256xf32>
    %c0_6 = arith.constant 0 : index
    %c0_7 = arith.constant 0 : index
    %c0_8 = arith.constant 0 : index
    %10 = vector.load %arg13[%c0_6, %c0_7, %c0_8] : memref<8x2x256xf32, #tpu.memory_space<vmem>>, vector<8x2x256xf32>
    tpu.vector_store %arg13[%c0_6, %c0_7, %c0_8], %9 {strides = array<i32>} : memref<8x2x256xf32, #tpu.memory_space<vmem>>, vector<8x2x256xf32>,
    %c0_9 = arith.constant 0 : index
    %c0_10 = arith.constant 0 : index
    %11 = vector.load %arg2[%c0_9, %c0_10] : memref<64x256xf32, #tpu.memory_space<vmem>>, vector<64x256xf32>
    %c0_11 = arith.constant 0 : index
    %c0_12 = arith.constant 0 : index
    %12 = vector.load %arg4[%c0_11, %c0_12] : memref<64x256xf32, #tpu.memory_space<vmem>>, vector<64x256xf32>
    %c0_13 = arith.constant 0 : index
    %c0_14 = arith.constant 0 : index
    %13 = vector.load %arg6[%c0_13, %c0_14] : memref<1x256xf32, #tpu.memory_space<vmem>>, vector<1x256xf32>
    %cst = arith.constant 0.000000e+00 : f32
    %14 = vector.broadcast %cst : f32 to vector<2x64xf32>
    %cst_15 = arith.constant 0.000000e+00 : f32
    %15 = vector.broadcast %cst_15 : f32 to vector<2x64xf32>
    %c0_i32 = arith.constant 0 : i32
    %16 = arith.index_cast %c0_i32 : i32 to index
    %c0_16 = arith.constant 0 : index
    %c0_17 = arith.constant 0 : index
    %17 = vector.load %arg13[%16, %c0_16, %c0_17] : memref<8x2x256xf32, #tpu.memory_space<vmem>>, vector<1x2x256xf32>
    %18 = vector.shape_cast %17 : vector<1x2x256xf32> to vector<2x256xf32>
    %cst_18 = arith.constant dense<0.000000e+00> : vector<2x256xf32>
    %19 = tpu.matmul %14, %11, %cst_18 {dimension_numbers = #tpu.dot_dimension_numbers<[1], [0], [0], [1], [0, 0, 1, 1], [], []>} : vector<2x64xf32>, vector<64x256xf32>, vector<2x256xf32> -> vector<2x256xf32>
    %20 = arith.addf %18, %19 : vector<2x256xf32>
    %21 = vector.extract_strided_slice %20 {offsets = [0, 0], sizes = [2, 192], strides = [1, 1]} : vector<2x256xf32> to vector<2x192xf32>
    %22 = arith.negf %21 : vector<2x192xf32>
    %23 = math.exp %22 : vector<2x192xf32>
    %cst_19 = arith.constant 1.000000e+00 : f32
    %24 = vector.broadcast %cst_19 : f32 to vector<2x192xf32>
    %25 = arith.addf %24, %23 : vector<2x192xf32>
    %26 = arith.divf %24, %25 : vector<2x192xf32>
    %27 = vector.extract_strided_slice %20 {offsets = [0, 192], sizes = [2, 64], strides = [1, 1]} : vector<2x256xf32> to vector<2x64xf32>
    %28 = math.tanh %27 : vector<2x64xf32>
    %29 = vector.extract_strided_slice %26 {offsets = [0, 0], sizes = [2, 64], strides = [1, 1]} : vector<2x192xf32> to vector<2x64xf32>
    %30 = vector.extract_strided_slice %26 {offsets = [0, 64], sizes = [2, 64], strides = [1, 1]} : vector<2x192xf32> to vector<2x64xf32>
    %31 = vector.extract_strided_slice %26 {offsets = [0, 128], sizes = [2, 64], strides = [1, 1]} : vector<2x192xf32> to vector<2x64xf32>
    %32 = arith.mulf %30, %15 : vector<2x64xf32>
    %33 = arith.mulf %29, %28 : vector<2x64xf32>
    %34 = arith.addf %32, %33 : vector<2x64xf32>
    %35 = math.tanh %34 : vector<2x64xf32>
    %36 = arith.mulf %31, %35 : vector<2x64xf32>
    %cst_20 = arith.constant dense<0.000000e+00> : vector<2x256xf32>
    %37 = tpu.matmul %36, %12, %cst_20 {dimension_numbers = #tpu.dot_dimension_numbers<[1], [0], [0], [1], [0, 0, 1, 1], [], []>} : vector<2x64xf32>, vector<64x256xf32>, vector<2x256xf32> -> vector<2x256xf32>
    %38 = vector.broadcast %13 : vector<1x256xf32> to vector<2x256xf32>
    %39 = arith.addf %37, %38 : vector<2x256xf32>
    %40 = arith.index_cast %c0_i32 : i32 to index
    %c0_21 = arith.constant 0 : index
    %c0_22 = arith.constant 0 : index
    %41 = vector.load %arg13[%40, %c0_21, %c0_22] : memref<8x2x256xf32, #tpu.memory_space<vmem>>, vector<1x2x256xf32>
    %42 = vector.shape_cast %41 : vector<1x2x256xf32> to vector<2x256xf32>
    %43 = vector.shape_cast %39 : vector<2x256xf32> to vector<1x2x256xf32>
    tpu.vector_store %arg13[%40, %c0_21, %c0_22], %43 {strides = array<i32>} : memref<8x2x256xf32, #tpu.memory_space<vmem>>, vector<1x2x256xf32>,
    %c1_i32 = arith.constant 1 : i32
    %44 = arith.index_cast %c1_i32 : i32 to index
    %c0_23 = arith.constant 0 : index
    %c0_24 = arith.constant 0 : index
    %45 = vector.load %arg13[%44, %c0_23, %c0_24] : memref<8x2x256xf32, #tpu.memory_space<vmem>>, vector<1x2x256xf32>
    %46 = vector.shape_cast %45 : vector<1x2x256xf32> to vector<2x256xf32>
    %cst_25 = arith.constant dense<0.000000e+00> : vector<2x256xf32>
    %47 = tpu.matmul %36, %11, %cst_25 {dimension_numbers = #tpu.dot_dimension_numbers<[1], [0], [0], [1], [0, 0, 1, 1], [], []>} : vector<2x64xf32>, vector<64x256xf32>, vector<2x256xf32> -> vector<2x256xf32>
    %48 = arith.addf %46, %47 : vector<2x256xf32>
    %49 = vector.extract_strided_slice %48 {offsets = [0, 0], sizes = [2, 192], strides = [1, 1]} : vector<2x256xf32> to vector<2x192xf32>
    %50 = arith.negf %49 : vector<2x192xf32>
    %51 = math.exp %50 : vector<2x192xf32>
    %cst_26 = arith.constant 1.000000e+00 : f32
    %52 = vector.broadcast %cst_26 : f32 to vector<2x192xf32>
    %53 = arith.addf %52, %51 : vector<2x192xf32>
    %54 = arith.divf %52, %53 : vector<2x192xf32>
    %55 = vector.extract_strided_slice %48 {offsets = [0, 192], sizes = [2, 64], strides = [1, 1]} : vector<2x256xf32> to vector<2x64xf32>
    %56 = math.tanh %55 : vector<2x64xf32>
    %57 = vector.extract_strided_slice %54 {offsets = [0, 0], sizes = [2, 64], strides = [1, 1]} : vector<2x192xf32> to vector<2x64xf32>
    %58 = vector.extract_strided_slice %54 {offsets = [0, 64], sizes = [2, 64], strides = [1, 1]} : vector<2x192xf32> to vector<2x64xf32>
    %59 = vector.extract_strided_slice %54 {offsets = [0, 128], sizes = [2, 64], strides = [1, 1]} : vector<2x192xf32> to vector<2x64xf32>
    %60 = arith.mulf %58, %34 : vector<2x64xf32>
    %61 = arith.mulf %57, %56 : vector<2x64xf32>
    %62 = arith.addf %60, %61 : vector<2x64xf32>
    %63 = math.tanh %62 : vector<2x64xf32>
    %64 = arith.mulf %59, %63 : vector<2x64xf32>
    %cst_27 = arith.constant dense<0.000000e+00> : vector<2x256xf32>
    %65 = tpu.matmul %64, %12, %cst_27 {dimension_numbers = #tpu.dot_dimension_numbers<[1], [0], [0], [1], [0, 0, 1, 1], [], []>} : vector<2x64xf32>, vector<64x256xf32>, vector<2x256xf32> -> vector<2x256xf32>
    %66 = vector.broadcast %13 : vector<1x256xf32> to vector<2x256xf32>
    %67 = arith.addf %65, %66 : vector<2x256xf32>
    %68 = arith.index_cast %c1_i32 : i32 to index
    %c0_28 = arith.constant 0 : index
    %c0_29 = arith.constant 0 : index
    %69 = vector.load %arg13[%68, %c0_28, %c0_29] : memref<8x2x256xf32, #tpu.memory_space<vmem>>, vector<1x2x256xf32>
    %70 = vector.shape_cast %69 : vector<1x2x256xf32> to vector<2x256xf32>
    %71 = vector.shape_cast %67 : vector<2x256xf32> to vector<1x2x256xf32>
    tpu.vector_store %arg13[%68, %c0_28, %c0_29], %71 {strides = array<i32>} : memref<8x2x256xf32, #tpu.memory_space<vmem>>, vector<1x2x256xf32>,
    %c2_i32 = arith.constant 2 : i32
    %72 = arith.index_cast %c2_i32 : i32 to index
    %c0_30 = arith.constant 0 : index
    %c0_31 = arith.constant 0 : index
    %73 = vector.load %arg13[%72, %c0_30, %c0_31] : memref<8x2x256xf32, #tpu.memory_space<vmem>>, vector<1x2x256xf32>
    %74 = vector.shape_cast %73 : vector<1x2x256xf32> to vector<2x256xf32>
    %cst_32 = arith.constant dense<0.000000e+00> : vector<2x256xf32>
    %75 = tpu.matmul %64, %11, %cst_32 {dimension_numbers = #tpu.dot_dimension_numbers<[1], [0], [0], [1], [0, 0, 1, 1], [], []>} : vector<2x64xf32>, vector<64x256xf32>, vector<2x256xf32> -> vector<2x256xf32>
    %76 = arith.addf %74, %75 : vector<2x256xf32>
    %77 = vector.extract_strided_slice %76 {offsets = [0, 0], sizes = [2, 192], strides = [1, 1]} : vector<2x256xf32> to vector<2x192xf32>
    %78 = arith.negf %77 : vector<2x192xf32>
    %79 = math.exp %78 : vector<2x192xf32>
    %cst_33 = arith.constant 1.000000e+00 : f32
    %80 = vector.broadcast %cst_33 : f32 to vector<2x192xf32>
    %81 = arith.addf %80, %79 : vector<2x192xf32>
    %82 = arith.divf %80, %81 : vector<2x192xf32>
    %83 = vector.extract_strided_slice %76 {offsets = [0, 192], sizes = [2, 64], strides = [1, 1]} : vector<2x256xf32> to vector<2x64xf32>
    %84 = math.tanh %83 : vector<2x64xf32>
    %85 = vector.extract_strided_slice %82 {offsets = [0, 0], sizes = [2, 64], strides = [1, 1]} : vector<2x192xf32> to vector<2x64xf32>
    %86 = vector.extract_strided_slice %82 {offsets = [0, 64], sizes = [2, 64], strides = [1, 1]} : vector<2x192xf32> to vector<2x64xf32>
    %87 = vector.extract_strided_slice %82 {offsets = [0, 128], sizes = [2, 64], strides = [1, 1]} : vector<2x192xf32> to vector<2x64xf32>
    %88 = arith.mulf %86, %62 : vector<2x64xf32>
    %89 = arith.mulf %85, %84 : vector<2x64xf32>
    %90 = arith.addf %88, %89 : vector<2x64xf32>
    %91 = math.tanh %90 : vector<2x64xf32>
    %92 = arith.mulf %87, %91 : vector<2x64xf32>
    %cst_34 = arith.constant dense<0.000000e+00> : vector<2x256xf32>
    %93 = tpu.matmul %92, %12, %cst_34 {dimension_numbers = #tpu.dot_dimension_numbers<[1], [0], [0], [1], [0, 0, 1, 1], [], []>} : vector<2x64xf32>, vector<64x256xf32>, vector<2x256xf32> -> vector<2x256xf32>
    %94 = vector.broadcast %13 : vector<1x256xf32> to vector<2x256xf32>
    %95 = arith.addf %93, %94 : vector<2x256xf32>
    %96 = arith.index_cast %c2_i32 : i32 to index
    %c0_35 = arith.constant 0 : index
    %c0_36 = arith.constant 0 : index
    %97 = vector.load %arg13[%96, %c0_35, %c0_36] : memref<8x2x256xf32, #tpu.memory_space<vmem>>, vector<1x2x256xf32>
    %98 = vector.shape_cast %97 : vector<1x2x256xf32> to vector<2x256xf32>
    %99 = vector.shape_cast %95 : vector<2x256xf32> to vector<1x2x256xf32>
    tpu.vector_store %arg13[%96, %c0_35, %c0_36], %99 {strides = array<i32>} : memref<8x2x256xf32, #tpu.memory_space<vmem>>, vector<1x2x256xf32>,
    %c3_i32 = arith.constant 3 : i32
    %100 = arith.index_cast %c3_i32 : i32 to index
    %c0_37 = arith.constant 0 : index
    %c0_38 = arith.constant 0 : index
    %101 = vector.load %arg13[%100, %c0_37, %c0_38] : memref<8x2x256xf32, #tpu.memory_space<vmem>>, vector<1x2x256xf32>
    %102 = vector.shape_cast %101 : vector<1x2x256xf32> to vector<2x256xf32>
    %cst_39 = arith.constant dense<0.000000e+00> : vector<2x256xf32>
    %103 = tpu.matmul %92, %11, %cst_39 {dimension_numbers = #tpu.dot_dimension_numbers<[1], [0], [0], [1], [0, 0, 1, 1], [], []>} : vector<2x64xf32>, vector<64x256xf32>, vector<2x256xf32> -> vector<2x256xf32>
    %104 = arith.addf %102, %103 : vector<2x256xf32>
    %105 = vector.extract_strided_slice %104 {offsets = [0, 0], sizes = [2, 192], strides = [1, 1]} : vector<2x256xf32> to vector<2x192xf32>
    %106 = arith.negf %105 : vector<2x192xf32>
    %107 = math.exp %106 : vector<2x192xf32>
    %cst_40 = arith.constant 1.000000e+00 : f32
    %108 = vector.broadcast %cst_40 : f32 to vector<2x192xf32>
    %109 = arith.addf %108, %107 : vector<2x192xf32>
    %110 = arith.divf %108, %109 : vector<2x192xf32>
    %111 = vector.extract_strided_slice %104 {offsets = [0, 192], sizes = [2, 64], strides = [1, 1]} : vector<2x256xf32> to vector<2x64xf32>
    %112 = math.tanh %111 : vector<2x64xf32>
    %113 = vector.extract_strided_slice %110 {offsets = [0, 0], sizes = [2, 64], strides = [1, 1]} : vector<2x192xf32> to vector<2x64xf32>
    %114 = vector.extract_strided_slice %110 {offsets = [0, 64], sizes = [2, 64], strides = [1, 1]} : vector<2x192xf32> to vector<2x64xf32>
    %115 = vector.extract_strided_slice %110 {offsets = [0, 128], sizes = [2, 64], strides = [1, 1]} : vector<2x192xf32> to vector<2x64xf32>
    %116 = arith.mulf %114, %90 : vector<2x64xf32>
    %117 = arith.mulf %113, %112 : vector<2x64xf32>
    %118 = arith.addf %116, %117 : vector<2x64xf32>
    %119 = math.tanh %118 : vector<2x64xf32>
    %120 = arith.mulf %115, %119 : vector<2x64xf32>
    %cst_41 = arith.constant dense<0.000000e+00> : vector<2x256xf32>
    %121 = tpu.matmul %120, %12, %cst_41 {dimension_numbers = #tpu.dot_dimension_numbers<[1], [0], [0], [1], [0, 0, 1, 1], [], []>} : vector<2x64xf32>, vector<64x256xf32>, vector<2x256xf32> -> vector<2x256xf32>
    %122 = vector.broadcast %13 : vector<1x256xf32> to vector<2x256xf32>
    %123 = arith.addf %121, %122 : vector<2x256xf32>
    %124 = arith.index_cast %c3_i32 : i32 to index
    %c0_42 = arith.constant 0 : index
    %c0_43 = arith.constant 0 : index
    %125 = vector.load %arg13[%124, %c0_42, %c0_43] : memref<8x2x256xf32, #tpu.memory_space<vmem>>, vector<1x2x256xf32>
    %126 = vector.shape_cast %125 : vector<1x2x256xf32> to vector<2x256xf32>
    %127 = vector.shape_cast %123 : vector<2x256xf32> to vector<1x2x256xf32>
    tpu.vector_store %arg13[%124, %c0_42, %c0_43], %127 {strides = array<i32>} : memref<8x2x256xf32, #tpu.memory_space<vmem>>, vector<1x2x256xf32>,
    %c4_i32 = arith.constant 4 : i32
    %128 = arith.index_cast %c4_i32 : i32 to index
    %c0_44 = arith.constant 0 : index
    %c0_45 = arith.constant 0 : index
    %129 = vector.load %arg13[%128, %c0_44, %c0_45] : memref<8x2x256xf32, #tpu.memory_space<vmem>>, vector<1x2x256xf32>
    %130 = vector.shape_cast %129 : vector<1x2x256xf32> to vector<2x256xf32>
    %cst_46 = arith.constant dense<0.000000e+00> : vector<2x256xf32>
    %131 = tpu.matmul %120, %11, %cst_46 {dimension_numbers = #tpu.dot_dimension_numbers<[1], [0], [0], [1], [0, 0, 1, 1], [], []>} : vector<2x64xf32>, vector<64x256xf32>, vector<2x256xf32> -> vector<2x256xf32>
    %132 = arith.addf %130, %131 : vector<2x256xf32>
    %133 = vector.extract_strided_slice %132 {offsets = [0, 0], sizes = [2, 192], strides = [1, 1]} : vector<2x256xf32> to vector<2x192xf32>
    %134 = arith.negf %133 : vector<2x192xf32>
    %135 = math.exp %134 : vector<2x192xf32>
    %cst_47 = arith.constant 1.000000e+00 : f32
    %136 = vector.broadcast %cst_47 : f32 to vector<2x192xf32>
    %137 = arith.addf %136, %135 : vector<2x192xf32>
    %138 = arith.divf %136, %137 : vector<2x192xf32>
    %139 = vector.extract_strided_slice %132 {offsets = [0, 192], sizes = [2, 64], strides = [1, 1]} : vector<2x256xf32> to vector<2x64xf32>
    %140 = math.tanh %139 : vector<2x64xf32>
    %141 = vector.extract_strided_slice %138 {offsets = [0, 0], sizes = [2, 64], strides = [1, 1]} : vector<2x192xf32> to vector<2x64xf32>
    %142 = vector.extract_strided_slice %138 {offsets = [0, 64], sizes = [2, 64], strides = [1, 1]} : vector<2x192xf32> to vector<2x64xf32>
    %143 = vector.extract_strided_slice %138 {offsets = [0, 128], sizes = [2, 64], strides = [1, 1]} : vector<2x192xf32> to vector<2x64xf32>
    %144 = arith.mulf %142, %118 : vector<2x64xf32>
    %145 = arith.mulf %141, %140 : vector<2x64xf32>
    %146 = arith.addf %144, %145 : vector<2x64xf32>
    %147 = math.tanh %146 : vector<2x64xf32>
    %148 = arith.mulf %143, %147 : vector<2x64xf32>
    %cst_48 = arith.constant dense<0.000000e+00> : vector<2x256xf32>
    %149 = tpu.matmul %148, %12, %cst_48 {dimension_numbers = #tpu.dot_dimension_numbers<[1], [0], [0], [1], [0, 0, 1, 1], [], []>} : vector<2x64xf32>, vector<64x256xf32>, vector<2x256xf32> -> vector<2x256xf32>
    %150 = vector.broadcast %13 : vector<1x256xf32> to vector<2x256xf32>
    %151 = arith.addf %149, %150 : vector<2x256xf32>
    %152 = arith.index_cast %c4_i32 : i32 to index
    %c0_49 = arith.constant 0 : index
    %c0_50 = arith.constant 0 : index
    %153 = vector.load %arg13[%152, %c0_49, %c0_50] : memref<8x2x256xf32, #tpu.memory_space<vmem>>, vector<1x2x256xf32>
    %154 = vector.shape_cast %153 : vector<1x2x256xf32> to vector<2x256xf32>
    %155 = vector.shape_cast %151 : vector<2x256xf32> to vector<1x2x256xf32>
    tpu.vector_store %arg13[%152, %c0_49, %c0_50], %155 {strides = array<i32>} : memref<8x2x256xf32, #tpu.memory_space<vmem>>, vector<1x2x256xf32>,
    %c5_i32 = arith.constant 5 : i32
    %156 = arith.index_cast %c5_i32 : i32 to index
    %c0_51 = arith.constant 0 : index
    %c0_52 = arith.constant 0 : index
    %157 = vector.load %arg13[%156, %c0_51, %c0_52] : memref<8x2x256xf32, #tpu.memory_space<vmem>>, vector<1x2x256xf32>
    %158 = vector.shape_cast %157 : vector<1x2x256xf32> to vector<2x256xf32>
    %cst_53 = arith.constant dense<0.000000e+00> : vector<2x256xf32>
    %159 = tpu.matmul %148, %11, %cst_53 {dimension_numbers = #tpu.dot_dimension_numbers<[1], [0], [0], [1], [0, 0, 1, 1], [], []>} : vector<2x64xf32>, vector<64x256xf32>, vector<2x256xf32> -> vector<2x256xf32>
    %160 = arith.addf %158, %159 : vector<2x256xf32>
    %161 = vector.extract_strided_slice %160 {offsets = [0, 0], sizes = [2, 192], strides = [1, 1]} : vector<2x256xf32> to vector<2x192xf32>
    %162 = arith.negf %161 : vector<2x192xf32>
    %163 = math.exp %162 : vector<2x192xf32>
    %cst_54 = arith.constant 1.000000e+00 : f32
    %164 = vector.broadcast %cst_54 : f32 to vector<2x192xf32>
    %165 = arith.addf %164, %163 : vector<2x192xf32>
    %166 = arith.divf %164, %165 : vector<2x192xf32>
    %167 = vector.extract_strided_slice %160 {offsets = [0, 192], sizes = [2, 64], strides = [1, 1]} : vector<2x256xf32> to vector<2x64xf32>
    %168 = math.tanh %167 : vector<2x64xf32>
    %169 = vector.extract_strided_slice %166 {offsets = [0, 0], sizes = [2, 64], strides = [1, 1]} : vector<2x192xf32> to vector<2x64xf32>
    %170 = vector.extract_strided_slice %166 {offsets = [0, 64], sizes = [2, 64], strides = [1, 1]} : vector<2x192xf32> to vector<2x64xf32>
    %171 = vector.extract_strided_slice %166 {offsets = [0, 128], sizes = [2, 64], strides = [1, 1]} : vector<2x192xf32> to vector<2x64xf32>
    %172 = arith.mulf %170, %146 : vector<2x64xf32>
    %173 = arith.mulf %169, %168 : vector<2x64xf32>
    %174 = arith.addf %172, %173 : vector<2x64xf32>
    %175 = math.tanh %174 : vector<2x64xf32>
    %176 = arith.mulf %171, %175 : vector<2x64xf32>
    %cst_55 = arith.constant dense<0.000000e+00> : vector<2x256xf32>
    %177 = tpu.matmul %176, %12, %cst_55 {dimension_numbers = #tpu.dot_dimension_numbers<[1], [0], [0], [1], [0, 0, 1, 1], [], []>} : vector<2x64xf32>, vector<64x256xf32>, vector<2x256xf32> -> vector<2x256xf32>
    %178 = vector.broadcast %13 : vector<1x256xf32> to vector<2x256xf32>
    %179 = arith.addf %177, %178 : vector<2x256xf32>
    %180 = arith.index_cast %c5_i32 : i32 to index
    %c0_56 = arith.constant 0 : index
    %c0_57 = arith.constant 0 : index
    %181 = vector.load %arg13[%180, %c0_56, %c0_57] : memref<8x2x256xf32, #tpu.memory_space<vmem>>, vector<1x2x256xf32>
    %182 = vector.shape_cast %181 : vector<1x2x256xf32> to vector<2x256xf32>
    %183 = vector.shape_cast %179 : vector<2x256xf32> to vector<1x2x256xf32>
    tpu.vector_store %arg13[%180, %c0_56, %c0_57], %183 {strides = array<i32>} : memref<8x2x256xf32, #tpu.memory_space<vmem>>, vector<1x2x256xf32>,
    %c6_i32 = arith.constant 6 : i32
    %184 = arith.index_cast %c6_i32 : i32 to index
    %c0_58 = arith.constant 0 : index
    %c0_59 = arith.constant 0 : index
    %185 = vector.load %arg13[%184, %c0_58, %c0_59] : memref<8x2x256xf32, #tpu.memory_space<vmem>>, vector<1x2x256xf32>
    %186 = vector.shape_cast %185 : vector<1x2x256xf32> to vector<2x256xf32>
    %cst_60 = arith.constant dense<0.000000e+00> : vector<2x256xf32>
    %187 = tpu.matmul %176, %11, %cst_60 {dimension_numbers = #tpu.dot_dimension_numbers<[1], [0], [0], [1], [0, 0, 1, 1], [], []>} : vector<2x64xf32>, vector<64x256xf32>, vector<2x256xf32> -> vector<2x256xf32>
    %188 = arith.addf %186, %187 : vector<2x256xf32>
    %189 = vector.extract_strided_slice %188 {offsets = [0, 0], sizes = [2, 192], strides = [1, 1]} : vector<2x256xf32> to vector<2x192xf32>
    %190 = arith.negf %189 : vector<2x192xf32>
    %191 = math.exp %190 : vector<2x192xf32>
    %cst_61 = arith.constant 1.000000e+00 : f32
    %192 = vector.broadcast %cst_61 : f32 to vector<2x192xf32>
    %193 = arith.addf %192, %191 : vector<2x192xf32>
    %194 = arith.divf %192, %193 : vector<2x192xf32>
    %195 = vector.extract_strided_slice %188 {offsets = [0, 192], sizes = [2, 64], strides = [1, 1]} : vector<2x256xf32> to vector<2x64xf32>
    %196 = math.tanh %195 : vector<2x64xf32>
    %197 = vector.extract_strided_slice %194 {offsets = [0, 0], sizes = [2, 64], strides = [1, 1]} : vector<2x192xf32> to vector<2x64xf32>
    %198 = vector.extract_strided_slice %194 {offsets = [0, 64], sizes = [2, 64], strides = [1, 1]} : vector<2x192xf32> to vector<2x64xf32>
    %199 = vector.extract_strided_slice %194 {offsets = [0, 128], sizes = [2, 64], strides = [1, 1]} : vector<2x192xf32> to vector<2x64xf32>
    %200 = arith.mulf %198, %174 : vector<2x64xf32>
    %201 = arith.mulf %197, %196 : vector<2x64xf32>
    %202 = arith.addf %200, %201 : vector<2x64xf32>
    %203 = math.tanh %202 : vector<2x64xf32>
    %204 = arith.mulf %199, %203 : vector<2x64xf32>
    %cst_62 = arith.constant dense<0.000000e+00> : vector<2x256xf32>
    %205 = tpu.matmul %204, %12, %cst_62 {dimension_numbers = #tpu.dot_dimension_numbers<[1], [0], [0], [1], [0, 0, 1, 1], [], []>} : vector<2x64xf32>, vector<64x256xf32>, vector<2x256xf32> -> vector<2x256xf32>
    %206 = vector.broadcast %13 : vector<1x256xf32> to vector<2x256xf32>
    %207 = arith.addf %205, %206 : vector<2x256xf32>
    %208 = arith.index_cast %c6_i32 : i32 to index
    %c0_63 = arith.constant 0 : index
    %c0_64 = arith.constant 0 : index
    %209 = vector.load %arg13[%208, %c0_63, %c0_64] : memref<8x2x256xf32, #tpu.memory_space<vmem>>, vector<1x2x256xf32>
    %210 = vector.shape_cast %209 : vector<1x2x256xf32> to vector<2x256xf32>
    %211 = vector.shape_cast %207 : vector<2x256xf32> to vector<1x2x256xf32>
    tpu.vector_store %arg13[%208, %c0_63, %c0_64], %211 {strides = array<i32>} : memref<8x2x256xf32, #tpu.memory_space<vmem>>, vector<1x2x256xf32>,
    %c7_i32 = arith.constant 7 : i32
    %212 = arith.index_cast %c7_i32 : i32 to index
    %c0_65 = arith.constant 0 : index
    %c0_66 = arith.constant 0 : index
    %213 = vector.load %arg13[%212, %c0_65, %c0_66] : memref<8x2x256xf32, #tpu.memory_space<vmem>>, vector<1x2x256xf32>
    %214 = vector.shape_cast %213 : vector<1x2x256xf32> to vector<2x256xf32>
    %cst_67 = arith.constant dense<0.000000e+00> : vector<2x256xf32>
    %215 = tpu.matmul %204, %11, %cst_67 {dimension_numbers = #tpu.dot_dimension_numbers<[1], [0], [0], [1], [0, 0, 1, 1], [], []>} : vector<2x64xf32>, vector<64x256xf32>, vector<2x256xf32> -> vector<2x256xf32>
    %216 = arith.addf %214, %215 : vector<2x256xf32>
    %217 = vector.extract_strided_slice %216 {offsets = [0, 0], sizes = [2, 192], strides = [1, 1]} : vector<2x256xf32> to vector<2x192xf32>
    %218 = arith.negf %217 : vector<2x192xf32>
    %219 = math.exp %218 : vector<2x192xf32>
    %cst_68 = arith.constant 1.000000e+00 : f32
    %220 = vector.broadcast %cst_68 : f32 to vector<2x192xf32>
    %221 = arith.addf %220, %219 : vector<2x192xf32>
    %222 = arith.divf %220, %221 : vector<2x192xf32>
    %223 = vector.extract_strided_slice %216 {offsets = [0, 192], sizes = [2, 64], strides = [1, 1]} : vector<2x256xf32> to vector<2x64xf32>
    %224 = math.tanh %223 : vector<2x64xf32>
    %225 = vector.extract_strided_slice %222 {offsets = [0, 0], sizes = [2, 64], strides = [1, 1]} : vector<2x192xf32> to vector<2x64xf32>
    %226 = vector.extract_strided_slice %222 {offsets = [0, 64], sizes = [2, 64], strides = [1, 1]} : vector<2x192xf32> to vector<2x64xf32>
    %227 = vector.extract_strided_slice %222 {offsets = [0, 128], sizes = [2, 64], strides = [1, 1]} : vector<2x192xf32> to vector<2x64xf32>
    %228 = arith.mulf %226, %202 : vector<2x64xf32>
    %229 = arith.mulf %225, %224 : vector<2x64xf32>
    %230 = arith.addf %228, %229 : vector<2x64xf32>
    %231 = math.tanh %230 : vector<2x64xf32>
    %232 = arith.mulf %227, %231 : vector<2x64xf32>
    %cst_69 = arith.constant dense<0.000000e+00> : vector<2x256xf32>
    %233 = tpu.matmul %232, %12, %cst_69 {dimension_numbers = #tpu.dot_dimension_numbers<[1], [0], [0], [1], [0, 0, 1, 1], [], []>} : vector<2x64xf32>, vector<64x256xf32>, vector<2x256xf32> -> vector<2x256xf32>
    %234 = vector.broadcast %13 : vector<1x256xf32> to vector<2x256xf32>
    %235 = arith.addf %233, %234 : vector<2x256xf32>
    %236 = arith.index_cast %c7_i32 : i32 to index
    %c0_70 = arith.constant 0 : index
    %c0_71 = arith.constant 0 : index
    %237 = vector.load %arg13[%236, %c0_70, %c0_71] : memref<8x2x256xf32, #tpu.memory_space<vmem>>, vector<1x2x256xf32>
    %238 = vector.shape_cast %237 : vector<1x2x256xf32> to vector<2x256xf32>
    %239 = vector.shape_cast %235 : vector<2x256xf32> to vector<1x2x256xf32>
    tpu.vector_store %arg13[%236, %c0_70, %c0_71], %239 {strides = array<i32>} : memref<8x2x256xf32, #tpu.memory_space<vmem>>, vector<1x2x256xf32>,
    %c8_i32 = arith.constant 8 : i32
    %c0_72 = arith.constant 0 : index
    %c0_73 = arith.constant 0 : index
    %240 = vector.load %arg5[%c0_72, %c0_73] : memref<64x256xf32, #tpu.memory_space<vmem>>, vector<64x256xf32>
    %c0_74 = arith.constant 0 : index
    %c0_75 = arith.constant 0 : index
    %241 = vector.load %arg7[%c0_74, %c0_75] : memref<64x256xf32, #tpu.memory_space<vmem>>, vector<64x256xf32>
    %c0_76 = arith.constant 0 : index
    %c0_77 = arith.constant 0 : index
    %242 = vector.load %arg9[%c0_76, %c0_77] : memref<1x256xf32, #tpu.memory_space<vmem>>, vector<1x256xf32>
    %cst_78 = arith.constant 0.000000e+00 : f32
    %243 = vector.broadcast %cst_78 : f32 to vector<2x64xf32>
    %cst_79 = arith.constant 0.000000e+00 : f32
    %244 = vector.broadcast %cst_79 : f32 to vector<2x64xf32>
    %c0_i32_80 = arith.constant 0 : i32
    %245 = arith.index_cast %c0_i32_80 : i32 to index
    %c0_81 = arith.constant 0 : index
    %c0_82 = arith.constant 0 : index
    %246 = vector.load %arg13[%245, %c0_81, %c0_82] : memref<8x2x256xf32, #tpu.memory_space<vmem>>, vector<1x2x256xf32>
    %247 = vector.shape_cast %246 : vector<1x2x256xf32> to vector<2x256xf32>
    %cst_83 = arith.constant dense<0.000000e+00> : vector<2x256xf32>
    %248 = tpu.matmul %243, %240, %cst_83 {dimension_numbers = #tpu.dot_dimension_numbers<[1], [0], [0], [1], [0, 0, 1, 1], [], []>} : vector<2x64xf32>, vector<64x256xf32>, vector<2x256xf32> -> vector<2x256xf32>
    %249 = arith.addf %247, %248 : vector<2x256xf32>
    %250 = vector.extract_strided_slice %249 {offsets = [0, 0], sizes = [2, 192], strides = [1, 1]} : vector<2x256xf32> to vector<2x192xf32>
    %251 = arith.negf %250 : vector<2x192xf32>
    %252 = math.exp %251 : vector<2x192xf32>
    %cst_84 = arith.constant 1.000000e+00 : f32
    %253 = vector.broadcast %cst_84 : f32 to vector<2x192xf32>
    %254 = arith.addf %253, %252 : vector<2x192xf32>
    %255 = arith.divf %253, %254 : vector<2x192xf32>
    %256 = vector.extract_strided_slice %249 {offsets = [0, 192], sizes = [2, 64], strides = [1, 1]} : vector<2x256xf32> to vector<2x64xf32>
    %257 = math.tanh %256 : vector<2x64xf32>
    %258 = vector.extract_strided_slice %255 {offsets = [0, 0], sizes = [2, 64], strides = [1, 1]} : vector<2x192xf32> to vector<2x64xf32>
    %259 = vector.extract_strided_slice %255 {offsets = [0, 64], sizes = [2, 64], strides = [1, 1]} : vector<2x192xf32> to vector<2x64xf32>
    %260 = vector.extract_strided_slice %255 {offsets = [0, 128], sizes = [2, 64], strides = [1, 1]} : vector<2x192xf32> to vector<2x64xf32>
    %261 = arith.mulf %259, %244 : vector<2x64xf32>
    %262 = arith.mulf %258, %257 : vector<2x64xf32>
    %263 = arith.addf %261, %262 : vector<2x64xf32>
    %264 = math.tanh %263 : vector<2x64xf32>
    %265 = arith.mulf %260, %264 : vector<2x64xf32>
    %cst_85 = arith.constant dense<0.000000e+00> : vector<2x256xf32>
    %266 = tpu.matmul %265, %241, %cst_85 {dimension_numbers = #tpu.dot_dimension_numbers<[1], [0], [0], [1], [0, 0, 1, 1], [], []>} : vector<2x64xf32>, vector<64x256xf32>, vector<2x256xf32> -> vector<2x256xf32>
    %267 = vector.broadcast %242 : vector<1x256xf32> to vector<2x256xf32>
    %268 = arith.addf %266, %267 : vector<2x256xf32>
    %269 = arith.index_cast %c0_i32_80 : i32 to index
    %c0_86 = arith.constant 0 : index
    %c0_87 = arith.constant 0 : index
    %270 = vector.load %arg13[%269, %c0_86, %c0_87] : memref<8x2x256xf32, #tpu.memory_space<vmem>>, vector<1x2x256xf32>
    %271 = vector.shape_cast %270 : vector<1x2x256xf32> to vector<2x256xf32>
    %272 = vector.shape_cast %268 : vector<2x256xf32> to vector<1x2x256xf32>
    tpu.vector_store %arg13[%269, %c0_86, %c0_87], %272 {strides = array<i32>} : memref<8x2x256xf32, #tpu.memory_space<vmem>>, vector<1x2x256xf32>,
    %c1_i32_88 = arith.constant 1 : i32
    %273 = arith.index_cast %c1_i32_88 : i32 to index
    %c0_89 = arith.constant 0 : index
    %c0_90 = arith.constant 0 : index
    %274 = vector.load %arg13[%273, %c0_89, %c0_90] : memref<8x2x256xf32, #tpu.memory_space<vmem>>, vector<1x2x256xf32>
    %275 = vector.shape_cast %274 : vector<1x2x256xf32> to vector<2x256xf32>
    %cst_91 = arith.constant dense<0.000000e+00> : vector<2x256xf32>
    %276 = tpu.matmul %265, %240, %cst_91 {dimension_numbers = #tpu.dot_dimension_numbers<[1], [0], [0], [1], [0, 0, 1, 1], [], []>} : vector<2x64xf32>, vector<64x256xf32>, vector<2x256xf32> -> vector<2x256xf32>
    %277 = arith.addf %275, %276 : vector<2x256xf32>
    %278 = vector.extract_strided_slice %277 {offsets = [0, 0], sizes = [2, 192], strides = [1, 1]} : vector<2x256xf32> to vector<2x192xf32>
    %279 = arith.negf %278 : vector<2x192xf32>
    %280 = math.exp %279 : vector<2x192xf32>
    %cst_92 = arith.constant 1.000000e+00 : f32
    %281 = vector.broadcast %cst_92 : f32 to vector<2x192xf32>
    %282 = arith.addf %281, %280 : vector<2x192xf32>
    %283 = arith.divf %281, %282 : vector<2x192xf32>
    %284 = vector.extract_strided_slice %277 {offsets = [0, 192], sizes = [2, 64], strides = [1, 1]} : vector<2x256xf32> to vector<2x64xf32>
    %285 = math.tanh %284 : vector<2x64xf32>
    %286 = vector.extract_strided_slice %283 {offsets = [0, 0], sizes = [2, 64], strides = [1, 1]} : vector<2x192xf32> to vector<2x64xf32>
    %287 = vector.extract_strided_slice %283 {offsets = [0, 64], sizes = [2, 64], strides = [1, 1]} : vector<2x192xf32> to vector<2x64xf32>
    %288 = vector.extract_strided_slice %283 {offsets = [0, 128], sizes = [2, 64], strides = [1, 1]} : vector<2x192xf32> to vector<2x64xf32>
    %289 = arith.mulf %287, %263 : vector<2x64xf32>
    %290 = arith.mulf %286, %285 : vector<2x64xf32>
    %291 = arith.addf %289, %290 : vector<2x64xf32>
    %292 = math.tanh %291 : vector<2x64xf32>
    %293 = arith.mulf %288, %292 : vector<2x64xf32>
    %cst_93 = arith.constant dense<0.000000e+00> : vector<2x256xf32>
    %294 = tpu.matmul %293, %241, %cst_93 {dimension_numbers = #tpu.dot_dimension_numbers<[1], [0], [0], [1], [0, 0, 1, 1], [], []>} : vector<2x64xf32>, vector<64x256xf32>, vector<2x256xf32> -> vector<2x256xf32>
    %295 = vector.broadcast %242 : vector<1x256xf32> to vector<2x256xf32>
    %296 = arith.addf %294, %295 : vector<2x256xf32>
    %297 = arith.index_cast %c1_i32_88 : i32 to index
    %c0_94 = arith.constant 0 : index
    %c0_95 = arith.constant 0 : index
    %298 = vector.load %arg13[%297, %c0_94, %c0_95] : memref<8x2x256xf32, #tpu.memory_space<vmem>>, vector<1x2x256xf32>
    %299 = vector.shape_cast %298 : vector<1x2x256xf32> to vector<2x256xf32>
    %300 = vector.shape_cast %296 : vector<2x256xf32> to vector<1x2x256xf32>
    tpu.vector_store %arg13[%297, %c0_94, %c0_95], %300 {strides = array<i32>} : memref<8x2x256xf32, #tpu.memory_space<vmem>>, vector<1x2x256xf32>,
    %c2_i32_96 = arith.constant 2 : i32
    %301 = arith.index_cast %c2_i32_96 : i32 to index
    %c0_97 = arith.constant 0 : index
    %c0_98 = arith.constant 0 : index
    %302 = vector.load %arg13[%301, %c0_97, %c0_98] : memref<8x2x256xf32, #tpu.memory_space<vmem>>, vector<1x2x256xf32>
    %303 = vector.shape_cast %302 : vector<1x2x256xf32> to vector<2x256xf32>
    %cst_99 = arith.constant dense<0.000000e+00> : vector<2x256xf32>
    %304 = tpu.matmul %293, %240, %cst_99 {dimension_numbers = #tpu.dot_dimension_numbers<[1], [0], [0], [1], [0, 0, 1, 1], [], []>} : vector<2x64xf32>, vector<64x256xf32>, vector<2x256xf32> -> vector<2x256xf32>
    %305 = arith.addf %303, %304 : vector<2x256xf32>
    %306 = vector.extract_strided_slice %305 {offsets = [0, 0], sizes = [2, 192], strides = [1, 1]} : vector<2x256xf32> to vector<2x192xf32>
    %307 = arith.negf %306 : vector<2x192xf32>
    %308 = math.exp %307 : vector<2x192xf32>
    %cst_100 = arith.constant 1.000000e+00 : f32
    %309 = vector.broadcast %cst_100 : f32 to vector<2x192xf32>
    %310 = arith.addf %309, %308 : vector<2x192xf32>
    %311 = arith.divf %309, %310 : vector<2x192xf32>
    %312 = vector.extract_strided_slice %305 {offsets = [0, 192], sizes = [2, 64], strides = [1, 1]} : vector<2x256xf32> to vector<2x64xf32>
    %313 = math.tanh %312 : vector<2x64xf32>
    %314 = vector.extract_strided_slice %311 {offsets = [0, 0], sizes = [2, 64], strides = [1, 1]} : vector<2x192xf32> to vector<2x64xf32>
    %315 = vector.extract_strided_slice %311 {offsets = [0, 64], sizes = [2, 64], strides = [1, 1]} : vector<2x192xf32> to vector<2x64xf32>
    %316 = vector.extract_strided_slice %311 {offsets = [0, 128], sizes = [2, 64], strides = [1, 1]} : vector<2x192xf32> to vector<2x64xf32>
    %317 = arith.mulf %315, %291 : vector<2x64xf32>
    %318 = arith.mulf %314, %313 : vector<2x64xf32>
    %319 = arith.addf %317, %318 : vector<2x64xf32>
    %320 = math.tanh %319 : vector<2x64xf32>
    %321 = arith.mulf %316, %320 : vector<2x64xf32>
    %cst_101 = arith.constant dense<0.000000e+00> : vector<2x256xf32>
    %322 = tpu.matmul %321, %241, %cst_101 {dimension_numbers = #tpu.dot_dimension_numbers<[1], [0], [0], [1], [0, 0, 1, 1], [], []>} : vector<2x64xf32>, vector<64x256xf32>, vector<2x256xf32> -> vector<2x256xf32>
    %323 = vector.broadcast %242 : vector<1x256xf32> to vector<2x256xf32>
    %324 = arith.addf %322, %323 : vector<2x256xf32>
    %325 = arith.index_cast %c2_i32_96 : i32 to index
    %c0_102 = arith.constant 0 : index
    %c0_103 = arith.constant 0 : index
    %326 = vector.load %arg13[%325, %c0_102, %c0_103] : memref<8x2x256xf32, #tpu.memory_space<vmem>>, vector<1x2x256xf32>
    %327 = vector.shape_cast %326 : vector<1x2x256xf32> to vector<2x256xf32>
    %328 = vector.shape_cast %324 : vector<2x256xf32> to vector<1x2x256xf32>
    tpu.vector_store %arg13[%325, %c0_102, %c0_103], %328 {strides = array<i32>} : memref<8x2x256xf32, #tpu.memory_space<vmem>>, vector<1x2x256xf32>,
    %c3_i32_104 = arith.constant 3 : i32
    %329 = arith.index_cast %c3_i32_104 : i32 to index
    %c0_105 = arith.constant 0 : index
    %c0_106 = arith.constant 0 : index
    %330 = vector.load %arg13[%329, %c0_105, %c0_106] : memref<8x2x256xf32, #tpu.memory_space<vmem>>, vector<1x2x256xf32>
    %331 = vector.shape_cast %330 : vector<1x2x256xf32> to vector<2x256xf32>
    %cst_107 = arith.constant dense<0.000000e+00> : vector<2x256xf32>
    %332 = tpu.matmul %321, %240, %cst_107 {dimension_numbers = #tpu.dot_dimension_numbers<[1], [0], [0], [1], [0, 0, 1, 1], [], []>} : vector<2x64xf32>, vector<64x256xf32>, vector<2x256xf32> -> vector<2x256xf32>
    %333 = arith.addf %331, %332 : vector<2x256xf32>
    %334 = vector.extract_strided_slice %333 {offsets = [0, 0], sizes = [2, 192], strides = [1, 1]} : vector<2x256xf32> to vector<2x192xf32>
    %335 = arith.negf %334 : vector<2x192xf32>
    %336 = math.exp %335 : vector<2x192xf32>
    %cst_108 = arith.constant 1.000000e+00 : f32
    %337 = vector.broadcast %cst_108 : f32 to vector<2x192xf32>
    %338 = arith.addf %337, %336 : vector<2x192xf32>
    %339 = arith.divf %337, %338 : vector<2x192xf32>
    %340 = vector.extract_strided_slice %333 {offsets = [0, 192], sizes = [2, 64], strides = [1, 1]} : vector<2x256xf32> to vector<2x64xf32>
    %341 = math.tanh %340 : vector<2x64xf32>
    %342 = vector.extract_strided_slice %339 {offsets = [0, 0], sizes = [2, 64], strides = [1, 1]} : vector<2x192xf32> to vector<2x64xf32>
    %343 = vector.extract_strided_slice %339 {offsets = [0, 64], sizes = [2, 64], strides = [1, 1]} : vector<2x192xf32> to vector<2x64xf32>
    %344 = vector.extract_strided_slice %339 {offsets = [0, 128], sizes = [2, 64], strides = [1, 1]} : vector<2x192xf32> to vector<2x64xf32>
    %345 = arith.mulf %343, %319 : vector<2x64xf32>
    %346 = arith.mulf %342, %341 : vector<2x64xf32>
    %347 = arith.addf %345, %346 : vector<2x64xf32>
    %348 = math.tanh %347 : vector<2x64xf32>
    %349 = arith.mulf %344, %348 : vector<2x64xf32>
    %cst_109 = arith.constant dense<0.000000e+00> : vector<2x256xf32>
    %350 = tpu.matmul %349, %241, %cst_109 {dimension_numbers = #tpu.dot_dimension_numbers<[1], [0], [0], [1], [0, 0, 1, 1], [], []>} : vector<2x64xf32>, vector<64x256xf32>, vector<2x256xf32> -> vector<2x256xf32>
    %351 = vector.broadcast %242 : vector<1x256xf32> to vector<2x256xf32>
    %352 = arith.addf %350, %351 : vector<2x256xf32>
    %353 = arith.index_cast %c3_i32_104 : i32 to index
    %c0_110 = arith.constant 0 : index
    %c0_111 = arith.constant 0 : index
    %354 = vector.load %arg13[%353, %c0_110, %c0_111] : memref<8x2x256xf32, #tpu.memory_space<vmem>>, vector<1x2x256xf32>
    %355 = vector.shape_cast %354 : vector<1x2x256xf32> to vector<2x256xf32>
    %356 = vector.shape_cast %352 : vector<2x256xf32> to vector<1x2x256xf32>
    tpu.vector_store %arg13[%353, %c0_110, %c0_111], %356 {strides = array<i32>} : memref<8x2x256xf32, #tpu.memory_space<vmem>>, vector<1x2x256xf32>,
    %c4_i32_112 = arith.constant 4 : i32
    %357 = arith.index_cast %c4_i32_112 : i32 to index
    %c0_113 = arith.constant 0 : index
    %c0_114 = arith.constant 0 : index
    %358 = vector.load %arg13[%357, %c0_113, %c0_114] : memref<8x2x256xf32, #tpu.memory_space<vmem>>, vector<1x2x256xf32>
    %359 = vector.shape_cast %358 : vector<1x2x256xf32> to vector<2x256xf32>
    %cst_115 = arith.constant dense<0.000000e+00> : vector<2x256xf32>
    %360 = tpu.matmul %349, %240, %cst_115 {dimension_numbers = #tpu.dot_dimension_numbers<[1], [0], [0], [1], [0, 0, 1, 1], [], []>} : vector<2x64xf32>, vector<64x256xf32>, vector<2x256xf32> -> vector<2x256xf32>
    %361 = arith.addf %359, %360 : vector<2x256xf32>
    %362 = vector.extract_strided_slice %361 {offsets = [0, 0], sizes = [2, 192], strides = [1, 1]} : vector<2x256xf32> to vector<2x192xf32>
    %363 = arith.negf %362 : vector<2x192xf32>
    %364 = math.exp %363 : vector<2x192xf32>
    %cst_116 = arith.constant 1.000000e+00 : f32
    %365 = vector.broadcast %cst_116 : f32 to vector<2x192xf32>
    %366 = arith.addf %365, %364 : vector<2x192xf32>
    %367 = arith.divf %365, %366 : vector<2x192xf32>
    %368 = vector.extract_strided_slice %361 {offsets = [0, 192], sizes = [2, 64], strides = [1, 1]} : vector<2x256xf32> to vector<2x64xf32>
    %369 = math.tanh %368 : vector<2x64xf32>
    %370 = vector.extract_strided_slice %367 {offsets = [0, 0], sizes = [2, 64], strides = [1, 1]} : vector<2x192xf32> to vector<2x64xf32>
    %371 = vector.extract_strided_slice %367 {offsets = [0, 64], sizes = [2, 64], strides = [1, 1]} : vector<2x192xf32> to vector<2x64xf32>
    %372 = vector.extract_strided_slice %367 {offsets = [0, 128], sizes = [2, 64], strides = [1, 1]} : vector<2x192xf32> to vector<2x64xf32>
    %373 = arith.mulf %371, %347 : vector<2x64xf32>
    %374 = arith.mulf %370, %369 : vector<2x64xf32>
    %375 = arith.addf %373, %374 : vector<2x64xf32>
    %376 = math.tanh %375 : vector<2x64xf32>
    %377 = arith.mulf %372, %376 : vector<2x64xf32>
    %cst_117 = arith.constant dense<0.000000e+00> : vector<2x256xf32>
    %378 = tpu.matmul %377, %241, %cst_117 {dimension_numbers = #tpu.dot_dimension_numbers<[1], [0], [0], [1], [0, 0, 1, 1], [], []>} : vector<2x64xf32>, vector<64x256xf32>, vector<2x256xf32> -> vector<2x256xf32>
    %379 = vector.broadcast %242 : vector<1x256xf32> to vector<2x256xf32>
    %380 = arith.addf %378, %379 : vector<2x256xf32>
    %381 = arith.index_cast %c4_i32_112 : i32 to index
    %c0_118 = arith.constant 0 : index
    %c0_119 = arith.constant 0 : index
    %382 = vector.load %arg13[%381, %c0_118, %c0_119] : memref<8x2x256xf32, #tpu.memory_space<vmem>>, vector<1x2x256xf32>
    %383 = vector.shape_cast %382 : vector<1x2x256xf32> to vector<2x256xf32>
    %384 = vector.shape_cast %380 : vector<2x256xf32> to vector<1x2x256xf32>
    tpu.vector_store %arg13[%381, %c0_118, %c0_119], %384 {strides = array<i32>} : memref<8x2x256xf32, #tpu.memory_space<vmem>>, vector<1x2x256xf32>,
    %c5_i32_120 = arith.constant 5 : i32
    %385 = arith.index_cast %c5_i32_120 : i32 to index
    %c0_121 = arith.constant 0 : index
    %c0_122 = arith.constant 0 : index
    %386 = vector.load %arg13[%385, %c0_121, %c0_122] : memref<8x2x256xf32, #tpu.memory_space<vmem>>, vector<1x2x256xf32>
    %387 = vector.shape_cast %386 : vector<1x2x256xf32> to vector<2x256xf32>
    %cst_123 = arith.constant dense<0.000000e+00> : vector<2x256xf32>
    %388 = tpu.matmul %377, %240, %cst_123 {dimension_numbers = #tpu.dot_dimension_numbers<[1], [0], [0], [1], [0, 0, 1, 1], [], []>} : vector<2x64xf32>, vector<64x256xf32>, vector<2x256xf32> -> vector<2x256xf32>
    %389 = arith.addf %387, %388 : vector<2x256xf32>
    %390 = vector.extract_strided_slice %389 {offsets = [0, 0], sizes = [2, 192], strides = [1, 1]} : vector<2x256xf32> to vector<2x192xf32>
    %391 = arith.negf %390 : vector<2x192xf32>
    %392 = math.exp %391 : vector<2x192xf32>
    %cst_124 = arith.constant 1.000000e+00 : f32
    %393 = vector.broadcast %cst_124 : f32 to vector<2x192xf32>
    %394 = arith.addf %393, %392 : vector<2x192xf32>
    %395 = arith.divf %393, %394 : vector<2x192xf32>
    %396 = vector.extract_strided_slice %389 {offsets = [0, 192], sizes = [2, 64], strides = [1, 1]} : vector<2x256xf32> to vector<2x64xf32>
    %397 = math.tanh %396 : vector<2x64xf32>
    %398 = vector.extract_strided_slice %395 {offsets = [0, 0], sizes = [2, 64], strides = [1, 1]} : vector<2x192xf32> to vector<2x64xf32>
    %399 = vector.extract_strided_slice %395 {offsets = [0, 64], sizes = [2, 64], strides = [1, 1]} : vector<2x192xf32> to vector<2x64xf32>
    %400 = vector.extract_strided_slice %395 {offsets = [0, 128], sizes = [2, 64], strides = [1, 1]} : vector<2x192xf32> to vector<2x64xf32>
    %401 = arith.mulf %399, %375 : vector<2x64xf32>
    %402 = arith.mulf %398, %397 : vector<2x64xf32>
    %403 = arith.addf %401, %402 : vector<2x64xf32>
    %404 = math.tanh %403 : vector<2x64xf32>
    %405 = arith.mulf %400, %404 : vector<2x64xf32>
    %cst_125 = arith.constant dense<0.000000e+00> : vector<2x256xf32>
    %406 = tpu.matmul %405, %241, %cst_125 {dimension_numbers = #tpu.dot_dimension_numbers<[1], [0], [0], [1], [0, 0, 1, 1], [], []>} : vector<2x64xf32>, vector<64x256xf32>, vector<2x256xf32> -> vector<2x256xf32>
    %407 = vector.broadcast %242 : vector<1x256xf32> to vector<2x256xf32>
    %408 = arith.addf %406, %407 : vector<2x256xf32>
    %409 = arith.index_cast %c5_i32_120 : i32 to index
    %c0_126 = arith.constant 0 : index
    %c0_127 = arith.constant 0 : index
    %410 = vector.load %arg13[%409, %c0_126, %c0_127] : memref<8x2x256xf32, #tpu.memory_space<vmem>>, vector<1x2x256xf32>
    %411 = vector.shape_cast %410 : vector<1x2x256xf32> to vector<2x256xf32>
    %412 = vector.shape_cast %408 : vector<2x256xf32> to vector<1x2x256xf32>
    tpu.vector_store %arg13[%409, %c0_126, %c0_127], %412 {strides = array<i32>} : memref<8x2x256xf32, #tpu.memory_space<vmem>>, vector<1x2x256xf32>,
    %c6_i32_128 = arith.constant 6 : i32
    %413 = arith.index_cast %c6_i32_128 : i32 to index
    %c0_129 = arith.constant 0 : index
    %c0_130 = arith.constant 0 : index
    %414 = vector.load %arg13[%413, %c0_129, %c0_130] : memref<8x2x256xf32, #tpu.memory_space<vmem>>, vector<1x2x256xf32>
    %415 = vector.shape_cast %414 : vector<1x2x256xf32> to vector<2x256xf32>
    %cst_131 = arith.constant dense<0.000000e+00> : vector<2x256xf32>
    %416 = tpu.matmul %405, %240, %cst_131 {dimension_numbers = #tpu.dot_dimension_numbers<[1], [0], [0], [1], [0, 0, 1, 1], [], []>} : vector<2x64xf32>, vector<64x256xf32>, vector<2x256xf32> -> vector<2x256xf32>
    %417 = arith.addf %415, %416 : vector<2x256xf32>
    %418 = vector.extract_strided_slice %417 {offsets = [0, 0], sizes = [2, 192], strides = [1, 1]} : vector<2x256xf32> to vector<2x192xf32>
    %419 = arith.negf %418 : vector<2x192xf32>
    %420 = math.exp %419 : vector<2x192xf32>
    %cst_132 = arith.constant 1.000000e+00 : f32
    %421 = vector.broadcast %cst_132 : f32 to vector<2x192xf32>
    %422 = arith.addf %421, %420 : vector<2x192xf32>
    %423 = arith.divf %421, %422 : vector<2x192xf32>
    %424 = vector.extract_strided_slice %417 {offsets = [0, 192], sizes = [2, 64], strides = [1, 1]} : vector<2x256xf32> to vector<2x64xf32>
    %425 = math.tanh %424 : vector<2x64xf32>
    %426 = vector.extract_strided_slice %423 {offsets = [0, 0], sizes = [2, 64], strides = [1, 1]} : vector<2x192xf32> to vector<2x64xf32>
    %427 = vector.extract_strided_slice %423 {offsets = [0, 64], sizes = [2, 64], strides = [1, 1]} : vector<2x192xf32> to vector<2x64xf32>
    %428 = vector.extract_strided_slice %423 {offsets = [0, 128], sizes = [2, 64], strides = [1, 1]} : vector<2x192xf32> to vector<2x64xf32>
    %429 = arith.mulf %427, %403 : vector<2x64xf32>
    %430 = arith.mulf %426, %425 : vector<2x64xf32>
    %431 = arith.addf %429, %430 : vector<2x64xf32>
    %432 = math.tanh %431 : vector<2x64xf32>
    %433 = arith.mulf %428, %432 : vector<2x64xf32>
    %cst_133 = arith.constant dense<0.000000e+00> : vector<2x256xf32>
    %434 = tpu.matmul %433, %241, %cst_133 {dimension_numbers = #tpu.dot_dimension_numbers<[1], [0], [0], [1], [0, 0, 1, 1], [], []>} : vector<2x64xf32>, vector<64x256xf32>, vector<2x256xf32> -> vector<2x256xf32>
    %435 = vector.broadcast %242 : vector<1x256xf32> to vector<2x256xf32>
    %436 = arith.addf %434, %435 : vector<2x256xf32>
    %437 = arith.index_cast %c6_i32_128 : i32 to index
    %c0_134 = arith.constant 0 : index
    %c0_135 = arith.constant 0 : index
    %438 = vector.load %arg13[%437, %c0_134, %c0_135] : memref<8x2x256xf32, #tpu.memory_space<vmem>>, vector<1x2x256xf32>
    %439 = vector.shape_cast %438 : vector<1x2x256xf32> to vector<2x256xf32>
    %440 = vector.shape_cast %436 : vector<2x256xf32> to vector<1x2x256xf32>
    tpu.vector_store %arg13[%437, %c0_134, %c0_135], %440 {strides = array<i32>} : memref<8x2x256xf32, #tpu.memory_space<vmem>>, vector<1x2x256xf32>,
    %c7_i32_136 = arith.constant 7 : i32
    %441 = arith.index_cast %c7_i32_136 : i32 to index
    %c0_137 = arith.constant 0 : index
    %c0_138 = arith.constant 0 : index
    %442 = vector.load %arg13[%441, %c0_137, %c0_138] : memref<8x2x256xf32, #tpu.memory_space<vmem>>, vector<1x2x256xf32>
    %443 = vector.shape_cast %442 : vector<1x2x256xf32> to vector<2x256xf32>
    %cst_139 = arith.constant dense<0.000000e+00> : vector<2x256xf32>
    %444 = tpu.matmul %433, %240, %cst_139 {dimension_numbers = #tpu.dot_dimension_numbers<[1], [0], [0], [1], [0, 0, 1, 1], [], []>} : vector<2x64xf32>, vector<64x256xf32>, vector<2x256xf32> -> vector<2x256xf32>
    %445 = arith.addf %443, %444 : vector<2x256xf32>
    %446 = vector.extract_strided_slice %445 {offsets = [0, 0], sizes = [2, 192], strides = [1, 1]} : vector<2x256xf32> to vector<2x192xf32>
    %447 = arith.negf %446 : vector<2x192xf32>
    %448 = math.exp %447 : vector<2x192xf32>
    %cst_140 = arith.constant 1.000000e+00 : f32
    %449 = vector.broadcast %cst_140 : f32 to vector<2x192xf32>
    %450 = arith.addf %449, %448 : vector<2x192xf32>
    %451 = arith.divf %449, %450 : vector<2x192xf32>
    %452 = vector.extract_strided_slice %445 {offsets = [0, 192], sizes = [2, 64], strides = [1, 1]} : vector<2x256xf32> to vector<2x64xf32>
    %453 = math.tanh %452 : vector<2x64xf32>
    %454 = vector.extract_strided_slice %451 {offsets = [0, 0], sizes = [2, 64], strides = [1, 1]} : vector<2x192xf32> to vector<2x64xf32>
    %455 = vector.extract_strided_slice %451 {offsets = [0, 64], sizes = [2, 64], strides = [1, 1]} : vector<2x192xf32> to vector<2x64xf32>
    %456 = vector.extract_strided_slice %451 {offsets = [0, 128], sizes = [2, 64], strides = [1, 1]} : vector<2x192xf32> to vector<2x64xf32>
    %457 = arith.mulf %455, %431 : vector<2x64xf32>
    %458 = arith.mulf %454, %453 : vector<2x64xf32>
    %459 = arith.addf %457, %458 : vector<2x64xf32>
    %460 = math.tanh %459 : vector<2x64xf32>
    %461 = arith.mulf %456, %460 : vector<2x64xf32>
    %cst_141 = arith.constant dense<0.000000e+00> : vector<2x256xf32>
    %462 = tpu.matmul %461, %241, %cst_141 {dimension_numbers = #tpu.dot_dimension_numbers<[1], [0], [0], [1], [0, 0, 1, 1], [], []>} : vector<2x64xf32>, vector<64x256xf32>, vector<2x256xf32> -> vector<2x256xf32>
    %463 = vector.broadcast %242 : vector<1x256xf32> to vector<2x256xf32>
    %464 = arith.addf %462, %463 : vector<2x256xf32>
    %465 = arith.index_cast %c7_i32_136 : i32 to index
    %c0_142 = arith.constant 0 : index
    %c0_143 = arith.constant 0 : index
    %466 = vector.load %arg13[%465, %c0_142, %c0_143] : memref<8x2x256xf32, #tpu.memory_space<vmem>>, vector<1x2x256xf32>
    %467 = vector.shape_cast %466 : vector<1x2x256xf32> to vector<2x256xf32>
    %468 = vector.shape_cast %464 : vector<2x256xf32> to vector<1x2x256xf32>
    tpu.vector_store %arg13[%465, %c0_142, %c0_143], %468 {strides = array<i32>} : memref<8x2x256xf32, #tpu.memory_space<vmem>>, vector<1x2x256xf32>,
    %c8_i32_144 = arith.constant 8 : i32
    %c0_145 = arith.constant 0 : index
    %c0_146 = arith.constant 0 : index
    %469 = vector.load %arg8[%c0_145, %c0_146] : memref<64x256xf32, #tpu.memory_space<vmem>>, vector<64x256xf32>
    %cst_147 = arith.constant 0.000000e+00 : f32
    %470 = vector.broadcast %cst_147 : f32 to vector<2x64xf32>
    %cst_148 = arith.constant 0.000000e+00 : f32
    %471 = vector.broadcast %cst_148 : f32 to vector<2x64xf32>
    %c0_i32_149 = arith.constant 0 : i32
    %472 = arith.index_cast %c0_i32_149 : i32 to index
    %c0_150 = arith.constant 0 : index
    %c0_151 = arith.constant 0 : index
    %473 = vector.load %arg13[%472, %c0_150, %c0_151] : memref<8x2x256xf32, #tpu.memory_space<vmem>>, vector<1x2x256xf32>
    %474 = vector.shape_cast %473 : vector<1x2x256xf32> to vector<2x256xf32>
    %cst_152 = arith.constant dense<0.000000e+00> : vector<2x256xf32>
    %475 = tpu.matmul %470, %469, %cst_152 {dimension_numbers = #tpu.dot_dimension_numbers<[1], [0], [0], [1], [0, 0, 1, 1], [], []>} : vector<2x64xf32>, vector<64x256xf32>, vector<2x256xf32> -> vector<2x256xf32>
    %476 = arith.addf %474, %475 : vector<2x256xf32>
    %477 = vector.extract_strided_slice %476 {offsets = [0, 0], sizes = [2, 192], strides = [1, 1]} : vector<2x256xf32> to vector<2x192xf32>
    %478 = arith.negf %477 : vector<2x192xf32>
    %479 = math.exp %478 : vector<2x192xf32>
    %cst_153 = arith.constant 1.000000e+00 : f32
    %480 = vector.broadcast %cst_153 : f32 to vector<2x192xf32>
    %481 = arith.addf %480, %479 : vector<2x192xf32>
    %482 = arith.divf %480, %481 : vector<2x192xf32>
    %483 = vector.extract_strided_slice %476 {offsets = [0, 192], sizes = [2, 64], strides = [1, 1]} : vector<2x256xf32> to vector<2x64xf32>
    %484 = math.tanh %483 : vector<2x64xf32>
    %485 = vector.extract_strided_slice %482 {offsets = [0, 0], sizes = [2, 64], strides = [1, 1]} : vector<2x192xf32> to vector<2x64xf32>
    %486 = vector.extract_strided_slice %482 {offsets = [0, 64], sizes = [2, 64], strides = [1, 1]} : vector<2x192xf32> to vector<2x64xf32>
    %487 = vector.extract_strided_slice %482 {offsets = [0, 128], sizes = [2, 64], strides = [1, 1]} : vector<2x192xf32> to vector<2x64xf32>
    %488 = arith.mulf %486, %471 : vector<2x64xf32>
    %489 = arith.mulf %485, %484 : vector<2x64xf32>
    %490 = arith.addf %488, %489 : vector<2x64xf32>
    %491 = math.tanh %490 : vector<2x64xf32>
    %492 = arith.mulf %487, %491 : vector<2x64xf32>
    %c1_i32_154 = arith.constant 1 : i32
    %493 = arith.index_cast %c1_i32_154 : i32 to index
    %c0_155 = arith.constant 0 : index
    %c0_156 = arith.constant 0 : index
    %494 = vector.load %arg13[%493, %c0_155, %c0_156] : memref<8x2x256xf32, #tpu.memory_space<vmem>>, vector<1x2x256xf32>
    %495 = vector.shape_cast %494 : vector<1x2x256xf32> to vector<2x256xf32>
    %cst_157 = arith.constant dense<0.000000e+00> : vector<2x256xf32>
    %496 = tpu.matmul %492, %469, %cst_157 {dimension_numbers = #tpu.dot_dimension_numbers<[1], [0], [0], [1], [0, 0, 1, 1], [], []>} : vector<2x64xf32>, vector<64x256xf32>, vector<2x256xf32> -> vector<2x256xf32>
    %497 = arith.addf %495, %496 : vector<2x256xf32>
    %498 = vector.extract_strided_slice %497 {offsets = [0, 0], sizes = [2, 192], strides = [1, 1]} : vector<2x256xf32> to vector<2x192xf32>
    %499 = arith.negf %498 : vector<2x192xf32>
    %500 = math.exp %499 : vector<2x192xf32>
    %cst_158 = arith.constant 1.000000e+00 : f32
    %501 = vector.broadcast %cst_158 : f32 to vector<2x192xf32>
    %502 = arith.addf %501, %500 : vector<2x192xf32>
    %503 = arith.divf %501, %502 : vector<2x192xf32>
    %504 = vector.extract_strided_slice %497 {offsets = [0, 192], sizes = [2, 64], strides = [1, 1]} : vector<2x256xf32> to vector<2x64xf32>
    %505 = math.tanh %504 : vector<2x64xf32>
    %506 = vector.extract_strided_slice %503 {offsets = [0, 0], sizes = [2, 64], strides = [1, 1]} : vector<2x192xf32> to vector<2x64xf32>
    %507 = vector.extract_strided_slice %503 {offsets = [0, 64], sizes = [2, 64], strides = [1, 1]} : vector<2x192xf32> to vector<2x64xf32>
    %508 = vector.extract_strided_slice %503 {offsets = [0, 128], sizes = [2, 64], strides = [1, 1]} : vector<2x192xf32> to vector<2x64xf32>
    %509 = arith.mulf %507, %490 : vector<2x64xf32>
    %510 = arith.mulf %506, %505 : vector<2x64xf32>
    %511 = arith.addf %509, %510 : vector<2x64xf32>
    %512 = math.tanh %511 : vector<2x64xf32>
    %513 = arith.mulf %508, %512 : vector<2x64xf32>
    %c2_i32_159 = arith.constant 2 : i32
    %514 = arith.index_cast %c2_i32_159 : i32 to index
    %c0_160 = arith.constant 0 : index
    %c0_161 = arith.constant 0 : index
    %515 = vector.load %arg13[%514, %c0_160, %c0_161] : memref<8x2x256xf32, #tpu.memory_space<vmem>>, vector<1x2x256xf32>
    %516 = vector.shape_cast %515 : vector<1x2x256xf32> to vector<2x256xf32>
    %cst_162 = arith.constant dense<0.000000e+00> : vector<2x256xf32>
    %517 = tpu.matmul %513, %469, %cst_162 {dimension_numbers = #tpu.dot_dimension_numbers<[1], [0], [0], [1], [0, 0, 1, 1], [], []>} : vector<2x64xf32>, vector<64x256xf32>, vector<2x256xf32> -> vector<2x256xf32>
    %518 = arith.addf %516, %517 : vector<2x256xf32>
    %519 = vector.extract_strided_slice %518 {offsets = [0, 0], sizes = [2, 192], strides = [1, 1]} : vector<2x256xf32> to vector<2x192xf32>
    %520 = arith.negf %519 : vector<2x192xf32>
    %521 = math.exp %520 : vector<2x192xf32>
    %cst_163 = arith.constant 1.000000e+00 : f32
    %522 = vector.broadcast %cst_163 : f32 to vector<2x192xf32>
    %523 = arith.addf %522, %521 : vector<2x192xf32>
    %524 = arith.divf %522, %523 : vector<2x192xf32>
    %525 = vector.extract_strided_slice %518 {offsets = [0, 192], sizes = [2, 64], strides = [1, 1]} : vector<2x256xf32> to vector<2x64xf32>
    %526 = math.tanh %525 : vector<2x64xf32>
    %527 = vector.extract_strided_slice %524 {offsets = [0, 0], sizes = [2, 64], strides = [1, 1]} : vector<2x192xf32> to vector<2x64xf32>
    %528 = vector.extract_strided_slice %524 {offsets = [0, 64], sizes = [2, 64], strides = [1, 1]} : vector<2x192xf32> to vector<2x64xf32>
    %529 = vector.extract_strided_slice %524 {offsets = [0, 128], sizes = [2, 64], strides = [1, 1]} : vector<2x192xf32> to vector<2x64xf32>
    %530 = arith.mulf %528, %511 : vector<2x64xf32>
    %531 = arith.mulf %527, %526 : vector<2x64xf32>
    %532 = arith.addf %530, %531 : vector<2x64xf32>
    %533 = math.tanh %532 : vector<2x64xf32>
    %534 = arith.mulf %529, %533 : vector<2x64xf32>
    %c3_i32_164 = arith.constant 3 : i32
    %535 = arith.index_cast %c3_i32_164 : i32 to index
    %c0_165 = arith.constant 0 : index
    %c0_166 = arith.constant 0 : index
    %536 = vector.load %arg13[%535, %c0_165, %c0_166] : memref<8x2x256xf32, #tpu.memory_space<vmem>>, vector<1x2x256xf32>
    %537 = vector.shape_cast %536 : vector<1x2x256xf32> to vector<2x256xf32>
    %cst_167 = arith.constant dense<0.000000e+00> : vector<2x256xf32>
    %538 = tpu.matmul %534, %469, %cst_167 {dimension_numbers = #tpu.dot_dimension_numbers<[1], [0], [0], [1], [0, 0, 1, 1], [], []>} : vector<2x64xf32>, vector<64x256xf32>, vector<2x256xf32> -> vector<2x256xf32>
    %539 = arith.addf %537, %538 : vector<2x256xf32>
    %540 = vector.extract_strided_slice %539 {offsets = [0, 0], sizes = [2, 192], strides = [1, 1]} : vector<2x256xf32> to vector<2x192xf32>
    %541 = arith.negf %540 : vector<2x192xf32>
    %542 = math.exp %541 : vector<2x192xf32>
    %cst_168 = arith.constant 1.000000e+00 : f32
    %543 = vector.broadcast %cst_168 : f32 to vector<2x192xf32>
    %544 = arith.addf %543, %542 : vector<2x192xf32>
    %545 = arith.divf %543, %544 : vector<2x192xf32>
    %546 = vector.extract_strided_slice %539 {offsets = [0, 192], sizes = [2, 64], strides = [1, 1]} : vector<2x256xf32> to vector<2x64xf32>
    %547 = math.tanh %546 : vector<2x64xf32>
    %548 = vector.extract_strided_slice %545 {offsets = [0, 0], sizes = [2, 64], strides = [1, 1]} : vector<2x192xf32> to vector<2x64xf32>
    %549 = vector.extract_strided_slice %545 {offsets = [0, 64], sizes = [2, 64], strides = [1, 1]} : vector<2x192xf32> to vector<2x64xf32>
    %550 = vector.extract_strided_slice %545 {offsets = [0, 128], sizes = [2, 64], strides = [1, 1]} : vector<2x192xf32> to vector<2x64xf32>
    %551 = arith.mulf %549, %532 : vector<2x64xf32>
    %552 = arith.mulf %548, %547 : vector<2x64xf32>
    %553 = arith.addf %551, %552 : vector<2x64xf32>
    %554 = math.tanh %553 : vector<2x64xf32>
    %555 = arith.mulf %550, %554 : vector<2x64xf32>
    %c4_i32_169 = arith.constant 4 : i32
    %556 = arith.index_cast %c4_i32_169 : i32 to index
    %c0_170 = arith.constant 0 : index
    %c0_171 = arith.constant 0 : index
    %557 = vector.load %arg13[%556, %c0_170, %c0_171] : memref<8x2x256xf32, #tpu.memory_space<vmem>>, vector<1x2x256xf32>
    %558 = vector.shape_cast %557 : vector<1x2x256xf32> to vector<2x256xf32>
    %cst_172 = arith.constant dense<0.000000e+00> : vector<2x256xf32>
    %559 = tpu.matmul %555, %469, %cst_172 {dimension_numbers = #tpu.dot_dimension_numbers<[1], [0], [0], [1], [0, 0, 1, 1], [], []>} : vector<2x64xf32>, vector<64x256xf32>, vector<2x256xf32> -> vector<2x256xf32>
    %560 = arith.addf %558, %559 : vector<2x256xf32>
    %561 = vector.extract_strided_slice %560 {offsets = [0, 0], sizes = [2, 192], strides = [1, 1]} : vector<2x256xf32> to vector<2x192xf32>
    %562 = arith.negf %561 : vector<2x192xf32>
    %563 = math.exp %562 : vector<2x192xf32>
    %cst_173 = arith.constant 1.000000e+00 : f32
    %564 = vector.broadcast %cst_173 : f32 to vector<2x192xf32>
    %565 = arith.addf %564, %563 : vector<2x192xf32>
    %566 = arith.divf %564, %565 : vector<2x192xf32>
    %567 = vector.extract_strided_slice %560 {offsets = [0, 192], sizes = [2, 64], strides = [1, 1]} : vector<2x256xf32> to vector<2x64xf32>
    %568 = math.tanh %567 : vector<2x64xf32>
    %569 = vector.extract_strided_slice %566 {offsets = [0, 0], sizes = [2, 64], strides = [1, 1]} : vector<2x192xf32> to vector<2x64xf32>
    %570 = vector.extract_strided_slice %566 {offsets = [0, 64], sizes = [2, 64], strides = [1, 1]} : vector<2x192xf32> to vector<2x64xf32>
    %571 = vector.extract_strided_slice %566 {offsets = [0, 128], sizes = [2, 64], strides = [1, 1]} : vector<2x192xf32> to vector<2x64xf32>
    %572 = arith.mulf %570, %553 : vector<2x64xf32>
    %573 = arith.mulf %569, %568 : vector<2x64xf32>
    %574 = arith.addf %572, %573 : vector<2x64xf32>
    %575 = math.tanh %574 : vector<2x64xf32>
    %576 = arith.mulf %571, %575 : vector<2x64xf32>
    %c5_i32_174 = arith.constant 5 : i32
    %577 = arith.index_cast %c5_i32_174 : i32 to index
    %c0_175 = arith.constant 0 : index
    %c0_176 = arith.constant 0 : index
    %578 = vector.load %arg13[%577, %c0_175, %c0_176] : memref<8x2x256xf32, #tpu.memory_space<vmem>>, vector<1x2x256xf32>
    %579 = vector.shape_cast %578 : vector<1x2x256xf32> to vector<2x256xf32>
    %cst_177 = arith.constant dense<0.000000e+00> : vector<2x256xf32>
    %580 = tpu.matmul %576, %469, %cst_177 {dimension_numbers = #tpu.dot_dimension_numbers<[1], [0], [0], [1], [0, 0, 1, 1], [], []>} : vector<2x64xf32>, vector<64x256xf32>, vector<2x256xf32> -> vector<2x256xf32>
    %581 = arith.addf %579, %580 : vector<2x256xf32>
    %582 = vector.extract_strided_slice %581 {offsets = [0, 0], sizes = [2, 192], strides = [1, 1]} : vector<2x256xf32> to vector<2x192xf32>
    %583 = arith.negf %582 : vector<2x192xf32>
    %584 = math.exp %583 : vector<2x192xf32>
    %cst_178 = arith.constant 1.000000e+00 : f32
    %585 = vector.broadcast %cst_178 : f32 to vector<2x192xf32>
    %586 = arith.addf %585, %584 : vector<2x192xf32>
    %587 = arith.divf %585, %586 : vector<2x192xf32>
    %588 = vector.extract_strided_slice %581 {offsets = [0, 192], sizes = [2, 64], strides = [1, 1]} : vector<2x256xf32> to vector<2x64xf32>
    %589 = math.tanh %588 : vector<2x64xf32>
    %590 = vector.extract_strided_slice %587 {offsets = [0, 0], sizes = [2, 64], strides = [1, 1]} : vector<2x192xf32> to vector<2x64xf32>
    %591 = vector.extract_strided_slice %587 {offsets = [0, 64], sizes = [2, 64], strides = [1, 1]} : vector<2x192xf32> to vector<2x64xf32>
    %592 = vector.extract_strided_slice %587 {offsets = [0, 128], sizes = [2, 64], strides = [1, 1]} : vector<2x192xf32> to vector<2x64xf32>
    %593 = arith.mulf %591, %574 : vector<2x64xf32>
    %594 = arith.mulf %590, %589 : vector<2x64xf32>
    %595 = arith.addf %593, %594 : vector<2x64xf32>
    %596 = math.tanh %595 : vector<2x64xf32>
    %597 = arith.mulf %592, %596 : vector<2x64xf32>
    %c6_i32_179 = arith.constant 6 : i32
    %598 = arith.index_cast %c6_i32_179 : i32 to index
    %c0_180 = arith.constant 0 : index
    %c0_181 = arith.constant 0 : index
    %599 = vector.load %arg13[%598, %c0_180, %c0_181] : memref<8x2x256xf32, #tpu.memory_space<vmem>>, vector<1x2x256xf32>
    %600 = vector.shape_cast %599 : vector<1x2x256xf32> to vector<2x256xf32>
    %cst_182 = arith.constant dense<0.000000e+00> : vector<2x256xf32>
    %601 = tpu.matmul %597, %469, %cst_182 {dimension_numbers = #tpu.dot_dimension_numbers<[1], [0], [0], [1], [0, 0, 1, 1], [], []>} : vector<2x64xf32>, vector<64x256xf32>, vector<2x256xf32> -> vector<2x256xf32>
    %602 = arith.addf %600, %601 : vector<2x256xf32>
    %603 = vector.extract_strided_slice %602 {offsets = [0, 0], sizes = [2, 192], strides = [1, 1]} : vector<2x256xf32> to vector<2x192xf32>
    %604 = arith.negf %603 : vector<2x192xf32>
    %605 = math.exp %604 : vector<2x192xf32>
    %cst_183 = arith.constant 1.000000e+00 : f32
    %606 = vector.broadcast %cst_183 : f32 to vector<2x192xf32>
    %607 = arith.addf %606, %605 : vector<2x192xf32>
    %608 = arith.divf %606, %607 : vector<2x192xf32>
    %609 = vector.extract_strided_slice %602 {offsets = [0, 192], sizes = [2, 64], strides = [1, 1]} : vector<2x256xf32> to vector<2x64xf32>
    %610 = math.tanh %609 : vector<2x64xf32>
    %611 = vector.extract_strided_slice %608 {offsets = [0, 0], sizes = [2, 64], strides = [1, 1]} : vector<2x192xf32> to vector<2x64xf32>
    %612 = vector.extract_strided_slice %608 {offsets = [0, 64], sizes = [2, 64], strides = [1, 1]} : vector<2x192xf32> to vector<2x64xf32>
    %613 = vector.extract_strided_slice %608 {offsets = [0, 128], sizes = [2, 64], strides = [1, 1]} : vector<2x192xf32> to vector<2x64xf32>
    %614 = arith.mulf %612, %595 : vector<2x64xf32>
    %615 = arith.mulf %611, %610 : vector<2x64xf32>
    %616 = arith.addf %614, %615 : vector<2x64xf32>
    %617 = math.tanh %616 : vector<2x64xf32>
    %618 = arith.mulf %613, %617 : vector<2x64xf32>
    %c7_i32_184 = arith.constant 7 : i32
    %619 = arith.index_cast %c7_i32_184 : i32 to index
    %c0_185 = arith.constant 0 : index
    %c0_186 = arith.constant 0 : index
    %620 = vector.load %arg13[%619, %c0_185, %c0_186] : memref<8x2x256xf32, #tpu.memory_space<vmem>>, vector<1x2x256xf32>
    %621 = vector.shape_cast %620 : vector<1x2x256xf32> to vector<2x256xf32>
    %cst_187 = arith.constant dense<0.000000e+00> : vector<2x256xf32>
    %622 = tpu.matmul %618, %469, %cst_187 {dimension_numbers = #tpu.dot_dimension_numbers<[1], [0], [0], [1], [0, 0, 1, 1], [], []>} : vector<2x64xf32>, vector<64x256xf32>, vector<2x256xf32> -> vector<2x256xf32>
    %623 = arith.addf %621, %622 : vector<2x256xf32>
    %624 = vector.extract_strided_slice %623 {offsets = [0, 0], sizes = [2, 192], strides = [1, 1]} : vector<2x256xf32> to vector<2x192xf32>
    %625 = arith.negf %624 : vector<2x192xf32>
    %626 = math.exp %625 : vector<2x192xf32>
    %cst_188 = arith.constant 1.000000e+00 : f32
    %627 = vector.broadcast %cst_188 : f32 to vector<2x192xf32>
    %628 = arith.addf %627, %626 : vector<2x192xf32>
    %629 = arith.divf %627, %628 : vector<2x192xf32>
    %630 = vector.extract_strided_slice %623 {offsets = [0, 192], sizes = [2, 64], strides = [1, 1]} : vector<2x256xf32> to vector<2x64xf32>
    %631 = math.tanh %630 : vector<2x64xf32>
    %632 = vector.extract_strided_slice %629 {offsets = [0, 0], sizes = [2, 64], strides = [1, 1]} : vector<2x192xf32> to vector<2x64xf32>
    %633 = vector.extract_strided_slice %629 {offsets = [0, 64], sizes = [2, 64], strides = [1, 1]} : vector<2x192xf32> to vector<2x64xf32>
    %634 = vector.extract_strided_slice %629 {offsets = [0, 128], sizes = [2, 64], strides = [1, 1]} : vector<2x192xf32> to vector<2x64xf32>
    %635 = arith.mulf %633, %616 : vector<2x64xf32>
    %636 = arith.mulf %632, %631 : vector<2x64xf32>
    %637 = arith.addf %635, %636 : vector<2x64xf32>
    %638 = math.tanh %637 : vector<2x64xf32>
    %639 = arith.mulf %634, %638 : vector<2x64xf32>
    %c8_i32_189 = arith.constant 8 : i32
    %c0_190 = arith.constant 0 : index
    %c0_191 = arith.constant 0 : index
    %640 = vector.load %arg10[%c0_190, %c0_191] : memref<1x64xf32, #tpu.memory_space<vmem>>, vector<1x64xf32>
    %641 = vector.broadcast %640 : vector<1x64xf32> to vector<2x64xf32>
    %642 = arith.mulf %639, %641 : vector<2x64xf32>
    %cst_192 = arith.constant dense<0.000000e+00> : vector<2xf32>
    %643 = vector.multi_reduction <add>, %642, %cst_192 [1] : vector<2x64xf32> to vector<2xf32>
    %644 = vector.shape_cast %643 : vector<2xf32> to vector<2x1xf32>
    %c0_193 = arith.constant 0 : index
    %c0_194 = arith.constant 0 : index
    %645 = vector.load %arg11[%c0_193, %c0_194] : memref<1x1xf32, #tpu.memory_space<vmem>>, vector<1x1xf32>
    %646 = vector.broadcast %645 : vector<1x1xf32> to vector<2x1xf32>
    %647 = arith.addf %644, %646 : vector<2x1xf32>
    %c0_195 = arith.constant 0 : index
    %c0_196 = arith.constant 0 : index
    %648 = vector.load %arg12[%c0_195, %c0_196] : memref<2x1xf32, #tpu.memory_space<vmem>>, vector<2x1xf32>
    tpu.vector_store %arg12[%c0_195, %c0_196], %647 {strides = array<i32>} : memref<2x1xf32, #tpu.memory_space<vmem>>, vector<2x1xf32>,
    return
  }
}

</mosaic_0001>

<llo_original>
// kernel: stock_lstm_forward.1
$region0: #{stock_lstm_forward.1}
  #allocation0 [shape = 'u32[]', space=smem, size = 0x4, offset = 0x4, fixed_abs, tag = 'smem constant byte address 0x4 - core index']
  #allocation1 [shape = 'u32[144,128]{1,0:T(1,128)}', space=vmem, size = 0x12000, scoped, tag = 'internal scratch']
  #allocation2 [shape = 'f32[8,2,256]{2,1,0:T(2,128)}', space=vmem, size = 0x4000, scoped, tag = 'scratch operand']
  #allocation3 [shape = 'f32[1,1]{1,0:T(1,128)S(1)}', space=vmem, size = 0x200, scoped, tag = 'scoped memory for stock_lstm_forward.1']
  %s0 = inlined_call_operand.vmem [shape: f32[8,2,1], index: 0, kind: input, shape index: {}]
  %s1 = inlined_call_operand.vmem [shape: f32[1,256], index: 1, kind: input, shape index: {}]
  %s2 = inlined_call_operand.hbm [shape: f32[64,256], index: 2, kind: input, shape index: {}]
  %s3 = inlined_call_operand.vmem [shape: f32[1,256], index: 3, kind: input, shape index: {}]
  %s4 = inlined_call_operand.hbm [shape: f32[64,256], index: 4, kind: input, shape index: {}]
  %s5 = inlined_call_operand.hbm [shape: f32[64,256], index: 5, kind: input, shape index: {}]
  %s6 = inlined_call_operand.vmem [shape: f32[1,256], index: 6, kind: input, shape index: {}]
  %s7 = inlined_call_operand.hbm [shape: f32[64,256], index: 7, kind: input, shape index: {}]
  %s8 = inlined_call_operand.hbm [shape: f32[64,256], index: 8, kind: input, shape index: {}]
  %s9 = inlined_call_operand.vmem [shape: f32[1,256], index: 9, kind: input, shape index: {}]
  %s10 = inlined_call_operand.vmem [shape: f32[1,64], index: 10, kind: input, shape index: {}]
  %s11 = inlined_call_operand.<no memory space> [shape: f32[1,1], index: 11, kind: input, shape index: {}]
  %s12 = inlined_call_operand.vmem [shape: f32[2,1], index: 12, kind: output, shape index: {}]
  %s13 = sld [smem:[#allocation0]]
  $region78: #{stock_lstm_forward.1} parent=0
    _
  %s15 = ssub.s32 1, %s13
  %s16 = scalar_select 0, %s15, %s13
  %v17 = vstv %s11
  %18 = vst [vmem:[#allocation3] sm:$0x1] %v17
  $region1: #{stock_lstm_forward.1} parent=0
    #allocation4 [shape = 'u8[65536]{0}', space=vmem, size = 0x10000, scoped, tag = 'input window, operand 2, single buffered']
    #allocation5 [shape = 's32[1]{0}', space=sflag, size = 0x4, scoped, tag = 'scoped memory for stock_lstm_forward.1']
    #allocation6 [shape = 'u8[65536]{0}', space=vmem, size = 0x10000, scoped, tag = 'input window, operand 4, single buffered']
    #allocation7 [shape = 's32[1]{0}', space=sflag, size = 0x4, scoped, tag = 'scoped memory for stock_lstm_forward.1']
    #allocation8 [shape = 'u8[65536]{0}', space=vmem, size = 0x10000, scoped, tag = 'input window, operand 5, single buffered']
    #allocation9 [shape = 'u8[65536]{0}', space=vmem, size = 0x10000, scoped, tag = 'input window, operand 7, single buffered']
    #allocation10 [shape = 's32[1]{0}', space=sflag, size = 0x4, scoped, tag = 'scoped memory for stock_lstm_forward.1']
    #allocation11 [shape = 'u8[65536]{0}', space=vmem, size = 0x10000, scoped, tag = 'input window, operand 8, single buffered']
    %19 = vsyncpa [#allocation5], 0
    %20 = vsyncpa [#allocation7], 0
    %21 = vsyncpa [#allocation10], 0
    // Predicated region
    $region2: #{stock_lstm_forward.1} parent=1 // pred_check
      _
    $region3: #{stock_lstm_forward.1} parent=1 // pred_check_branch
      %23 = sbr.rel (0) target = $region5
    $region4: #{stock_lstm_forward.1} parent=1 // pred_region
      _
    $region5: #{stock_lstm_forward.1} parent=1 // pred_fallthru
      _
    // Predicated region
    $region6: #{stock_lstm_forward.1} parent=1 // pred_check
      _
    $region7: #{stock_lstm_forward.1} parent=1 // pred_check_branch
      %25 = sbr.rel (0) target = $region9
    $region8: #{stock_lstm_forward.1} parent=1 // pred_region
      _
    $region9: #{stock_lstm_forward.1} parent=1 // pred_fallthru
      _
    // Predicated region
    $region10: #{stock_lstm_forward.1} parent=1 // pred_check
      _
    $region11: #{stock_lstm_forward.1} parent=1 // pred_check_branch
      %27 = sbr.rel (0) target = $region13
    $region12: #{stock_lstm_forward.1} parent=1 // pred_region
      %s29 = ssub.s32 2048, 2048
      %30 = vsyncadd [#allocation5], %s29
      %s31 = sshll.u32 [#allocation4], 4
      %s32 = int_to_ptr.vmem [resolvable:$true] %s31
      %37 = dma.hbm_to_vmem [thread:$0]  %s2, 2048, %s32, [#allocation5], 256, 256, 16
    $region13: #{stock_lstm_forward.1} parent=1 // pred_fallthru
      _
    // Predicated region
    $region14: #{stock_lstm_forward.1} parent=1 // pred_check
      _
    $region15: #{stock_lstm_forward.1} parent=1 // pred_check_branch
      %39 = sbr.rel (0) target = $region17
    $region16: #{stock_lstm_forward.1} parent=1 // pred_region
      _
    $region17: #{stock_lstm_forward.1} parent=1 // pred_fallthru
      _
    // Predicated region
    $region18: #{stock_lstm_forward.1} parent=1 // pred_check
      _
    $region19: #{stock_lstm_forward.1} parent=1 // pred_check_branch
      %41 = sbr.rel (0) target = $region21
    $region20: #{stock_lstm_forward.1} parent=1 // pred_region
      %s43 = ssub.s32 2048, 2048
      %44 = vsyncadd [#allocation7], %s43
      %s45 = sshll.u32 [#allocation6], 4
      %s46 = int_to_ptr.vmem [resolvable:$true] %s45
      %51 = dma.hbm_to_vmem [thread:$0]  %s4, 2048, %s46, [#allocation7], 256, 256, 16
    $region21: #{stock_lstm_forward.1} parent=1 // pred_fallthru
      _
    // Predicated region
    $region22: #{stock_lstm_forward.1} parent=1 // pred_check
      _
    $region23: #{stock_lstm_forward.1} parent=1 // pred_check_branch
      %53 = sbr.rel (0) target = $region25
    $region24: #{stock_lstm_forward.1} parent=1 // pred_region
      %s55 = ssub.s32 2048, 2048
      %56 = vsyncadd [#allocation7], %s55
      %s57 = sshll.u32 [#allocation8], 4
      %s58 = int_to_ptr.vmem [resolvable:$true] %s57
      %63 = dma.hbm_to_vmem [thread:$0]  %s5, 2048, %s58, [#allocation7], 256, 256, 16
    $region25: #{stock_lstm_forward.1} parent=1 // pred_fallthru
      _
    // Predicated region
    $region26: #{stock_lstm_forward.1} parent=1 // pred_check
      _
    $region27: #{stock_lstm_forward.1} parent=1 // pred_check_branch
      %65 = sbr.rel (0) target = $region29
    $region28: #{stock_lstm_forward.1} parent=1 // pred_region
      _
    $region29: #{stock_lstm_forward.1} parent=1 // pred_fallthru
      _
    // Predicated region
    $region30: #{stock_lstm_forward.1} parent=1 // pred_check
      _
    $region31: #{stock_lstm_forward.1} parent=1 // pred_check_branch
      %67 = sbr.rel (0) target = $region33
    $region32: #{stock_lstm_forward.1} parent=1 // pred_region
      %s69 = ssub.s32 2048, 2048
      %70 = vsyncadd [#allocation10], %s69
      %s71 = sshll.u32 [#allocation9], 4
      %s72 = int_to_ptr.vmem [resolvable:$true] %s71
      %77 = dma.hbm_to_vmem [thread:$0]  %s7, 2048, %s72, [#allocation10], 256, 256, 16
    $region33: #{stock_lstm_forward.1} parent=1 // pred_fallthru
      _
    // Predicated region
    $region34: #{stock_lstm_forward.1} parent=1 // pred_check
      _
    $region35: #{stock_lstm_forward.1} parent=1 // pred_check_branch
      %79 = sbr.rel (0) target = $region37
    $region36: #{stock_lstm_forward.1} parent=1 // pred_region
      %s81 = ssub.s32 2048, 2048
      %82 = vsyncadd [#allocation10], %s81
      %s83 = sshll.u32 [#allocation11], 4
      %s84 = int_to_ptr.vmem [resolvable:$true] %s83
      %89 = dma.hbm_to_vmem [thread:$0]  %s8, 2048, %s84, [#allocation10], 256, 256, 16
    $region37: #{stock_lstm_forward.1} parent=1 // pred_fallthru
      _
    // Predicated region
    $region38: #{stock_lstm_forward.1} parent=1 // pred_check
      _
    $region39: #{stock_lstm_forward.1} parent=1 // pred_check_branch
      %91 = sbr.rel (0) target = $region41
    $region40: #{stock_lstm_forward.1} parent=1 // pred_region
      _
    $region41: #{stock_lstm_forward.1} parent=1 // pred_fallthru
      _
    // Predicated region
    $region42: #{stock_lstm_forward.1} parent=1 // pred_check
      _
    $region43: #{stock_lstm_forward.1} parent=1 // pred_check_branch
      %93 = sbr.rel (0) target = $region45
    $region44: #{stock_lstm_forward.1} parent=1 // pred_region
      _
    $region45: #{stock_lstm_forward.1} parent=1 // pred_fallthru
      _
    // Predicated region
    $region46: #{stock_lstm_forward.1} parent=1 // pred_check
      _
    $region47: #{stock_lstm_forward.1} parent=1 // pred_check_branch
      %95 = sbr.rel (0) target = $region49
    $region48: #{stock_lstm_forward.1} parent=1 // pred_region
      _
    $region49: #{stock_lstm_forward.1} parent=1 // pred_fallthru
      _
    // Predicated region
    $region50: #{stock_lstm_forward.1} parent=1 // pred_check
      _
    $region51: #{stock_lstm_forward.1} parent=1 // pred_check_branch
      %97 = sbr.rel (0) target = $region53
    $region52: #{stock_lstm_forward.1} parent=1 // pred_region
      %98 = dma.done [#allocation5], 2048
    $region53: #{stock_lstm_forward.1} parent=1 // pred_fallthru
      _
    // Predicated region
    $region54: #{stock_lstm_forward.1} parent=1 // pred_check
      _
    $region55: #{stock_lstm_forward.1} parent=1 // pred_check_branch
      %100 = sbr.rel (0) target = $region57
    $region56: #{stock_lstm_forward.1} parent=1 // pred_region
      %101 = dma.done [#allocation7], 2048
    $region57: #{stock_lstm_forward.1} parent=1 // pred_fallthru
      _
    // Predicated region
    $region58: #{stock_lstm_forward.1} parent=1 // pred_check
      _
    $region59: #{stock_lstm_forward.1} parent=1 // pred_check_branch
      %103 = sbr.rel (0) target = $region61
    $region60: #{stock_lstm_forward.1} parent=1 // pred_region
      %104 = dma.done [#allocation7], 2048
    $region61: #{stock_lstm_forward.1} parent=1 // pred_fallthru
      _
    // Predicated region
    $region62: #{stock_lstm_forward.1} parent=1 // pred_check
      _
    $region63: #{stock_lstm_forward.1} parent=1 // pred_check_branch
      %106 = sbr.rel (0) target = $region65
    $region64: #{stock_lstm_forward.1} parent=1 // pred_region
      %107 = dma.done [#allocation10], 2048
    $region65: #{stock_lstm_forward.1} parent=1 // pred_fallthru
      _
    // Predicated region
    $region66: #{stock_lstm_forward.1} parent=1 // pred_check
      _
    $region67: #{stock_lstm_forward.1} parent=1 // pred_check_branch
      %109 = sbr.rel (0) target = $region69
    $region68: #{stock_lstm_forward.1} parent=1 // pred_region
      %110 = dma.done [#allocation10], 2048
    $region69: #{stock_lstm_forward.1} parent=1 // pred_fallthru
      _
    %v111 = vld [vmem:[%s0] sm:$0x3]
    %v112 = vld [vmem:[%s0 + $0x2] sm:$0x3]
    %v113 = vld [vmem:[%s0 + $0x4] sm:$0x3]
    %v114 = vld [vmem:[%s0 + $0x6] sm:$0x3]
    %v115 = vld [vmem:[%s0 + $0x8] sm:$0x3]
    %v116 = vld [vmem:[%s0 + $0xa] sm:$0x3]
    %v117 = vld [vmem:[%s0 + $0xc] sm:$0x3]
    %v118 = vld [vmem:[%s0 + $0xe] sm:$0x3]
    %v119 = vld [vmem:[%s1] sm:$0x3]
    %121 = vset.pattern.permute.xlu0 0
    %122 = vperm.xlu0 %121, %v111
    %v123 = vpop.permute.xlu0 %122
    %126 = vset.pattern.permute.xlu0 0
    %127 = vperm.xlu0 %126, %v112
    %v128 = vpop.permute.xlu0 %127
    %131 = vset.pattern.permute.xlu0 0
    %132 = vperm.xlu0 %131, %v113
    %v133 = vpop.permute.xlu0 %132
    %136 = vset.pattern.permute.xlu0 0
    %137 = vperm.xlu0 %136, %v114
    %v138 = vpop.permute.xlu0 %137
    %141 = vset.pattern.permute.xlu0 0
    %142 = vperm.xlu0 %141, %v115
    %v143 = vpop.permute.xlu0 %142
    %146 = vset.pattern.permute.xlu0 0
    %147 = vperm.xlu0 %146, %v116
    %v148 = vpop.permute.xlu0 %147
    %151 = vset.pattern.permute.xlu0 0
    %152 = vperm.xlu0 %151, %v117
    %v153 = vpop.permute.xlu0 %152
    %156 = vset.pattern.permute.xlu0 0
    %157 = vperm.xlu0 %156, %v118
    %v158 = vpop.permute.xlu0 %157
    %v161 = vlaneseq
    %v162 = vshrl.u32 %v161, 7
    %v163 = vsub.s32 0, %v162
    %v164 = vrot.slane %v119, %v163
    %v165 = vlaneseq
    %v166 = vshrl.u32 %v165, 7
    %v167 = vsub.s32 1, %v166
    %v168 = vrot.slane %v119, %v167
    %v171 = vmul.f32 %v123, %v164
    %v172 = vmul.f32 %v123, %v168
    %v173 = vmul.f32 %v128, %v164
    %v174 = vmul.f32 %v128, %v168
    %v175 = vmul.f32 %v133, %v164
    %v176 = vmul.f32 %v133, %v168
    %v177 = vmul.f32 %v138, %v164
    %v178 = vmul.f32 %v138, %v168
    %v179 = vmul.f32 %v143, %v164
    %v180 = vmul.f32 %v143, %v168
    %v181 = vmul.f32 %v148, %v164
    %v182 = vmul.f32 %v148, %v168
    %v183 = vmul.f32 %v153, %v164
    %v184 = vmul.f32 %v153, %v168
    %v185 = vmul.f32 %v158, %v164
    %v186 = vmul.f32 %v158, %v168
    %v187 = vld [vmem:[%s3] sm:$0x3]
    %v189 = vlaneseq
    %v190 = vshrl.u32 %v189, 7
    %v191 = vsub.s32 0, %v190
    %v192 = vrot.slane %v187, %v191
    %v193 = vlaneseq
    %v194 = vshrl.u32 %v193, 7
    %v195 = vsub.s32 1, %v194
    %v196 = vrot.slane %v187, %v195
    %v199 = vadd.f32 %v171, %v192
    %v200 = vadd.f32 %v172, %v196
    %v201 = vadd.f32 %v173, %v192
    %v202 = vadd.f32 %v174, %v196
    %v203 = vadd.f32 %v175, %v192
    %v204 = vadd.f32 %v176, %v196
    %v205 = vadd.f32 %v177, %v192
    %v206 = vadd.f32 %v178, %v196
    %v207 = vadd.f32 %v179, %v192
    %v208 = vadd.f32 %v180, %v196
    %v209 = vadd.f32 %v181, %v192
    %v210 = vadd.f32 %v182, %v196
    %v211 = vadd.f32 %v183, %v192
    %v212 = vadd.f32 %v184, %v196
    %v213 = vadd.f32 %v185, %v192
    %v214 = vadd.f32 %v186, %v196
    %v231 = vcombine.low %v199, %v200
    %v233 = vunpack.c.l.s4 1983009808
    %v234 = vunpack.c.0.s8 %v233
    %v235 = vlaneseq
    %v236 = vshrl.u32 %v235, 7
    %v237 = vsub.s32 %v234, %v236
    %v238 = vrot.slane %v231, %v237
    %v239 = vcombine.low %v201, %v202
    %v241 = vunpack.c.l.s4 1983009808
    %v242 = vunpack.c.0.s8 %v241
    %v243 = vlaneseq
    %v244 = vshrl.u32 %v243, 7
    %v245 = vsub.s32 %v242, %v244
    %v246 = vrot.slane %v239, %v245
    %v247 = vcombine.low %v203, %v204
    %v249 = vunpack.c.l.s4 1983009808
    %v250 = vunpack.c.0.s8 %v249
    %v251 = vlaneseq
    %v252 = vshrl.u32 %v251, 7
    %v253 = vsub.s32 %v250, %v252
    %v254 = vrot.slane %v247, %v253
    %v255 = vcombine.low %v205, %v206
    %v257 = vunpack.c.l.s4 1983009808
    %v258 = vunpack.c.0.s8 %v257
    %v259 = vlaneseq
    %v260 = vshrl.u32 %v259, 7
    %v261 = vsub.s32 %v258, %v260
    %v262 = vrot.slane %v255, %v261
    %v263 = vcombine.low %v207, %v208
    %v265 = vunpack.c.l.s4 1983009808
    %v266 = vunpack.c.0.s8 %v265
    %v267 = vlaneseq
    %v268 = vshrl.u32 %v267, 7
    %v269 = vsub.s32 %v266, %v268
    %v270 = vrot.slane %v263, %v269
    %v271 = vcombine.low %v209, %v210
    %v273 = vunpack.c.l.s4 1983009808
    %v274 = vunpack.c.0.s8 %v273
    %v275 = vlaneseq
    %v276 = vshrl.u32 %v275, 7
    %v277 = vsub.s32 %v274, %v276
    %v278 = vrot.slane %v271, %v277
    %v279 = vcombine.low %v211, %v212
    %v281 = vunpack.c.l.s4 1983009808
    %v282 = vunpack.c.0.s8 %v281
    %v283 = vlaneseq
    %v284 = vshrl.u32 %v283, 7
    %v285 = vsub.s32 %v282, %v284
    %v286 = vrot.slane %v279, %v285
    %v287 = vcombine.low %v213, %v214
    %v289 = vunpack.c.l.s4 1983009808
    %v290 = vunpack.c.0.s8 %v289
    %v291 = vlaneseq
    %v292 = vshrl.u32 %v291, 7
    %v293 = vsub.s32 %v290, %v292
    %v294 = vrot.slane %v287, %v293
    %303 = vst [vmem:[#allocation2] sm:$0xf] %v238
    %304 = vst [vmem:[#allocation2 + $0x4] sm:$0xf] %v246
    %305 = vst [vmem:[#allocation2 + $0x8] sm:$0xf] %v254
    %306 = vst [vmem:[#allocation2 + $0xc] sm:$0xf] %v262
    %307 = vst [vmem:[#allocation2 + $0x10] sm:$0xf] %v270
    %308 = vst [vmem:[#allocation2 + $0x14] sm:$0xf] %v278
    %309 = vst [vmem:[#allocation2 + $0x18] sm:$0xf] %v286
    %310 = vst [vmem:[#allocation2 + $0x1c] sm:$0xf] %v294
    %v311 = vld [vmem:[#allocation4] sm:$0xff]
    %v312 = vld [vmem:[#allocation4 + $0x8] sm:$0xff]
    %v313 = vld [vmem:[#allocation4 + $0x10] sm:$0xff]
    %v314 = vld [vmem:[#allocation4 + $0x18] sm:$0xff]
    %v315 = vld [vmem:[#allocation4 + $0x20] sm:$0xff]
    %v316 = vld [vmem:[#allocation4 + $0x28] sm:$0xff]
    %v317 = vld [vmem:[#allocation4 + $0x30] sm:$0xff]
    %v318 = vld [vmem:[#allocation4 + $0x38] sm:$0xff]
    %v319 = vld [vmem:[#allocation4 + $0x40] sm:$0xff]
    %v320 = vld [vmem:[#allocation4 + $0x48] sm:$0xff]
    %v321 = vld [vmem:[#allocation4 + $0x50] sm:$0xff]
    %v322 = vld [vmem:[#allocation4 + $0x58] sm:$0xff]
    %v323 = vld [vmem:[#allocation4 + $0x60] sm:$0xff]
    %v324 = vld [vmem:[#allocation4 + $0x68] sm:$0xff]
    %v325 = vld [vmem:[#allocation4 + $0x70] sm:$0xff]
    %v326 = vld [vmem:[#allocation4 + $0x78] sm:$0xff]
    %v327 = vld [vmem:[#allocation6] sm:$0xff]
    %v328 = vld [vmem:[#allocation6 + $0x8] sm:$0xff]
    %v329 = vld [vmem:[#allocation6 + $0x10] sm:$0xff]
    %v330 = vld [vmem:[#allocation6 + $0x18] sm:$0xff]
    %v331 = vld [vmem:[#allocation6 + $0x20] sm:$0xff]
    %v332 = vld [vmem:[#allocation6 + $0x28] sm:$0xff]
    %v333 = vld [vmem:[#allocation6 + $0x30] sm:$0xff]
    %v334 = vld [vmem:[#allocation6 + $0x38] sm:$0xff]
    %v335 = vld [vmem:[#allocation6 + $0x40] sm:$0xff]
    %v336 = vld [vmem:[#allocation6 + $0x48] sm:$0xff]
    %v337 = vld [vmem:[#allocation6 + $0x50] sm:$0xff]
    %v338 = vld [vmem:[#allocation6 + $0x58] sm:$0xff]
    %v339 = vld [vmem:[#allocation6 + $0x60] sm:$0xff]
    %v340 = vld [vmem:[#allocation6 + $0x68] sm:$0xff]
    %v341 = vld [vmem:[#allocation6 + $0x70] sm:$0xff]
    %v342 = vld [vmem:[#allocation6 + $0x78] sm:$0xff]
    %v343 = vld [vmem:[%s6] sm:$0x3]
    %v344 = vld [vmem:[#allocation2] sm:$0xf]
    %vm345 = vcmask 523264
    %v347 = vsel %vm345, 0.0, 0
    %349 = vmatprep.subr.mxu0 %v312
    %350 = vmatpush1.msra.mxu0 %v311
    %351 = vmatprep.subr.mxu0 %v314
    %352 = vmatpush1.msra.mxu0 %v313
    %353 = vmatprep.subr.mxu0 %v316
    %354 = vmatpush1.msra.mxu0 %v315
    %355 = vmatprep.subr.mxu0 %v318
    %356 = vmatpush1.msra.mxu0 %v317
    %357 = vmatprep.subr.mxu0 %v320
    %358 = vmatpush1.msra.mxu0 %v319
    %359 = vmatprep.subr.mxu0 %v322
    %360 = vmatpush1.msra.mxu0 %v321
    %361 = vmatprep.subr.mxu0 %v324
    %362 = vmatpush1.msra.mxu0 %v323
    %363 = vmatprep.subr.mxu0 %v326
    %364 = vmatpush1.msra.mxu0 %v325
    %365 = vmatprep.subr.mxu0 0.0
    %366 = vmatpush1.msra.mxu0 0.0
    %367 = vmatprep.subr.mxu0 0.0
    %368 = vmatpush1.msra.mxu0 0.0
    %369 = vmatprep.subr.mxu0 0.0
    %370 = vmatpush1.msra.mxu0 0.0
    %371 = vmatprep.subr.mxu0 0.0
    %372 = vmatpush1.msra.mxu0 0.0
    %373 = vmatprep.subr.mxu0 0.0
    %374 = vmatpush1.msra.mxu0 0.0
    %375 = vmatprep.subr.mxu0 0.0
    %376 = vmatpush1.msra.mxu0 0.0
    %377 = vmatprep.subr.mxu0 0.0
    %378 = vmatpush1.msra.mxu0 0.0
    %379 = vmatprep.subr.mxu0 0.0
    %380 = vmatpush1.msra.mxu0 0.0
    %381 = vmatprep.subr.mxu0 0.0
    %382 = vmatpush1.msra.mxu0 0.0
    %383 = vmatprep.subr.mxu0 0.0
    %384 = vmatpush1.msra.mxu0 0.0
    %385 = vmatprep.subr.mxu0 0.0
    %386 = vmatpush1.msra.mxu0 0.0
    %387 = vmatprep.subr.mxu0 0.0
    %388 = vmatpush1.msra.mxu0 0.0
    %389 = vmatprep.subr.mxu0 0.0
    %390 = vmatpush1.msra.mxu0 0.0
    %391 = vmatprep.subr.mxu0 0.0
    %392 = vmatpush1.msra.mxu0 0.0
    %393 = vmatprep.subr.mxu0 0.0
    %394 = vmatpush1.msra.mxu0 0.0
    %395 = vmatprep.subr.mxu0 0.0
    %396 = vmatpush1.msra.mxu0 0.0
    %397 = vmatprep.subr.mxu0 0.0
    %398 = vmatpush1.msra.mxu0 0.0
    %399 = vmatprep.subr.mxu0 0.0
    %400 = vmatpush1.msra.mxu0 0.0
    %401 = vmatprep.subr.mxu0 0.0
    %402 = vmatpush1.msra.mxu0 0.0
    %403 = vmatprep.subr.mxu0 0.0
    %404 = vmatpush1.msra.mxu0 0.0
    %405 = vmatprep.subr.mxu0 0.0
    %406 = vmatpush1.msra.mxu0 0.0
    %407 = vmatprep.subr.mxu0 0.0
    %408 = vmatpush1.msra.mxu0 0.0
    %409 = vmatprep.subr.mxu0 0.0
    %410 = vmatpush1.msra.mxu0 0.0
    %411 = vmatprep.subr.mxu0 0.0
    %412 = vmatpush1.msra.mxu0 0.0
    %413 = vmatprep.mubr.f32.mxu0 0.0
    %414 = vmatmul.mubr.f32.gmra.mrb[0].mxu0 %v347
    %v415 = vpop.f32.mrb[0].mxu0
    %v416 = vadd.f32 0.0, %v415
    %v417 = vpop.f32.mrb[0].mxu0
    %v418 = vadd.f32 0.0, %v417
    %419 = vdwg.mxu0
    %v422 = vcombine.low %v416, %v418
    %v424 = vunpack.c.l.s4 1983009808
    %v425 = vunpack.c.0.s8 %v424
    %v426 = vlaneseq
    %v427 = vshrl.u32 %v426, 7
    %v428 = vsub.s32 %v425, %v427
    %v429 = vrot.slane %v422, %v428
    %v431 = vadd.f32 %v344, %v429
    %v432 = vxor.u32 %v431, 2147483648
    %v433 = vmul.f32 %v432, 1.442695
    %v434 = vpow.pop %v433
    %v435 = vadd.f32 %v434, 1.0
    %v436 = vrcp.pop %v435
    %v437 = vmul.f32 1.0, %v436
    %439 = vrot.lane.b32.xlu0 %v431, 64
    %v440 = vpop.permute.xlu0 %439
    %v441 = vrot.slane %v440, 2
    %v443 = vtanh.pop %v441
    %v444 = vmul.f32 %v437, 0.0
    %v445 = vmul.f32 %v437, %v443
    %447 = vrot.lane.b32.xlu0 %v445, 64
    %v448 = vpop.permute.xlu0 %447
    %v450 = vadd.f32 %v444, %v448
    %v451 = vtanh.pop %v450
    %v453 = vrot.slane %v437, 2
    %456 = vrot.lane.b32.xlu0 %v451, 64
    %v457 = vpop.permute.xlu0 %456
    %v459 = vmul.f32 %v453, %v457
    %v461 = vlaneseq
    %v462 = vshrl.u32 %v461, 7
    %v463 = vsub.s32 0, %v462
    %v464 = vrot.slane %v343, %v463
    %v465 = vlaneseq
    %v466 = vshrl.u32 %v465, 7
    %v467 = vsub.s32 1, %v466
    %v468 = vrot.slane %v343, %v467
    %v472 = vsel %vm345, %v459, 0
    %474 = vmatprep.subr.mxu0 %v328
    %475 = vmatpush1.msra.mxu0 %v327
    %476 = vmatprep.subr.mxu0 %v330
    %477 = vmatpush1.msra.mxu0 %v329
    %478 = vmatprep.subr.mxu0 %v332
    %479 = vmatpush1.msra.mxu0 %v331
    %480 = vmatprep.subr.mxu0 %v334
    %481 = vmatpush1.msra.mxu0 %v333
    %482 = vmatprep.subr.mxu0 %v336
    %483 = vmatpush1.msra.mxu0 %v335
    %484 = vmatprep.subr.mxu0 %v338
    %485 = vmatpush1.msra.mxu0 %v337
    %486 = vmatprep.subr.mxu0 %v340
    %487 = vmatpush1.msra.mxu0 %v339
    %488 = vmatprep.subr.mxu0 %v342
    %489 = vmatpush1.msra.mxu0 %v341
    %490 = vmatprep.subr.mxu0 0.0
    %491 = vmatpush1.msra.mxu0 0.0
    %492 = vmatprep.subr.mxu0 0.0
    %493 = vmatpush1.msra.mxu0 0.0
    %494 = vmatprep.subr.mxu0 0.0
    %495 = vmatpush1.msra.mxu0 0.0
    %496 = vmatprep.subr.mxu0 0.0
    %497 = vmatpush1.msra.mxu0 0.0
    %498 = vmatprep.subr.mxu0 0.0
    %499 = vmatpush1.msra.mxu0 0.0
    %500 = vmatprep.subr.mxu0 0.0
    %501 = vmatpush1.msra.mxu0 0.0
    %502 = vmatprep.subr.mxu0 0.0
    %503 = vmatpush1.msra.mxu0 0.0
    %504 = vmatprep.subr.mxu0 0.0
    %505 = vmatpush1.msra.mxu0 0.0
    %506 = vmatprep.subr.mxu0 0.0
    %507 = vmatpush1.msra.mxu0 0.0
    %508 = vmatprep.subr.mxu0 0.0
    %509 = vmatpush1.msra.mxu0 0.0
    %510 = vmatprep.subr.mxu0 0.0
    %511 = vmatpush1.msra.mxu0 0.0
    %512 = vmatprep.subr.mxu0 0.0
    %513 = vmatpush1.msra.mxu0 0.0
    %514 = vmatprep.subr.mxu0 0.0
    %515 = vmatpush1.msra.mxu0 0.0
    %516 = vmatprep.subr.mxu0 0.0
    %517 = vmatpush1.msra.mxu0 0.0
    %518 = vmatprep.subr.mxu0 0.0
    %519 = vmatpush1.msra.mxu0 0.0
    %520 = vmatprep.subr.mxu0 0.0
    %521 = vmatpush1.msra.mxu0 0.0
    %522 = vmatprep.subr.mxu0 0.0
    %523 = vmatpush1.msra.mxu0 0.0
    %524 = vmatprep.subr.mxu0 0.0
    %525 = vmatpush1.msra.mxu0 0.0
    %526 = vmatprep.subr.mxu0 0.0
    %527 = vmatpush1.msra.mxu0 0.0
    %528 = vmatprep.subr.mxu0 0.0
    %529 = vmatpush1.msra.mxu0 0.0
    %530 = vmatprep.subr.mxu0 0.0
    %531 = vmatpush1.msra.mxu0 0.0
    %532 = vmatprep.subr.mxu0 0.0
    %533 = vmatpush1.msra.mxu0 0.0
    %534 = vmatprep.subr.mxu0 0.0
    %535 = vmatpush1.msra.mxu0 0.0
    %536 = vmatprep.subr.mxu0 0.0
    %537 = vmatpush1.msra.mxu0 0.0
    %538 = vmatprep.mubr.f32.mxu0 0.0
    %539 = vmatmul.mubr.f32.gmra.mrb[0].mxu0 %v472
    %v540 = vpop.f32.mrb[0].mxu0
    %v541 = vadd.f32 %v464, %v540
    %v542 = vpop.f32.mrb[0].mxu0
    %v543 = vadd.f32 %v468, %v542
    %544 = vdwg.mxu0
    %v547 = vcombine.low %v541, %v543
    %v549 = vunpack.c.l.s4 1983009808
    %v550 = vunpack.c.0.s8 %v549
    %v551 = vlaneseq
    %v552 = vshrl.u32 %v551, 7
    %v553 = vsub.s32 %v550, %v552
    %v554 = vrot.slane %v547, %v553
    %556 = vst [vmem:[#allocation2] sm:$0xf] %v554
    %s557 = scalar_lea.vmem [#allocation2], 4
    %v558 = vld [vmem:[%s557] sm:$0xf]
    %559 = vmatprep.subr.mxu0 %v312
    %560 = vmatpush1.msra.mxu0 %v311
    %561 = vmatprep.subr.mxu0 %v314
    %562 = vmatpush1.msra.mxu0 %v313
    %563 = vmatprep.subr.mxu0 %v316
    %564 = vmatpush1.msra.mxu0 %v315
    %565 = vmatprep.subr.mxu0 %v318
    %566 = vmatpush1.msra.mxu0 %v317
    %567 = vmatprep.subr.mxu0 %v320
    %568 = vmatpush1.msra.mxu0 %v319
    %569 = vmatprep.subr.mxu0 %v322
    %570 = vmatpush1.msra.mxu0 %v321
    %571 = vmatprep.subr.mxu0 %v324
    %572 = vmatpush1.msra.mxu0 %v323
    %573 = vmatprep.subr.mxu0 %v326
    %574 = vmatpush1.msra.mxu0 %v325
    %575 = vmatprep.subr.mxu0 0.0
    %576 = vmatpush1.msra.mxu0 0.0
    %577 = vmatprep.subr.mxu0 0.0
    %578 = vmatpush1.msra.mxu0 0.0
    %579 = vmatprep.subr.mxu0 0.0
    %580 = vmatpush1.msra.mxu0 0.0
    %581 = vmatprep.subr.mxu0 0.0
    %582 = vmatpush1.msra.mxu0 0.0
    %583 = vmatprep.subr.mxu0 0.0
    %584 = vmatpush1.msra.mxu0 0.0
    %585 = vmatprep.subr.mxu0 0.0
    %586 = vmatpush1.msra.mxu0 0.0
    %587 = vmatprep.subr.mxu0 0.0
    %588 = vmatpush1.msra.mxu0 0.0
    %589 = vmatprep.subr.mxu0 0.0
    %590 = vmatpush1.msra.mxu0 0.0
    %591 = vmatprep.subr.mxu0 0.0
    %592 = vmatpush1.msra.mxu0 0.0
    %593 = vmatprep.subr.mxu0 0.0
    %594 = vmatpush1.msra.mxu0 0.0
    %595 = vmatprep.subr.mxu0 0.0
    %596 = vmatpush1.msra.mxu0 0.0
    %597 = vmatprep.subr.mxu0 0.0
    %598 = vmatpush1.msra.mxu0 0.0
    %599 = vmatprep.subr.mxu0 0.0
    %600 = vmatpush1.msra.mxu0 0.0
    %601 = vmatprep.subr.mxu0 0.0
    %602 = vmatpush1.msra.mxu0 0.0
    %603 = vmatprep.subr.mxu0 0.0
    %604 = vmatpush1.msra.mxu0 0.0
    %605 = vmatprep.subr.mxu0 0.0
    %606 = vmatpush1.msra.mxu0 0.0
    %607 = vmatprep.subr.mxu0 0.0
    %608 = vmatpush1.msra.mxu0 0.0
    %609 = vmatprep.subr.mxu0 0.0
    %610 = vmatpush1.msra.mxu0 0.0
    %611 = vmatprep.subr.mxu0 0.0
    %612 = vmatpush1.msra.mxu0 0.0
    %613 = vmatprep.subr.mxu0 0.0
    %614 = vmatpush1.msra.mxu0 0.0
    %615 = vmatprep.subr.mxu0 0.0
    %616 = vmatpush1.msra.mxu0 0.0
    %617 = vmatprep.subr.mxu0 0.0
    %618 = vmatpush1.msra.mxu0 0.0
    %619 = vmatprep.subr.mxu0 0.0
    %620 = vmatpush1.msra.mxu0 0.0
    %621 = vmatprep.subr.mxu0 0.0
    %622 = vmatpush1.msra.mxu0 0.0
    %623 = vmatprep.mubr.f32.mxu0 0.0
    %624 = vmatmul.mubr.f32.gmra.mrb[0].mxu0 %v472
    %v625 = vpop.f32.mrb[0].mxu0
    %v626 = vadd.f32 0.0, %v625
    %v627 = vpop.f32.mrb[0].mxu0
    %v628 = vadd.f32 0.0, %v627
    %629 = vdwg.mxu0
    %v632 = vcombine.low %v626, %v628
    %v634 = vunpack.c.l.s4 1983009808
    %v635 = vunpack.c.0.s8 %v634
    %v636 = vlaneseq
    %v637 = vshrl.u32 %v636, 7
    %v638 = vsub.s32 %v635, %v637
    %v639 = vrot.slane %v632, %v638
    %v641 = vadd.f32 %v558, %v639
    %v642 = vxor.u32 %v641, 2147483648
    %v643 = vmul.f32 %v642, 1.442695
    %v644 = vpow.pop %v643
    %v645 = vadd.f32 %v644, 1.0
    %v646 = vrcp.pop %v645
    %v647 = vmul.f32 1.0, %v646
    %649 = vrot.lane.b32.xlu0 %v641, 64
    %v650 = vpop.permute.xlu0 %649
    %v651 = vrot.slane %v650, 2
    %v653 = vtanh.pop %v651
    %v654 = vmul.f32 %v647, %v450
    %v655 = vmul.f32 %v647, %v653
    %657 = vrot.lane.b32.xlu0 %v655, 64
    %v658 = vpop.permute.xlu0 %657
    %v660 = vadd.f32 %v654, %v658
    %v661 = vtanh.pop %v660
    %v663 = vrot.slane %v647, 2
    %666 = vrot.lane.b32.xlu0 %v661, 64
    %v667 = vpop.permute.xlu0 %666
    %v669 = vmul.f32 %v663, %v667
    %v671 = vsel %vm345, %v669, 0
    %673 = vmatprep.subr.mxu0 %v328
    %674 = vmatpush1.msra.mxu0 %v327
    %675 = vmatprep.subr.mxu0 %v330
    %676 = vmatpush1.msra.mxu0 %v329
    %677 = vmatprep.subr.mxu0 %v332
    %678 = vmatpush1.msra.mxu0 %v331
    %679 = vmatprep.subr.mxu0 %v334
    %680 = vmatpush1.msra.mxu0 %v333
    %681 = vmatprep.subr.mxu0 %v336
    %682 = vmatpush1.msra.mxu0 %v335
    %683 = vmatprep.subr.mxu0 %v338
    %684 = vmatpush1.msra.mxu0 %v337
    %685 = vmatprep.subr.mxu0 %v340
    %686 = vmatpush1.msra.mxu0 %v339
    %687 = vmatprep.subr.mxu0 %v342
    %688 = vmatpush1.msra.mxu0 %v341
    %689 = vmatprep.subr.mxu0 0.0
    %690 = vmatpush1.msra.mxu0 0.0
    %691 = vmatprep.subr.mxu0 0.0
    %692 = vmatpush1.msra.mxu0 0.0
    %693 = vmatprep.subr.mxu0 0.0
    %694 = vmatpush1.msra.mxu0 0.0
    %695 = vmatprep.subr.mxu0 0.0
    %696 = vmatpush1.msra.mxu0 0.0
    %697 = vmatprep.subr.mxu0 0.0
    %698 = vmatpush1.msra.mxu0 0.0
    %699 = vmatprep.subr.mxu0 0.0
    %700 = vmatpush1.msra.mxu0 0.0
    %701 = vmatprep.subr.mxu0 0.0
    %702 = vmatpush1.msra.mxu0 0.0
    %703 = vmatprep.subr.mxu0 0.0
    %704 = vmatpush1.msra.mxu0 0.0
    %705 = vmatprep.subr.mxu0 0.0
    %706 = vmatpush1.msra.mxu0 0.0
    %707 = vmatprep.subr.mxu0 0.0
    %708 = vmatpush1.msra.mxu0 0.0
    %709 = vmatprep.subr.mxu0 0.0
    %710 = vmatpush1.msra.mxu0 0.0
    %711 = vmatprep.subr.mxu0 0.0
    %712 = vmatpush1.msra.mxu0 0.0
    %713 = vmatprep.subr.mxu0 0.0
    %714 = vmatpush1.msra.mxu0 0.0
    %715 = vmatprep.subr.mxu0 0.0
    %716 = vmatpush1.msra.mxu0 0.0
    %717 = vmatprep.subr.mxu0 0.0
    %718 = vmatpush1.msra.mxu0 0.0
    %719 = vmatprep.subr.mxu0 0.0
    %720 = vmatpush1.msra.mxu0 0.0
    %721 = vmatprep.subr.mxu0 0.0
    %722 = vmatpush1.msra.mxu0 0.0
    %723 = vmatprep.subr.mxu0 0.0
    %724 = vmatpush1.msra.mxu0 0.0
    %725 = vmatprep.subr.mxu0 0.0
    %726 = vmatpush1.msra.mxu0 0.0
    %727 = vmatprep.subr.mxu0 0.0
    %728 = vmatpush1.msra.mxu0 0.0
    %729 = vmatprep.subr.mxu0 0.0
    %730 = vmatpush1.msra.mxu0 0.0
    %731 = vmatprep.subr.mxu0 0.0
    %732 = vmatpush1.msra.mxu0 0.0
    %733 = vmatprep.subr.mxu0 0.0
    %734 = vmatpush1.msra.mxu0 0.0
    %735 = vmatprep.subr.mxu0 0.0
    %736 = vmatpush1.msra.mxu0 0.0
    %737 = vmatprep.mubr.f32.mxu0 0.0
    %738 = vmatmul.mubr.f32.gmra.mrb[0].mxu0 %v671
    %v739 = vpop.f32.mrb[0].mxu0
    %v740 = vadd.f32 %v464, %v739
    %v741 = vpop.f32.mrb[0].mxu0
    %v742 = vadd.f32 %v468, %v741
    %743 = vdwg.mxu0
    %v746 = vcombine.low %v740, %v742
    %v748 = vunpack.c.l.s4 1983009808
    %v749 = vunpack.c.0.s8 %v748
    %v750 = vlaneseq
    %v751 = vshrl.u32 %v750, 7
    %v752 = vsub.s32 %v749, %v751
    %v753 = vrot.slane %v746, %v752
    %755 = vst [vmem:[%s557] sm:$0xf] %v753
    %s756 = scalar_lea.vmem [#allocation2], 8
    %v757 = vld [vmem:[%s756] sm:$0xf]
    %758 = vmatprep.subr.mxu0 %v312
    %759 = vmatpush1.msra.mxu0 %v311
    %760 = vmatprep.subr.mxu0 %v314
    %761 = vmatpush1.msra.mxu0 %v313
    %762 = vmatprep.subr.mxu0 %v316
    %763 = vmatpush1.msra.mxu0 %v315
    %764 = vmatprep.subr.mxu0 %v318
    %765 = vmatpush1.msra.mxu0 %v317
    %766 = vmatprep.subr.mxu0 %v320
    %767 = vmatpush1.msra.mxu0 %v319
    %768 = vmatprep.subr.mxu0 %v322
    %769 = vmatpush1.msra.mxu0 %v321
    %770 = vmatprep.subr.mxu0 %v324
    %771 = vmatpush1.msra.mxu0 %v323
    %772 = vmatprep.subr.mxu0 %v326
    %773 = vmatpush1.msra.mxu0 %v325
    %774 = vmatprep.subr.mxu0 0.0
    %775 = vmatpush1.msra.mxu0 0.0
    %776 = vmatprep.subr.mxu0 0.0
    %777 = vmatpush1.msra.mxu0 0.0
    %778 = vmatprep.subr.mxu0 0.0
    %779 = vmatpush1.msra.mxu0 0.0
    %780 = vmatprep.subr.mxu0 0.0
    %781 = vmatpush1.msra.mxu0 0.0
    %782 = vmatprep.subr.mxu0 0.0
    %783 = vmatpush1.msra.mxu0 0.0
    %784 = vmatprep.subr.mxu0 0.0
    %785 = vmatpush1.msra.mxu0 0.0
    %786 = vmatprep.subr.mxu0 0.0
    %787 = vmatpush1.msra.mxu0 0.0
    %788 = vmatprep.subr.mxu0 0.0
    %789 = vmatpush1.msra.mxu0 0.0
    %790 = vmatprep.subr.mxu0 0.0
    %791 = vmatpush1.msra.mxu0 0.0
    %792 = vmatprep.subr.mxu0 0.0
    %793 = vmatpush1.msra.mxu0 0.0
    %794 = vmatprep.subr.mxu0 0.0
    %795 = vmatpush1.msra.mxu0 0.0
    %796 = vmatprep.subr.mxu0 0.0
    %797 = vmatpush1.msra.mxu0 0.0
    %798 = vmatprep.subr.mxu0 0.0
    %799 = vmatpush1.msra.mxu0 0.0
    %800 = vmatprep.subr.mxu0 0.0
    %801 = vmatpush1.msra.mxu0 0.0
    %802 = vmatprep.subr.mxu0 0.0
    %803 = vmatpush1.msra.mxu0 0.0
    %804 = vmatprep.subr.mxu0 0.0
    %805 = vmatpush1.msra.mxu0 0.0
    %806 = vmatprep.subr.mxu0 0.0
    %807 = vmatpush1.msra.mxu0 0.0
    %808 = vmatprep.subr.mxu0 0.0
    %809 = vmatpush1.msra.mxu0 0.0
    %810 = vmatprep.subr.mxu0 0.0
    %811 = vmatpush1.msra.mxu0 0.0
    %812 = vmatprep.subr.mxu0 0.0
    %813 = vmatpush1.msra.mxu0 0.0
    %814 = vmatprep.subr.mxu0 0.0
    %815 = vmatpush1.msra.mxu0 0.0
    %816 = vmatprep.subr.mxu0 0.0
    %817 = vmatpush1.msra.mxu0 0.0
    %818 = vmatprep.subr.mxu0 0.0
    %819 = vmatpush1.msra.mxu0 0.0
    %820 = vmatprep.subr.mxu0 0.0
    %821 = vmatpush1.msra.mxu0 0.0
    %822 = vmatprep.mubr.f32.mxu0 0.0
    %823 = vmatmul.mubr.f32.gmra.mrb[0].mxu0 %v671
    %v824 = vpop.f32.mrb[0].mxu0
    %v825 = vadd.f32 0.0, %v824
    %v826 = vpop.f32.mrb[0].mxu0
    %v827 = vadd.f32 0.0, %v826
    %828 = vdwg.mxu0
    %v831 = vcombine.low %v825, %v827
    %v833 = vunpack.c.l.s4 1983009808
    %v834 = vunpack.c.0.s8 %v833
    %v835 = vlaneseq
    %v836 = vshrl.u32 %v835, 7
    %v837 = vsub.s32 %v834, %v836
    %v838 = vrot.slane %v831, %v837
    %v840 = vadd.f32 %v757, %v838
    %v841 = vxor.u32 %v840, 2147483648
    %v842 = vmul.f32 %v841, 1.442695
    %v843 = vpow.pop %v842
    %v844 = vadd.f32 %v843, 1.0
    %v845 = vrcp.pop %v844
    %v846 = vmul.f32 1.0, %v845
    %848 = vrot.lane.b32.xlu0 %v840, 64
    %v849 = vpop.permute.xlu0 %848
    %v850 = vrot.slane %v849, 2
    %v852 = vtanh.pop %v850
    %v853 = vmul.f32 %v846, %v660
    %v854 = vmul.f32 %v846, %v852
    %856 = vrot.lane.b32.xlu0 %v854, 64
    %v857 = vpop.permute.xlu0 %856
    %v859 = vadd.f32 %v853, %v857
    %v860 = vtanh.pop %v859
    %v862 = vrot.slane %v846, 2
    %865 = vrot.lane.b32.xlu0 %v860, 64
    %v866 = vpop.permute.xlu0 %865
    %v868 = vmul.f32 %v862, %v866
    %v870 = vsel %vm345, %v868, 0
    %872 = vmatprep.subr.mxu0 %v328
    %873 = vmatpush1.msra.mxu0 %v327
    %874 = vmatprep.subr.mxu0 %v330
    %875 = vmatpush1.msra.mxu0 %v329
    %876 = vmatprep.subr.mxu0 %v332
    %877 = vmatpush1.msra.mxu0 %v331
    %878 = vmatprep.subr.mxu0 %v334
    %879 = vmatpush1.msra.mxu0 %v333
    %880 = vmatprep.subr.mxu0 %v336
    %881 = vmatpush1.msra.mxu0 %v335
    %882 = vmatprep.subr.mxu0 %v338
    %883 = vmatpush1.msra.mxu0 %v337
    %884 = vmatprep.subr.mxu0 %v340
    %885 = vmatpush1.msra.mxu0 %v339
    %886 = vmatprep.subr.mxu0 %v342
    %887 = vmatpush1.msra.mxu0 %v341
    %888 = vmatprep.subr.mxu0 0.0
    %889 = vmatpush1.msra.mxu0 0.0
    %890 = vmatprep.subr.mxu0 0.0
    %891 = vmatpush1.msra.mxu0 0.0
    %892 = vmatprep.subr.mxu0 0.0
    %893 = vmatpush1.msra.mxu0 0.0
    %894 = vmatprep.subr.mxu0 0.0
    %895 = vmatpush1.msra.mxu0 0.0
    %896 = vmatprep.subr.mxu0 0.0
    %897 = vmatpush1.msra.mxu0 0.0
    %898 = vmatprep.subr.mxu0 0.0
    %899 = vmatpush1.msra.mxu0 0.0
    %900 = vmatprep.subr.mxu0 0.0
    %901 = vmatpush1.msra.mxu0 0.0
    %902 = vmatprep.subr.mxu0 0.0
    %903 = vmatpush1.msra.mxu0 0.0
    %904 = vmatprep.subr.mxu0 0.0
    %905 = vmatpush1.msra.mxu0 0.0
    %906 = vmatprep.subr.mxu0 0.0
    %907 = vmatpush1.msra.mxu0 0.0
    %908 = vmatprep.subr.mxu0 0.0
    %909 = vmatpush1.msra.mxu0 0.0
    %910 = vmatprep.subr.mxu0 0.0
    %911 = vmatpush1.msra.mxu0 0.0
    %912 = vmatprep.subr.mxu0 0.0
    %913 = vmatpush1.msra.mxu0 0.0
    %914 = vmatprep.subr.mxu0 0.0
    %915 = vmatpush1.msra.mxu0 0.0
    %916 = vmatprep.subr.mxu0 0.0
    %917 = vmatpush1.msra.mxu0 0.0
    %918 = vmatprep.subr.mxu0 0.0
    %919 = vmatpush1.msra.mxu0 0.0
    %920 = vmatprep.subr.mxu0 0.0
    %921 = vmatpush1.msra.mxu0 0.0
    %922 = vmatprep.subr.mxu0 0.0
    %923 = vmatpush1.msra.mxu0 0.0
    %924 = vmatprep.subr.mxu0 0.0
    %925 = vmatpush1.msra.mxu0 0.0
    %926 = vmatprep.subr.mxu0 0.0
    %927 = vmatpush1.msra.mxu0 0.0
    %928 = vmatprep.subr.mxu0 0.0
    %929 = vmatpush1.msra.mxu0 0.0
    %930 = vmatprep.subr.mxu0 0.0
    %931 = vmatpush1.msra.mxu0 0.0
    %932 = vmatprep.subr.mxu0 0.0
    %933 = vmatpush1.msra.mxu0 0.0
    %934 = vmatprep.subr.mxu0 0.0
    %935 = vmatpush1.msra.mxu0 0.0
    %936 = vmatprep.mubr.f32.mxu0 0.0
    %937 = vmatmul.mubr.f32.gmra.mrb[0].mxu0 %v870
    %v938 = vpop.f32.mrb[0].mxu0
    %v939 = vadd.f32 %v464, %v938
    %v940 = vpop.f32.mrb[0].mxu0
    %v941 = vadd.f32 %v468, %v940
    %942 = vdwg.mxu0
    %v945 = vcombine.low %v939, %v941
    %v947 = vunpack.c.l.s4 1983009808
    %v948 = vunpack.c.0.s8 %v947
    %v949 = vlaneseq
    %v950 = vshrl.u32 %v949, 7
    %v951 = vsub.s32 %v948, %v950
    %v952 = vrot.slane %v945, %v951
    %954 = vst [vmem:[%s756] sm:$0xf] %v952
    %s955 = scalar_lea.vmem [#allocation2], 12
    %v956 = vld [vmem:[%s955] sm:$0xf]
    %957 = vmatprep.subr.mxu0 %v312
    %958 = vmatpush1.msra.mxu0 %v311
    %959 = vmatprep.subr.mxu0 %v314
    %960 = vmatpush1.msra.mxu0 %v313
    %961 = vmatprep.subr.mxu0 %v316
    %962 = vmatpush1.msra.mxu0 %v315
    %963 = vmatprep.subr.mxu0 %v318
    %964 = vmatpush1.msra.mxu0 %v317
    %965 = vmatprep.subr.mxu0 %v320
    %966 = vmatpush1.msra.mxu0 %v319
    %967 = vmatprep.subr.mxu0 %v322
    %968 = vmatpush1.msra.mxu0 %v321
    %969 = vmatprep.subr.mxu0 %v324
    %970 = vmatpush1.msra.mxu0 %v323
    %971 = vmatprep.subr.mxu0 %v326
    %972 = vmatpush1.msra.mxu0 %v325
    %973 = vmatprep.subr.mxu0 0.0
    %974 = vmatpush1.msra.mxu0 0.0
    %975 = vmatprep.subr.mxu0 0.0
    %976 = vmatpush1.msra.mxu0 0.0
    %977 = vmatprep.subr.mxu0 0.0
    %978 = vmatpush1.msra.mxu0 0.0
    %979 = vmatprep.subr.mxu0 0.0
    %980 = vmatpush1.msra.mxu0 0.0
    %981 = vmatprep.subr.mxu0 0.0
    %982 = vmatpush1.msra.mxu0 0.0
    %983 = vmatprep.subr.mxu0 0.0
    %984 = vmatpush1.msra.mxu0 0.0
    %985 = vmatprep.subr.mxu0 0.0
    %986 = vmatpush1.msra.mxu0 0.0
    %987 = vmatprep.subr.mxu0 0.0
    %988 = vmatpush1.msra.mxu0 0.0
    %989 = vmatprep.subr.mxu0 0.0
    %990 = vmatpush1.msra.mxu0 0.0
    %991 = vmatprep.subr.mxu0 0.0
    %992 = vmatpush1.msra.mxu0 0.0
    %993 = vmatprep.subr.mxu0 0.0
    %994 = vmatpush1.msra.mxu0 0.0
    %995 = vmatprep.subr.mxu0 0.0
    %996 = vmatpush1.msra.mxu0 0.0
    %997 = vmatprep.subr.mxu0 0.0
    %998 = vmatpush1.msra.mxu0 0.0
    %999 = vmatprep.subr.mxu0 0.0
    %1000 = vmatpush1.msra.mxu0 0.0
    %1001 = vmatprep.subr.mxu0 0.0
    %1002 = vmatpush1.msra.mxu0 0.0
    %1003 = vmatprep.subr.mxu0 0.0
    %1004 = vmatpush1.msra.mxu0 0.0
    %1005 = vmatprep.subr.mxu0 0.0
    %1006 = vmatpush1.msra.mxu0 0.0
    %1007 = vmatprep.subr.mxu0 0.0
    %1008 = vmatpush1.msra.mxu0 0.0
    %1009 = vmatprep.subr.mxu0 0.0
    %1010 = vmatpush1.msra.mxu0 0.0
    %1011 = vmatprep.subr.mxu0 0.0
    %1012 = vmatpush1.msra.mxu0 0.0
    %1013 = vmatprep.subr.mxu0 0.0
    %1014 = vmatpush1.msra.mxu0 0.0
    %1015 = vmatprep.subr.mxu0 0.0
    %1016 = vmatpush1.msra.mxu0 0.0
    %1017 = vmatprep.subr.mxu0 0.0
    %1018 = vmatpush1.msra.mxu0 0.0
    %1019 = vmatprep.subr.mxu0 0.0
    %1020 = vmatpush1.msra.mxu0 0.0
    %1021 = vmatprep.mubr.f32.mxu0 0.0
    %1022 = vmatmul.mubr.f32.gmra.mrb[0].mxu0 %v870
    %v1023 = vpop.f32.mrb[0].mxu0
    %v1024 = vadd.f32 0.0, %v1023
    %v1025 = vpop.f32.mrb[0].mxu0
    %v1026 = vadd.f32 0.0, %v1025
    %1027 = vdwg.mxu0
    %v1030 = vcombine.low %v1024, %v1026
    %v1032 = vunpack.c.l.s4 1983009808
    %v1033 = vunpack.c.0.s8 %v1032
    %v1034 = vlaneseq
    %v1035 = vshrl.u32 %v1034, 7
    %v1036 = vsub.s32 %v1033, %v1035
    %v1037 = vrot.slane %v1030, %v1036
    %v1039 = vadd.f32 %v956, %v1037
    %v1040 = vxor.u32 %v1039, 2147483648
    %v1041 = vmul.f32 %v1040, 1.442695
    %v1042 = vpow.pop %v1041
    %v1043 = vadd.f32 %v1042, 1.0
    %v1044 = vrcp.pop %v1043
    %v1045 = vmul.f32 1.0, %v1044
    %1047 = vrot.lane.b32.xlu0 %v1039, 64
    %v1048 = vpop.permute.xlu0 %1047
    %v1049 = vrot.slane %v1048, 2
    %v1051 = vtanh.pop %v1049
    %v1052 = vmul.f32 %v1045, %v859
    %v1053 = vmul.f32 %v1045, %v1051
    %1055 = vrot.lane.b32.xlu0 %v1053, 64
    %v1056 = vpop.permute.xlu0 %1055
    %v1058 = vadd.f32 %v1052, %v1056
    %v1059 = vtanh.pop %v1058
    %v1061 = vrot.slane %v1045, 2
    %1064 = vrot.lane.b32.xlu0 %v1059, 64
    %v1065 = vpop.permute.xlu0 %1064
    %v1067 = vmul.f32 %v1061, %v1065
    %v1069 = vsel %vm345, %v1067, 0
    %1071 = vmatprep.subr.mxu0 %v328
    %1072 = vmatpush1.msra.mxu0 %v327
    %1073 = vmatprep.subr.mxu0 %v330
    %1074 = vmatpush1.msra.mxu0 %v329
    %1075 = vmatprep.subr.mxu0 %v332
    %1076 = vmatpush1.msra.mxu0 %v331
    %1077 = vmatprep.subr.mxu0 %v334
    %1078 = vmatpush1.msra.mxu0 %v333
    %1079 = vmatprep.subr.mxu0 %v336
    %1080 = vmatpush1.msra.mxu0 %v335
    %1081 = vmatprep.subr.mxu0 %v338
    %1082 = vmatpush1.msra.mxu0 %v337
    %1083 = vmatprep.subr.mxu0 %v340
    %1084 = vmatpush1.msra.mxu0 %v339
    %1085 = vmatprep.subr.mxu0 %v342
    %1086 = vmatpush1.msra.mxu0 %v341
    %1087 = vmatprep.subr.mxu0 0.0
    %1088 = vmatpush1.msra.mxu0 0.0
    %1089 = vmatprep.subr.mxu0 0.0
    %1090 = vmatpush1.msra.mxu0 0.0
    %1091 = vmatprep.subr.mxu0 0.0
    %1092 = vmatpush1.msra.mxu0 0.0
    %1093 = vmatprep.subr.mxu0 0.0
    %1094 = vmatpush1.msra.mxu0 0.0
    %1095 = vmatprep.subr.mxu0 0.0
    %1096 = vmatpush1.msra.mxu0 0.0
    %1097 = vmatprep.subr.mxu0 0.0
    %1098 = vmatpush1.msra.mxu0 0.0
    %1099 = vmatprep.subr.mxu0 0.0
    %1100 = vmatpush1.msra.mxu0 0.0
    %1101 = vmatprep.subr.mxu0 0.0
    %1102 = vmatpush1.msra.mxu0 0.0
    %1103 = vmatprep.subr.mxu0 0.0
    %1104 = vmatpush1.msra.mxu0 0.0
    %1105 = vmatprep.subr.mxu0 0.0
    %1106 = vmatpush1.msra.mxu0 0.0
    %1107 = vmatprep.subr.mxu0 0.0
    %1108 = vmatpush1.msra.mxu0 0.0
    %1109 = vmatprep.subr.mxu0 0.0
    %1110 = vmatpush1.msra.mxu0 0.0
    %1111 = vmatprep.subr.mxu0 0.0
    %1112 = vmatpush1.msra.mxu0 0.0
    %1113 = vmatprep.subr.mxu0 0.0
    %1114 = vmatpush1.msra.mxu0 0.0
    %1115 = vmatprep.subr.mxu0 0.0
    %1116 = vmatpush1.msra.mxu0 0.0
    %1117 = vmatprep.subr.mxu0 0.0
    %1118 = vmatpush1.msra.mxu0 0.0
    %1119 = vmatprep.subr.mxu0 0.0
    %1120 = vmatpush1.msra.mxu0 0.0
    %1121 = vmatprep.subr.mxu0 0.0
    %1122 = vmatpush1.msra.mxu0 0.0
    %1123 = vmatprep.subr.mxu0 0.0
    %1124 = vmatpush1.msra.mxu0 0.0
    %1125 = vmatprep.subr.mxu0 0.0
    %1126 = vmatpush1.msra.mxu0 0.0
    %1127 = vmatprep.subr.mxu0 0.0
    %1128 = vmatpush1.msra.mxu0 0.0
    %1129 = vmatprep.subr.mxu0 0.0
    %1130 = vmatpush1.msra.mxu0 0.0
    %1131 = vmatprep.subr.mxu0 0.0
    %1132 = vmatpush1.msra.mxu0 0.0
    %1133 = vmatprep.subr.mxu0 0.0
    %1134 = vmatpush1.msra.mxu0 0.0
    %1135 = vmatprep.mubr.f32.mxu0 0.0
    %1136 = vmatmul.mubr.f32.gmra.mrb[0].mxu0 %v1069
    %v1137 = vpop.f32.mrb[0].mxu0
    %v1138 = vadd.f32 %v464, %v1137
    %v1139 = vpop.f32.mrb[0].mxu0
    %v1140 = vadd.f32 %v468, %v1139
    %1141 = vdwg.mxu0
    %v1144 = vcombine.low %v1138, %v1140
    %v1146 = vunpack.c.l.s4 1983009808
    %v1147 = vunpack.c.0.s8 %v1146
    %v1148 = vlaneseq
    %v1149 = vshrl.u32 %v1148, 7
    %v1150 = vsub.s32 %v1147, %v1149
    %v1151 = vrot.slane %v1144, %v1150
    %1153 = vst [vmem:[%s955] sm:$0xf] %v1151
    %s1154 = scalar_lea.vmem [#allocation2], 16
    %v1155 = vld [vmem:[%s1154] sm:$0xf]
    %1156 = vmatprep.subr.mxu0 %v312
    %1157 = vmatpush1.msra.mxu0 %v311
    %1158 = vmatprep.subr.mxu0 %v314
    %1159 = vmatpush1.msra.mxu0 %v313
    %1160 = vmatprep.subr.mxu0 %v316
    %1161 = vmatpush1.msra.mxu0 %v315
    %1162 = vmatprep.subr.mxu0 %v318
    %1163 = vmatpush1.msra.mxu0 %v317
    %1164 = vmatprep.subr.mxu0 %v320
    %1165 = vmatpush1.msra.mxu0 %v319
    %1166 = vmatprep.subr.mxu0 %v322
    %1167 = vmatpush1.msra.mxu0 %v321
    %1168 = vmatprep.subr.mxu0 %v324
    %1169 = vmatpush1.msra.mxu0 %v323
    %1170 = vmatprep.subr.mxu0 %v326
    %1171 = vmatpush1.msra.mxu0 %v325
    %1172 = vmatprep.subr.mxu0 0.0
    %1173 = vmatpush1.msra.mxu0 0.0
    %1174 = vmatprep.subr.mxu0 0.0
    %1175 = vmatpush1.msra.mxu0 0.0
    %1176 = vmatprep.subr.mxu0 0.0
    %1177 = vmatpush1.msra.mxu0 0.0
    %1178 = vmatprep.subr.mxu0 0.0
    %1179 = vmatpush1.msra.mxu0 0.0
    %1180 = vmatprep.subr.mxu0 0.0
    %1181 = vmatpush1.msra.mxu0 0.0
    %1182 = vmatprep.subr.mxu0 0.0
    %1183 = vmatpush1.msra.mxu0 0.0
    %1184 = vmatprep.subr.mxu0 0.0
    %1185 = vmatpush1.msra.mxu0 0.0
    %1186 = vmatprep.subr.mxu0 0.0
    %1187 = vmatpush1.msra.mxu0 0.0
    %1188 = vmatprep.subr.mxu0 0.0
    %1189 = vmatpush1.msra.mxu0 0.0
    %1190 = vmatprep.subr.mxu0 0.0
    %1191 = vmatpush1.msra.mxu0 0.0
    %1192 = vmatprep.subr.mxu0 0.0
    %1193 = vmatpush1.msra.mxu0 0.0
    %1194 = vmatprep.subr.mxu0 0.0
    %1195 = vmatpush1.msra.mxu0 0.0
    %1196 = vmatprep.subr.mxu0 0.0
    %1197 = vmatpush1.msra.mxu0 0.0
    %1198 = vmatprep.subr.mxu0 0.0
    %1199 = vmatpush1.msra.mxu0 0.0
    %1200 = vmatprep.subr.mxu0 0.0
    %1201 = vmatpush1.msra.mxu0 0.0
    %1202 = vmatprep.subr.mxu0 0.0
    %1203 = vmatpush1.msra.mxu0 0.0
    %1204 = vmatprep.subr.mxu0 0.0
    %1205 = vmatpush1.msra.mxu0 0.0
    %1206 = vmatprep.subr.mxu0 0.0
    %1207 = vmatpush1.msra.mxu0 0.0
    %1208 = vmatprep.subr.mxu0 0.0
    %1209 = vmatpush1.msra.mxu0 0.0
    %1210 = vmatprep.subr.mxu0 0.0
    %1211 = vmatpush1.msra.mxu0 0.0
    %1212 = vmatprep.subr.mxu0 0.0
    %1213 = vmatpush1.msra.mxu0 0.0
    %1214 = vmatprep.subr.mxu0 0.0
    %1215 = vmatpush1.msra.mxu0 0.0
    %1216 = vmatprep.subr.mxu0 0.0
    %1217 = vmatpush1.msra.mxu0 0.0
    %1218 = vmatprep.subr.mxu0 0.0
    %1219 = vmatpush1.msra.mxu0 0.0
    %1220 = vmatprep.mubr.f32.mxu0 0.0
    %1221 = vmatmul.mubr.f32.gmra.mrb[0].mxu0 %v1069
    %v1222 = vpop.f32.mrb[0].mxu0
    %v1223 = vadd.f32 0.0, %v1222
    %v1224 = vpop.f32.mrb[0].mxu0
    %v1225 = vadd.f32 0.0, %v1224
    %1226 = vdwg.mxu0
    %v1229 = vcombine.low %v1223, %v1225
    %v1231 = vunpack.c.l.s4 1983009808
    %v1232 = vunpack.c.0.s8 %v1231
    %v1233 = vlaneseq
    %v1234 = vshrl.u32 %v1233, 7
    %v1235 = vsub.s32 %v1232, %v1234
    %v1236 = vrot.slane %v1229, %v1235
    %v1238 = vadd.f32 %v1155, %v1236
    %v1239 = vxor.u32 %v1238, 2147483648
    %v1240 = vmul.f32 %v1239, 1.442695
    %v1241 = vpow.pop %v1240
    %v1242 = vadd.f32 %v1241, 1.0
    %v1243 = vrcp.pop %v1242
    %v1244 = vmul.f32 1.0, %v1243
    %1246 = vrot.lane.b32.xlu0 %v1238, 64
    %v1247 = vpop.permute.xlu0 %1246
    %v1248 = vrot.slane %v1247, 2
    %v1250 = vtanh.pop %v1248
    %v1251 = vmul.f32 %v1244, %v1058
    %v1252 = vmul.f32 %v1244, %v1250
    %1254 = vrot.lane.b32.xlu0 %v1252, 64
    %v1255 = vpop.permute.xlu0 %1254
    %v1257 = vadd.f32 %v1251, %v1255
    %v1258 = vtanh.pop %v1257
    %v1260 = vrot.slane %v1244, 2
    %1263 = vrot.lane.b32.xlu0 %v1258, 64
    %v1264 = vpop.permute.xlu0 %1263
    %v1266 = vmul.f32 %v1260, %v1264
    %v1268 = vsel %vm345, %v1266, 0
    %1270 = vmatprep.subr.mxu0 %v328
    %1271 = vmatpush1.msra.mxu0 %v327
    %1272 = vmatprep.subr.mxu0 %v330
    %1273 = vmatpush1.msra.mxu0 %v329
    %1274 = vmatprep.subr.mxu0 %v332
    %1275 = vmatpush1.msra.mxu0 %v331
    %1276 = vmatprep.subr.mxu0 %v334
    %1277 = vmatpush1.msra.mxu0 %v333
    %1278 = vmatprep.subr.mxu0 %v336
    %1279 = vmatpush1.msra.mxu0 %v335
    %1280 = vmatprep.subr.mxu0 %v338
    %1281 = vmatpush1.msra.mxu0 %v337
    %1282 = vmatprep.subr.mxu0 %v340
    %1283 = vmatpush1.msra.mxu0 %v339
    %1284 = vmatprep.subr.mxu0 %v342
    %1285 = vmatpush1.msra.mxu0 %v341
    %1286 = vmatprep.subr.mxu0 0.0
    %1287 = vmatpush1.msra.mxu0 0.0
    %1288 = vmatprep.subr.mxu0 0.0
    %1289 = vmatpush1.msra.mxu0 0.0
    %1290 = vmatprep.subr.mxu0 0.0
    %1291 = vmatpush1.msra.mxu0 0.0
    %1292 = vmatprep.subr.mxu0 0.0
    %1293 = vmatpush1.msra.mxu0 0.0
    %1294 = vmatprep.subr.mxu0 0.0
    %1295 = vmatpush1.msra.mxu0 0.0
    %1296 = vmatprep.subr.mxu0 0.0
    %1297 = vmatpush1.msra.mxu0 0.0
    %1298 = vmatprep.subr.mxu0 0.0
    %1299 = vmatpush1.msra.mxu0 0.0
    %1300 = vmatprep.subr.mxu0 0.0
    %1301 = vmatpush1.msra.mxu0 0.0
    %1302 = vmatprep.subr.mxu0 0.0
    %1303 = vmatpush1.msra.mxu0 0.0
    %1304 = vmatprep.subr.mxu0 0.0
    %1305 = vmatpush1.msra.mxu0 0.0
    %1306 = vmatprep.subr.mxu0 0.0
    %1307 = vmatpush1.msra.mxu0 0.0
    %1308 = vmatprep.subr.mxu0 0.0
    %1309 = vmatpush1.msra.mxu0 0.0
    %1310 = vmatprep.subr.mxu0 0.0
    %1311 = vmatpush1.msra.mxu0 0.0
    %1312 = vmatprep.subr.mxu0 0.0
    %1313 = vmatpush1.msra.mxu0 0.0
    %1314 = vmatprep.subr.mxu0 0.0
    %1315 = vmatpush1.msra.mxu0 0.0
    %1316 = vmatprep.subr.mxu0 0.0
    %1317 = vmatpush1.msra.mxu0 0.0
    %1318 = vmatprep.subr.mxu0 0.0
    %1319 = vmatpush1.msra.mxu0 0.0
    %1320 = vmatprep.subr.mxu0 0.0
    %1321 = vmatpush1.msra.mxu0 0.0
    %1322 = vmatprep.subr.mxu0 0.0
    %1323 = vmatpush1.msra.mxu0 0.0
    %1324 = vmatprep.subr.mxu0 0.0
    %1325 = vmatpush1.msra.mxu0 0.0
    %1326 = vmatprep.subr.mxu0 0.0
    %1327 = vmatpush1.msra.mxu0 0.0
    %1328 = vmatprep.subr.mxu0 0.0
    %1329 = vmatpush1.msra.mxu0 0.0
    %1330 = vmatprep.subr.mxu0 0.0
    %1331 = vmatpush1.msra.mxu0 0.0
    %1332 = vmatprep.subr.mxu0 0.0
    %1333 = vmatpush1.msra.mxu0 0.0
    %1334 = vmatprep.mubr.f32.mxu0 0.0
    %1335 = vmatmul.mubr.f32.gmra.mrb[0].mxu0 %v1268
    %v1336 = vpop.f32.mrb[0].mxu0
    %v1337 = vadd.f32 %v464, %v1336
    %v1338 = vpop.f32.mrb[0].mxu0
    %v1339 = vadd.f32 %v468, %v1338
    %1340 = vdwg.mxu0
    %v1343 = vcombine.low %v1337, %v1339
    %v1345 = vunpack.c.l.s4 1983009808
    %v1346 = vunpack.c.0.s8 %v1345
    %v1347 = vlaneseq
    %v1348 = vshrl.u32 %v1347, 7
    %v1349 = vsub.s32 %v1346, %v1348
    %v1350 = vrot.slane %v1343, %v1349
    %1352 = vst [vmem:[%s1154] sm:$0xf] %v1350
    %s1353 = scalar_lea.vmem [#allocation2], 20
    %v1354 = vld [vmem:[%s1353] sm:$0xf]
    %1355 = vmatprep.subr.mxu0 %v312
    %1356 = vmatpush1.msra.mxu0 %v311
    %1357 = vmatprep.subr.mxu0 %v314
    %1358 = vmatpush1.msra.mxu0 %v313
    %1359 = vmatprep.subr.mxu0 %v316
    %1360 = vmatpush1.msra.mxu0 %v315
    %1361 = vmatprep.subr.mxu0 %v318
    %1362 = vmatpush1.msra.mxu0 %v317
    %1363 = vmatprep.subr.mxu0 %v320
    %1364 = vmatpush1.msra.mxu0 %v319
    %1365 = vmatprep.subr.mxu0 %v322
    %1366 = vmatpush1.msra.mxu0 %v321
    %1367 = vmatprep.subr.mxu0 %v324
    %1368 = vmatpush1.msra.mxu0 %v323
    %1369 = vmatprep.subr.mxu0 %v326
    %1370 = vmatpush1.msra.mxu0 %v325
    %1371 = vmatprep.subr.mxu0 0.0
    %1372 = vmatpush1.msra.mxu0 0.0
    %1373 = vmatprep.subr.mxu0 0.0
    %1374 = vmatpush1.msra.mxu0 0.0
    %1375 = vmatprep.subr.mxu0 0.0
    %1376 = vmatpush1.msra.mxu0 0.0
    %1377 = vmatprep.subr.mxu0 0.0
    %1378 = vmatpush1.msra.mxu0 0.0
    %1379 = vmatprep.subr.mxu0 0.0
    %1380 = vmatpush1.msra.mxu0 0.0
    %1381 = vmatprep.subr.mxu0 0.0
    %1382 = vmatpush1.msra.mxu0 0.0
    %1383 = vmatprep.subr.mxu0 0.0
    %1384 = vmatpush1.msra.mxu0 0.0
    %1385 = vmatprep.subr.mxu0 0.0
    %1386 = vmatpush1.msra.mxu0 0.0
    %1387 = vmatprep.subr.mxu0 0.0
    %1388 = vmatpush1.msra.mxu0 0.0
    %1389 = vmatprep.subr.mxu0 0.0
    %1390 = vmatpush1.msra.mxu0 0.0
    %1391 = vmatprep.subr.mxu0 0.0
    %1392 = vmatpush1.msra.mxu0 0.0
    %1393 = vmatprep.subr.mxu0 0.0
    %1394 = vmatpush1.msra.mxu0 0.0
    %1395 = vmatprep.subr.mxu0 0.0
    %1396 = vmatpush1.msra.mxu0 0.0
    %1397 = vmatprep.subr.mxu0 0.0
    %1398 = vmatpush1.msra.mxu0 0.0
    %1399 = vmatprep.subr.mxu0 0.0
    %1400 = vmatpush1.msra.mxu0 0.0
    %1401 = vmatprep.subr.mxu0 0.0
    %1402 = vmatpush1.msra.mxu0 0.0
    %1403 = vmatprep.subr.mxu0 0.0
    %1404 = vmatpush1.msra.mxu0 0.0
    %1405 = vmatprep.subr.mxu0 0.0
    %1406 = vmatpush1.msra.mxu0 0.0
    %1407 = vmatprep.subr.mxu0 0.0
    %1408 = vmatpush1.msra.mxu0 0.0
    %1409 = vmatprep.subr.mxu0 0.0
    %1410 = vmatpush1.msra.mxu0 0.0
    %1411 = vmatprep.subr.mxu0 0.0
    %1412 = vmatpush1.msra.mxu0 0.0
    %1413 = vmatprep.subr.mxu0 0.0
    %1414 = vmatpush1.msra.mxu0 0.0
    %1415 = vmatprep.subr.mxu0 0.0
    %1416 = vmatpush1.msra.mxu0 0.0
    %1417 = vmatprep.subr.mxu0 0.0
    %1418 = vmatpush1.msra.mxu0 0.0
    %1419 = vmatprep.mubr.f32.mxu0 0.0
    %1420 = vmatmul.mubr.f32.gmra.mrb[0].mxu0 %v1268
    %v1421 = vpop.f32.mrb[0].mxu0
    %v1422 = vadd.f32 0.0, %v1421
    %v1423 = vpop.f32.mrb[0].mxu0
    %v1424 = vadd.f32 0.0, %v1423
    %1425 = vdwg.mxu0
    %v1428 = vcombine.low %v1422, %v1424
    %v1430 = vunpack.c.l.s4 1983009808
    %v1431 = vunpack.c.0.s8 %v1430
    %v1432 = vlaneseq
    %v1433 = vshrl.u32 %v1432, 7
    %v1434 = vsub.s32 %v1431, %v1433
    %v1435 = vrot.slane %v1428, %v1434
    %v1437 = vadd.f32 %v1354, %v1435
    %v1438 = vxor.u32 %v1437, 2147483648
    %v1439 = vmul.f32 %v1438, 1.442695
    %v1440 = vpow.pop %v1439
    %v1441 = vadd.f32 %v1440, 1.0
    %v1442 = vrcp.pop %v1441
    %v1443 = vmul.f32 1.0, %v1442
    %1445 = vrot.lane.b32.xlu0 %v1437, 64
    %v1446 = vpop.permute.xlu0 %1445
    %v1447 = vrot.slane %v1446, 2
    %v1449 = vtanh.pop %v1447
    %v1450 = vmul.f32 %v1443, %v1257
    %v1451 = vmul.f32 %v1443, %v1449
    %1453 = vrot.lane.b32.xlu0 %v1451, 64
    %v1454 = vpop.permute.xlu0 %1453
    %v1456 = vadd.f32 %v1450, %v1454
    %v1457 = vtanh.pop %v1456
    %v1459 = vrot.slane %v1443, 2
    %1462 = vrot.lane.b32.xlu0 %v1457, 64
    %v1463 = vpop.permute.xlu0 %1462
    %v1465 = vmul.f32 %v1459, %v1463
    %v1467 = vsel %vm345, %v1465, 0
    %1469 = vmatprep.subr.mxu0 %v328
    %1470 = vmatpush1.msra.mxu0 %v327
    %1471 = vmatprep.subr.mxu0 %v330
    %1472 = vmatpush1.msra.mxu0 %v329
    %1473 = vmatprep.subr.mxu0 %v332
    %1474 = vmatpush1.msra.mxu0 %v331
    %1475 = vmatprep.subr.mxu0 %v334
    %1476 = vmatpush1.msra.mxu0 %v333
    %1477 = vmatprep.subr.mxu0 %v336
    %1478 = vmatpush1.msra.mxu0 %v335
    %1479 = vmatprep.subr.mxu0 %v338
    %1480 = vmatpush1.msra.mxu0 %v337
    %1481 = vmatprep.subr.mxu0 %v340
    %1482 = vmatpush1.msra.mxu0 %v339
    %1483 = vmatprep.subr.mxu0 %v342
    %1484 = vmatpush1.msra.mxu0 %v341
    %1485 = vmatprep.subr.mxu0 0.0
    %1486 = vmatpush1.msra.mxu0 0.0
    %1487 = vmatprep.subr.mxu0 0.0
    %1488 = vmatpush1.msra.mxu0 0.0
    %1489 = vmatprep.subr.mxu0 0.0
    %1490 = vmatpush1.msra.mxu0 0.0
    %1491 = vmatprep.subr.mxu0 0.0
    %1492 = vmatpush1.msra.mxu0 0.0
    %1493 = vmatprep.subr.mxu0 0.0
    %1494 = vmatpush1.msra.mxu0 0.0
    %1495 = vmatprep.subr.mxu0 0.0
    %1496 = vmatpush1.msra.mxu0 0.0
    %1497 = vmatprep.subr.mxu0 0.0
    %1498 = vmatpush1.msra.mxu0 0.0
    %1499 = vmatprep.subr.mxu0 0.0
    %1500 = vmatpush1.msra.mxu0 0.0
    %1501 = vmatprep.subr.mxu0 0.0
    %1502 = vmatpush1.msra.mxu0 0.0
    %1503 = vmatprep.subr.mxu0 0.0
    %1504 = vmatpush1.msra.mxu0 0.0
    %1505 = vmatprep.subr.mxu0 0.0
    %1506 = vmatpush1.msra.mxu0 0.0
    %1507 = vmatprep.subr.mxu0 0.0
    %1508 = vmatpush1.msra.mxu0 0.0
    %1509 = vmatprep.subr.mxu0 0.0
    %1510 = vmatpush1.msra.mxu0 0.0
    %1511 = vmatprep.subr.mxu0 0.0
    %1512 = vmatpush1.msra.mxu0 0.0
    %1513 = vmatprep.subr.mxu0 0.0
    %1514 = vmatpush1.msra.mxu0 0.0
    %1515 = vmatprep.subr.mxu0 0.0
    %1516 = vmatpush1.msra.mxu0 0.0
    %1517 = vmatprep.subr.mxu0 0.0
    %1518 = vmatpush1.msra.mxu0 0.0
    %1519 = vmatprep.subr.mxu0 0.0
    %1520 = vmatpush1.msra.mxu0 0.0
    %1521 = vmatprep.subr.mxu0 0.0
    %1522 = vmatpush1.msra.mxu0 0.0
    %1523 = vmatprep.subr.mxu0 0.0
    %1524 = vmatpush1.msra.mxu0 0.0
    %1525 = vmatprep.subr.mxu0 0.0
    %1526 = vmatpush1.msra.mxu0 0.0
    %1527 = vmatprep.subr.mxu0 0.0
    %1528 = vmatpush1.msra.mxu0 0.0
    %1529 = vmatprep.subr.mxu0 0.0
    %1530 = vmatpush1.msra.mxu0 0.0
    %1531 = vmatprep.subr.mxu0 0.0
    %1532 = vmatpush1.msra.mxu0 0.0
    %1533 = vmatprep.mubr.f32.mxu0 0.0
    %1534 = vmatmul.mubr.f32.gmra.mrb[0].mxu0 %v1467
    %v1535 = vpop.f32.mrb[0].mxu0
    %v1536 = vadd.f32 %v464, %v1535
    %v1537 = vpop.f32.mrb[0].mxu0
    %v1538 = vadd.f32 %v468, %v1537
    %1539 = vdwg.mxu0
    %v1542 = vcombine.low %v1536, %v1538
    %v1544 = vunpack.c.l.s4 1983009808
    %v1545 = vunpack.c.0.s8 %v1544
    %v1546 = vlaneseq
    %v1547 = vshrl.u32 %v1546, 7
    %v1548 = vsub.s32 %v1545, %v1547
    %v1549 = vrot.slane %v1542, %v1548
    %1551 = vst [vmem:[%s1353] sm:$0xf] %v1549
    %s1552 = scalar_lea.vmem [#allocation2], 24
    %v1553 = vld [vmem:[%s1552] sm:$0xf]
    %1554 = vmatprep.subr.mxu0 %v312
    %1555 = vmatpush1.msra.mxu0 %v311
    %1556 = vmatprep.subr.mxu0 %v314
    %1557 = vmatpush1.msra.mxu0 %v313
    %1558 = vmatprep.subr.mxu0 %v316
    %1559 = vmatpush1.msra.mxu0 %v315
    %1560 = vmatprep.subr.mxu0 %v318
    %1561 = vmatpush1.msra.mxu0 %v317
    %1562 = vmatprep.subr.mxu0 %v320
    %1563 = vmatpush1.msra.mxu0 %v319
    %1564 = vmatprep.subr.mxu0 %v322
    %1565 = vmatpush1.msra.mxu0 %v321
    %1566 = vmatprep.subr.mxu0 %v324
    %1567 = vmatpush1.msra.mxu0 %v323
    %1568 = vmatprep.subr.mxu0 %v326
    %1569 = vmatpush1.msra.mxu0 %v325
    %1570 = vmatprep.subr.mxu0 0.0
    %1571 = vmatpush1.msra.mxu0 0.0
    %1572 = vmatprep.subr.mxu0 0.0
    %1573 = vmatpush1.msra.mxu0 0.0
    %1574 = vmatprep.subr.mxu0 0.0
    %1575 = vmatpush1.msra.mxu0 0.0
    %1576 = vmatprep.subr.mxu0 0.0
    %1577 = vmatpush1.msra.mxu0 0.0
    %1578 = vmatprep.subr.mxu0 0.0
    %1579 = vmatpush1.msra.mxu0 0.0
    %1580 = vmatprep.subr.mxu0 0.0
    %1581 = vmatpush1.msra.mxu0 0.0
    %1582 = vmatprep.subr.mxu0 0.0
    %1583 = vmatpush1.msra.mxu0 0.0
    %1584 = vmatprep.subr.mxu0 0.0
    %1585 = vmatpush1.msra.mxu0 0.0
    %1586 = vmatprep.subr.mxu0 0.0
    %1587 = vmatpush1.msra.mxu0 0.0
    %1588 = vmatprep.subr.mxu0 0.0
    %1589 = vmatpush1.msra.mxu0 0.0
    %1590 = vmatprep.subr.mxu0 0.0
    %1591 = vmatpush1.msra.mxu0 0.0
    %1592 = vmatprep.subr.mxu0 0.0
    %1593 = vmatpush1.msra.mxu0 0.0
    %1594 = vmatprep.subr.mxu0 0.0
    %1595 = vmatpush1.msra.mxu0 0.0
    %1596 = vmatprep.subr.mxu0 0.0
    %1597 = vmatpush1.msra.mxu0 0.0
    %1598 = vmatprep.subr.mxu0 0.0
    %1599 = vmatpush1.msra.mxu0 0.0
    %1600 = vmatprep.subr.mxu0 0.0
    %1601 = vmatpush1.msra.mxu0 0.0
    %1602 = vmatprep.subr.mxu0 0.0
    %1603 = vmatpush1.msra.mxu0 0.0
    %1604 = vmatprep.subr.mxu0 0.0
    %1605 = vmatpush1.msra.mxu0 0.0
    %1606 = vmatprep.subr.mxu0 0.0
    %1607 = vmatpush1.msra.mxu0 0.0
    %1608 = vmatprep.subr.mxu0 0.0
    %1609 = vmatpush1.msra.mxu0 0.0
    %1610 = vmatprep.subr.mxu0 0.0
    %1611 = vmatpush1.msra.mxu0 0.0
    %1612 = vmatprep.subr.mxu0 0.0
    %1613 = vmatpush1.msra.mxu0 0.0
    %1614 = vmatprep.subr.mxu0 0.0
    %1615 = vmatpush1.msra.mxu0 0.0
    %1616 = vmatprep.subr.mxu0 0.0
    %1617 = vmatpush1.msra.mxu0 0.0
    %1618 = vmatprep.mubr.f32.mxu0 0.0
    %1619 = vmatmul.mubr.f32.gmra.mrb[0].mxu0 %v1467
    %v1620 = vpop.f32.mrb[0].mxu0
    %v1621 = vadd.f32 0.0, %v1620
    %v1622 = vpop.f32.mrb[0].mxu0
    %v1623 = vadd.f32 0.0, %v1622
    %1624 = vdwg.mxu0
    %v1627 = vcombine.low %v1621, %v1623
    %v1629 = vunpack.c.l.s4 1983009808
    %v1630 = vunpack.c.0.s8 %v1629
    %v1631 = vlaneseq
    %v1632 = vshrl.u32 %v1631, 7
    %v1633 = vsub.s32 %v1630, %v1632
    %v1634 = vrot.slane %v1627, %v1633
    %v1636 = vadd.f32 %v1553, %v1634
    %v1637 = vxor.u32 %v1636, 2147483648
    %v1638 = vmul.f32 %v1637, 1.442695
    %v1639 = vpow.pop %v1638
    %v1640 = vadd.f32 %v1639, 1.0
    %v1641 = vrcp.pop %v1640
    %v1642 = vmul.f32 1.0, %v1641
    %1644 = vrot.lane.b32.xlu0 %v1636, 64
    %v1645 = vpop.permute.xlu0 %1644
    %v1646 = vrot.slane %v1645, 2
    %v1648 = vtanh.pop %v1646
    %v1649 = vmul.f32 %v1642, %v1456
    %v1650 = vmul.f32 %v1642, %v1648
    %1652 = vrot.lane.b32.xlu0 %v1650, 64
    %v1653 = vpop.permute.xlu0 %1652
    %v1655 = vadd.f32 %v1649, %v1653
    %v1656 = vtanh.pop %v1655
    %v1658 = vrot.slane %v1642, 2
    %1661 = vrot.lane.b32.xlu0 %v1656, 64
    %v1662 = vpop.permute.xlu0 %1661
    %v1664 = vmul.f32 %v1658, %v1662
    %v1666 = vsel %vm345, %v1664, 0
    %1668 = vmatprep.subr.mxu0 %v328
    %1669 = vmatpush1.msra.mxu0 %v327
    %1670 = vmatprep.subr.mxu0 %v330
    %1671 = vmatpush1.msra.mxu0 %v329
    %1672 = vmatprep.subr.mxu0 %v332
    %1673 = vmatpush1.msra.mxu0 %v331
    %1674 = vmatprep.subr.mxu0 %v334
    %1675 = vmatpush1.msra.mxu0 %v333
    %1676 = vmatprep.subr.mxu0 %v336
    %1677 = vmatpush1.msra.mxu0 %v335
    %1678 = vmatprep.subr.mxu0 %v338
    %1679 = vmatpush1.msra.mxu0 %v337
    %1680 = vmatprep.subr.mxu0 %v340
    %1681 = vmatpush1.msra.mxu0 %v339
    %1682 = vmatprep.subr.mxu0 %v342
    %1683 = vmatpush1.msra.mxu0 %v341
    %1684 = vmatprep.subr.mxu0 0.0
    %1685 = vmatpush1.msra.mxu0 0.0
    %1686 = vmatprep.subr.mxu0 0.0
    %1687 = vmatpush1.msra.mxu0 0.0
    %1688 = vmatprep.subr.mxu0 0.0
    %1689 = vmatpush1.msra.mxu0 0.0
    %1690 = vmatprep.subr.mxu0 0.0
    %1691 = vmatpush1.msra.mxu0 0.0
    %1692 = vmatprep.subr.mxu0 0.0
    %1693 = vmatpush1.msra.mxu0 0.0
    %1694 = vmatprep.subr.mxu0 0.0
    %1695 = vmatpush1.msra.mxu0 0.0
    %1696 = vmatprep.subr.mxu0 0.0
    %1697 = vmatpush1.msra.mxu0 0.0
    %1698 = vmatprep.subr.mxu0 0.0
    %1699 = vmatpush1.msra.mxu0 0.0
    %1700 = vmatprep.subr.mxu0 0.0
    %1701 = vmatpush1.msra.mxu0 0.0
    %1702 = vmatprep.subr.mxu0 0.0
    %1703 = vmatpush1.msra.mxu0 0.0
    %1704 = vmatprep.subr.mxu0 0.0
    %1705 = vmatpush1.msra.mxu0 0.0
    %1706 = vmatprep.subr.mxu0 0.0
    %1707 = vmatpush1.msra.mxu0 0.0
    %1708 = vmatprep.subr.mxu0 0.0
    %1709 = vmatpush1.msra.mxu0 0.0
    %1710 = vmatprep.subr.mxu0 0.0
    %1711 = vmatpush1.msra.mxu0 0.0
    %1712 = vmatprep.subr.mxu0 0.0
    %1713 = vmatpush1.msra.mxu0 0.0
    %1714 = vmatprep.subr.mxu0 0.0
    %1715 = vmatpush1.msra.mxu0 0.0
    %1716 = vmatprep.subr.mxu0 0.0
    %1717 = vmatpush1.msra.mxu0 0.0
    %1718 = vmatprep.subr.mxu0 0.0
    %1719 = vmatpush1.msra.mxu0 0.0
    %1720 = vmatprep.subr.mxu0 0.0
    %1721 = vmatpush1.msra.mxu0 0.0
    %1722 = vmatprep.subr.mxu0 0.0
    %1723 = vmatpush1.msra.mxu0 0.0
    %1724 = vmatprep.subr.mxu0 0.0
    %1725 = vmatpush1.msra.mxu0 0.0
    %1726 = vmatprep.subr.mxu0 0.0
    %1727 = vmatpush1.msra.mxu0 0.0
    %1728 = vmatprep.subr.mxu0 0.0
    %1729 = vmatpush1.msra.mxu0 0.0
    %1730 = vmatprep.subr.mxu0 0.0
    %1731 = vmatpush1.msra.mxu0 0.0
    %1732 = vmatprep.mubr.f32.mxu0 0.0
    %1733 = vmatmul.mubr.f32.gmra.mrb[0].mxu0 %v1666
    %v1734 = vpop.f32.mrb[0].mxu0
    %v1735 = vadd.f32 %v464, %v1734
    %v1736 = vpop.f32.mrb[0].mxu0
    %v1737 = vadd.f32 %v468, %v1736
    %1738 = vdwg.mxu0
    %v1741 = vcombine.low %v1735, %v1737
    %v1743 = vunpack.c.l.s4 1983009808
    %v1744 = vunpack.c.0.s8 %v1743
    %v1745 = vlaneseq
    %v1746 = vshrl.u32 %v1745, 7
    %v1747 = vsub.s32 %v1744, %v1746
    %v1748 = vrot.slane %v1741, %v1747
    %1750 = vst [vmem:[%s1552] sm:$0xf] %v1748
    %s1751 = scalar_lea.vmem [#allocation2], 28
    %v1752 = vld [vmem:[%s1751] sm:$0xf]
    %1753 = vmatprep.subr.mxu0 %v312
    %1754 = vmatpush1.msra.mxu0 %v311
    %1755 = vmatprep.subr.mxu0 %v314
    %1756 = vmatpush1.msra.mxu0 %v313
    %1757 = vmatprep.subr.mxu0 %v316
    %1758 = vmatpush1.msra.mxu0 %v315
    %1759 = vmatprep.subr.mxu0 %v318
    %1760 = vmatpush1.msra.mxu0 %v317
    %1761 = vmatprep.subr.mxu0 %v320
    %1762 = vmatpush1.msra.mxu0 %v319
    %1763 = vmatprep.subr.mxu0 %v322
    %1764 = vmatpush1.msra.mxu0 %v321
    %1765 = vmatprep.subr.mxu0 %v324
    %1766 = vmatpush1.msra.mxu0 %v323
    %1767 = vmatprep.subr.mxu0 %v326
    %1768 = vmatpush1.msra.mxu0 %v325
    %1769 = vmatprep.subr.mxu0 0.0
    %1770 = vmatpush1.msra.mxu0 0.0
    %1771 = vmatprep.subr.mxu0 0.0
    %1772 = vmatpush1.msra.mxu0 0.0
    %1773 = vmatprep.subr.mxu0 0.0
    %1774 = vmatpush1.msra.mxu0 0.0
    %1775 = vmatprep.subr.mxu0 0.0
    %1776 = vmatpush1.msra.mxu0 0.0
    %1777 = vmatprep.subr.mxu0 0.0
    %1778 = vmatpush1.msra.mxu0 0.0
    %1779 = vmatprep.subr.mxu0 0.0
    %1780 = vmatpush1.msra.mxu0 0.0
    %1781 = vmatprep.subr.mxu0 0.0
    %1782 = vmatpush1.msra.mxu0 0.0
    %1783 = vmatprep.subr.mxu0 0.0
    %1784 = vmatpush1.msra.mxu0 0.0
    %1785 = vmatprep.subr.mxu0 0.0
    %1786 = vmatpush1.msra.mxu0 0.0
    %1787 = vmatprep.subr.mxu0 0.0
    %1788 = vmatpush1.msra.mxu0 0.0
    %1789 = vmatprep.subr.mxu0 0.0
    %1790 = vmatpush1.msra.mxu0 0.0
    %1791 = vmatprep.subr.mxu0 0.0
    %1792 = vmatpush1.msra.mxu0 0.0
    %1793 = vmatprep.subr.mxu0 0.0
    %1794 = vmatpush1.msra.mxu0 0.0
    %1795 = vmatprep.subr.mxu0 0.0
    %1796 = vmatpush1.msra.mxu0 0.0
    %1797 = vmatprep.subr.mxu0 0.0
    %1798 = vmatpush1.msra.mxu0 0.0
    %1799 = vmatprep.subr.mxu0 0.0
    %1800 = vmatpush1.msra.mxu0 0.0
    %1801 = vmatprep.subr.mxu0 0.0
    %1802 = vmatpush1.msra.mxu0 0.0
    %1803 = vmatprep.subr.mxu0 0.0
    %1804 = vmatpush1.msra.mxu0 0.0
    %1805 = vmatprep.subr.mxu0 0.0
    %1806 = vmatpush1.msra.mxu0 0.0
    %1807 = vmatprep.subr.mxu0 0.0
    %1808 = vmatpush1.msra.mxu0 0.0
    %1809 = vmatprep.subr.mxu0 0.0
    %1810 = vmatpush1.msra.mxu0 0.0
    %1811 = vmatprep.subr.mxu0 0.0
    %1812 = vmatpush1.msra.mxu0 0.0
    %1813 = vmatprep.subr.mxu0 0.0
    %1814 = vmatpush1.msra.mxu0 0.0
    %1815 = vmatprep.subr.mxu0 0.0
    %1816 = vmatpush1.msra.mxu0 0.0
    %1817 = vmatprep.mubr.f32.mxu0 0.0
    %1818 = vmatmul.mubr.f32.gmra.mrb[0].mxu0 %v1666
    %v1819 = vpop.f32.mrb[0].mxu0
    %v1820 = vadd.f32 0.0, %v1819
    %v1821 = vpop.f32.mrb[0].mxu0
    %v1822 = vadd.f32 0.0, %v1821
    %1823 = vdwg.mxu0
    %v1826 = vcombine.low %v1820, %v1822
    %v1828 = vunpack.c.l.s4 1983009808
    %v1829 = vunpack.c.0.s8 %v1828
    %v1830 = vlaneseq
    %v1831 = vshrl.u32 %v1830, 7
    %v1832 = vsub.s32 %v1829, %v1831
    %v1833 = vrot.slane %v1826, %v1832
    %v1835 = vadd.f32 %v1752, %v1833
    %v1836 = vxor.u32 %v1835, 2147483648
    %v1837 = vmul.f32 %v1836, 1.442695
    %v1838 = vpow.pop %v1837
    %v1839 = vadd.f32 %v1838, 1.0
    %v1840 = vrcp.pop %v1839
    %v1841 = vmul.f32 1.0, %v1840
    %1843 = vrot.lane.b32.xlu0 %v1835, 64
    %v1844 = vpop.permute.xlu0 %1843
    %v1845 = vrot.slane %v1844, 2
    %v1847 = vtanh.pop %v1845
    %v1848 = vmul.f32 %v1841, %v1655
    %v1849 = vmul.f32 %v1841, %v1847
    %1851 = vrot.lane.b32.xlu0 %v1849, 64
    %v1852 = vpop.permute.xlu0 %1851
    %v1854 = vadd.f32 %v1848, %v1852
    %v1855 = vtanh.pop %v1854
    %v1857 = vrot.slane %v1841, 2
    %1860 = vrot.lane.b32.xlu0 %v1855, 64
    %v1861 = vpop.permute.xlu0 %1860
    %v1863 = vmul.f32 %v1857, %v1861
    %v1865 = vsel %vm345, %v1863, 0
    %1867 = vmatprep.subr.mxu0 %v328
    %1868 = vmatpush1.msra.mxu0 %v327
    %1869 = vmatprep.subr.mxu0 %v330
    %1870 = vmatpush1.msra.mxu0 %v329
    %1871 = vmatprep.subr.mxu0 %v332
    %1872 = vmatpush1.msra.mxu0 %v331
    %1873 = vmatprep.subr.mxu0 %v334
    %1874 = vmatpush1.msra.mxu0 %v333
    %1875 = vmatprep.subr.mxu0 %v336
    %1876 = vmatpush1.msra.mxu0 %v335
    %1877 = vmatprep.subr.mxu0 %v338
    %1878 = vmatpush1.msra.mxu0 %v337
    %1879 = vmatprep.subr.mxu0 %v340
    %1880 = vmatpush1.msra.mxu0 %v339
    %1881 = vmatprep.subr.mxu0 %v342
    %1882 = vmatpush1.msra.mxu0 %v341
    %1883 = vmatprep.subr.mxu0 0.0
    %1884 = vmatpush1.msra.mxu0 0.0
    %1885 = vmatprep.subr.mxu0 0.0
    %1886 = vmatpush1.msra.mxu0 0.0
    %1887 = vmatprep.subr.mxu0 0.0
    %1888 = vmatpush1.msra.mxu0 0.0
    %1889 = vmatprep.subr.mxu0 0.0
    %1890 = vmatpush1.msra.mxu0 0.0
    %1891 = vmatprep.subr.mxu0 0.0
    %1892 = vmatpush1.msra.mxu0 0.0
    %1893 = vmatprep.subr.mxu0 0.0
    %1894 = vmatpush1.msra.mxu0 0.0
    %1895 = vmatprep.subr.mxu0 0.0
    %1896 = vmatpush1.msra.mxu0 0.0
    %1897 = vmatprep.subr.mxu0 0.0
    %1898 = vmatpush1.msra.mxu0 0.0
    %1899 = vmatprep.subr.mxu0 0.0
    %1900 = vmatpush1.msra.mxu0 0.0
    %1901 = vmatprep.subr.mxu0 0.0
    %1902 = vmatpush1.msra.mxu0 0.0
    %1903 = vmatprep.subr.mxu0 0.0
    %1904 = vmatpush1.msra.mxu0 0.0
    %1905 = vmatprep.subr.mxu0 0.0
    %1906 = vmatpush1.msra.mxu0 0.0
    %1907 = vmatprep.subr.mxu0 0.0
    %1908 = vmatpush1.msra.mxu0 0.0
    %1909 = vmatprep.subr.mxu0 0.0
    %1910 = vmatpush1.msra.mxu0 0.0
    %1911 = vmatprep.subr.mxu0 0.0
    %1912 = vmatpush1.msra.mxu0 0.0
    %1913 = vmatprep.subr.mxu0 0.0
    %1914 = vmatpush1.msra.mxu0 0.0
    %1915 = vmatprep.subr.mxu0 0.0
    %1916 = vmatpush1.msra.mxu0 0.0
    %1917 = vmatprep.subr.mxu0 0.0
    %1918 = vmatpush1.msra.mxu0 0.0
    %1919 = vmatprep.subr.mxu0 0.0
    %1920 = vmatpush1.msra.mxu0 0.0
    %1921 = vmatprep.subr.mxu0 0.0
    %1922 = vmatpush1.msra.mxu0 0.0
    %1923 = vmatprep.subr.mxu0 0.0
    %1924 = vmatpush1.msra.mxu0 0.0
    %1925 = vmatprep.subr.mxu0 0.0
    %1926 = vmatpush1.msra.mxu0 0.0
    %1927 = vmatprep.subr.mxu0 0.0
    %1928 = vmatpush1.msra.mxu0 0.0
    %1929 = vmatprep.subr.mxu0 0.0
    %1930 = vmatpush1.msra.mxu0 0.0
    %1931 = vmatprep.mubr.f32.mxu0 0.0
    %1932 = vmatmul.mubr.f32.gmra.mrb[0].mxu0 %v1865
    %v1933 = vpop.f32.mrb[0].mxu0
    %v1934 = vadd.f32 %v464, %v1933
    %v1935 = vpop.f32.mrb[0].mxu0
    %v1936 = vadd.f32 %v468, %v1935
    %1937 = vdwg.mxu0
    %v1940 = vcombine.low %v1934, %v1936
    %v1942 = vunpack.c.l.s4 1983009808
    %v1943 = vunpack.c.0.s8 %v1942
    %v1944 = vlaneseq
    %v1945 = vshrl.u32 %v1944, 7
    %v1946 = vsub.s32 %v1943, %v1945
    %v1947 = vrot.slane %v1940, %v1946
    %1949 = vst [vmem:[%s1751] sm:$0xf] %v1947
    %v1950 = vld [vmem:[#allocation8] sm:$0xff]
    %v1951 = vld [vmem:[#allocation8 + $0x8] sm:$0xff]
    %v1952 = vld [vmem:[#allocation8 + $0x10] sm:$0xff]
    %v1953 = vld [vmem:[#allocation8 + $0x18] sm:$0xff]
    %v1954 = vld [vmem:[#allocation8 + $0x20] sm:$0xff]
    %v1955 = vld [vmem:[#allocation8 + $0x28] sm:$0xff]
    %v1956 = vld [vmem:[#allocation8 + $0x30] sm:$0xff]
    %v1957 = vld [vmem:[#allocation8 + $0x38] sm:$0xff]
    %v1958 = vld [vmem:[#allocation8 + $0x40] sm:$0xff]
    %v1959 = vld [vmem:[#allocation8 + $0x48] sm:$0xff]
    %v1960 = vld [vmem:[#allocation8 + $0x50] sm:$0xff]
    %v1961 = vld [vmem:[#allocation8 + $0x58] sm:$0xff]
    %v1962 = vld [vmem:[#allocation8 + $0x60] sm:$0xff]
    %v1963 = vld [vmem:[#allocation8 + $0x68] sm:$0xff]
    %v1964 = vld [vmem:[#allocation8 + $0x70] sm:$0xff]
    %v1965 = vld [vmem:[#allocation8 + $0x78] sm:$0xff]
    %v1966 = vld [vmem:[#allocation9] sm:$0xff]
    %v1967 = vld [vmem:[#allocation9 + $0x8] sm:$0xff]
    %v1968 = vld [vmem:[#allocation9 + $0x10] sm:$0xff]
    %v1969 = vld [vmem:[#allocation9 + $0x18] sm:$0xff]
    %v1970 = vld [vmem:[#allocation9 + $0x20] sm:$0xff]
    %v1971 = vld [vmem:[#allocation9 + $0x28] sm:$0xff]
    %v1972 = vld [vmem:[#allocation9 + $0x30] sm:$0xff]
    %v1973 = vld [vmem:[#allocation9 + $0x38] sm:$0xff]
    %v1974 = vld [vmem:[#allocation9 + $0x40] sm:$0xff]
    %v1975 = vld [vmem:[#allocation9 + $0x48] sm:$0xff]
    %v1976 = vld [vmem:[#allocation9 + $0x50] sm:$0xff]
    %v1977 = vld [vmem:[#allocation9 + $0x58] sm:$0xff]
    %v1978 = vld [vmem:[#allocation9 + $0x60] sm:$0xff]
    %v1979 = vld [vmem:[#allocation9 + $0x68] sm:$0xff]
    %v1980 = vld [vmem:[#allocation9 + $0x70] sm:$0xff]
    %v1981 = vld [vmem:[#allocation9 + $0x78] sm:$0xff]
    %v1982 = vld [vmem:[%s9] sm:$0x3]
    %v1983 = vld [vmem:[#allocation2] sm:$0xf]
    %1984 = vmatprep.subr.mxu0 %v1951
    %1985 = vmatpush1.msra.mxu0 %v1950
    %1986 = vmatprep.subr.mxu0 %v1953
    %1987 = vmatpush1.msra.mxu0 %v1952
    %1988 = vmatprep.subr.mxu0 %v1955
    %1989 = vmatpush1.msra.mxu0 %v1954
    %1990 = vmatprep.subr.mxu0 %v1957
    %1991 = vmatpush1.msra.mxu0 %v1956
    %1992 = vmatprep.subr.mxu0 %v1959
    %1993 = vmatpush1.msra.mxu0 %v1958
    %1994 = vmatprep.subr.mxu0 %v1961
    %1995 = vmatpush1.msra.mxu0 %v1960
    %1996 = vmatprep.subr.mxu0 %v1963
    %1997 = vmatpush1.msra.mxu0 %v1962
    %1998 = vmatprep.subr.mxu0 %v1965
    %1999 = vmatpush1.msra.mxu0 %v1964
    %2000 = vmatprep.subr.mxu0 0.0
    %2001 = vmatpush1.msra.mxu0 0.0
    %2002 = vmatprep.subr.mxu0 0.0
    %2003 = vmatpush1.msra.mxu0 0.0
    %2004 = vmatprep.subr.mxu0 0.0
    %2005 = vmatpush1.msra.mxu0 0.0
    %2006 = vmatprep.subr.mxu0 0.0
    %2007 = vmatpush1.msra.mxu0 0.0
    %2008 = vmatprep.subr.mxu0 0.0
    %2009 = vmatpush1.msra.mxu0 0.0
    %2010 = vmatprep.subr.mxu0 0.0
    %2011 = vmatpush1.msra.mxu0 0.0
    %2012 = vmatprep.subr.mxu0 0.0
    %2013 = vmatpush1.msra.mxu0 0.0
    %2014 = vmatprep.subr.mxu0 0.0
    %2015 = vmatpush1.msra.mxu0 0.0
    %2016 = vmatprep.subr.mxu0 0.0
    %2017 = vmatpush1.msra.mxu0 0.0
    %2018 = vmatprep.subr.mxu0 0.0
    %2019 = vmatpush1.msra.mxu0 0.0
    %2020 = vmatprep.subr.mxu0 0.0
    %2021 = vmatpush1.msra.mxu0 0.0
    %2022 = vmatprep.subr.mxu0 0.0
    %2023 = vmatpush1.msra.mxu0 0.0
    %2024 = vmatprep.subr.mxu0 0.0
    %2025 = vmatpush1.msra.mxu0 0.0
    %2026 = vmatprep.subr.mxu0 0.0
    %2027 = vmatpush1.msra.mxu0 0.0
    %2028 = vmatprep.subr.mxu0 0.0
    %2029 = vmatpush1.msra.mxu0 0.0
    %2030 = vmatprep.subr.mxu0 0.0
    %2031 = vmatpush1.msra.mxu0 0.0
    %2032 = vmatprep.subr.mxu0 0.0
    %2033 = vmatpush1.msra.mxu0 0.0
    %2034 = vmatprep.subr.mxu0 0.0
    %2035 = vmatpush1.msra.mxu0 0.0
    %2036 = vmatprep.subr.mxu0 0.0
    %2037 = vmatpush1.msra.mxu0 0.0
    %2038 = vmatprep.subr.mxu0 0.0
    %2039 = vmatpush1.msra.mxu0 0.0
    %2040 = vmatprep.subr.mxu0 0.0
    %2041 = vmatpush1.msra.mxu0 0.0
    %2042 = vmatprep.subr.mxu0 0.0
    %2043 = vmatpush1.msra.mxu0 0.0
    %2044 = vmatprep.subr.mxu0 0.0
    %2045 = vmatpush1.msra.mxu0 0.0
    %2046 = vmatprep.subr.mxu0 0.0
    %2047 = vmatpush1.msra.mxu0 0.0
    %2048 = vmatprep.mubr.f32.mxu0 0.0
    %2049 = vmatmul.mubr.f32.gmra.mrb[0].mxu0 %v347
    %v2050 = vpop.f32.mrb[0].mxu0
    %v2051 = vadd.f32 0.0, %v2050
    %v2052 = vpop.f32.mrb[0].mxu0
    %v2053 = vadd.f32 0.0, %v2052
    %2054 = vdwg.mxu0
    %v2057 = vcombine.low %v2051, %v2053
    %v2059 = vunpack.c.l.s4 1983009808
    %v2060 = vunpack.c.0.s8 %v2059
    %v2061 = vlaneseq
    %v2062 = vshrl.u32 %v2061, 7
    %v2063 = vsub.s32 %v2060, %v2062
    %v2064 = vrot.slane %v2057, %v2063
    %v2066 = vadd.f32 %v1983, %v2064
    %v2067 = vxor.u32 %v2066, 2147483648
    %v2068 = vmul.f32 %v2067, 1.442695
    %v2069 = vpow.pop %v2068
    %v2070 = vadd.f32 %v2069, 1.0
    %v2071 = vrcp.pop %v2070
    %v2072 = vmul.f32 1.0, %v2071
    %2074 = vrot.lane.b32.xlu0 %v2066, 64
    %v2075 = vpop.permute.xlu0 %2074
    %v2076 = vrot.slane %v2075, 2
    %v2078 = vtanh.pop %v2076
    %v2079 = vmul.f32 %v2072, 0.0
    %v2080 = vmul.f32 %v2072, %v2078
    %2082 = vrot.lane.b32.xlu0 %v2080, 64
    %v2083 = vpop.permute.xlu0 %2082
    %v2085 = vadd.f32 %v2079, %v2083
    %v2086 = vtanh.pop %v2085
    %v2088 = vrot.slane %v2072, 2
    %2091 = vrot.lane.b32.xlu0 %v2086, 64
    %v2092 = vpop.permute.xlu0 %2091
    %v2094 = vmul.f32 %v2088, %v2092
    %v2096 = vlaneseq
    %v2097 = vshrl.u32 %v2096, 7
    %v2098 = vsub.s32 0, %v2097
    %v2099 = vrot.slane %v1982, %v2098
    %v2100 = vlaneseq
    %v2101 = vshrl.u32 %v2100, 7
    %v2102 = vsub.s32 1, %v2101
    %v2103 = vrot.slane %v1982, %v2102
    %v2107 = vsel %vm345, %v2094, 0
    %2109 = vmatprep.subr.mxu0 %v1967
    %2110 = vmatpush1.msra.mxu0 %v1966
    %2111 = vmatprep.subr.mxu0 %v1969
    %2112 = vmatpush1.msra.mxu0 %v1968
    %2113 = vmatprep.subr.mxu0 %v1971
    %2114 = vmatpush1.msra.mxu0 %v1970
    %2115 = vmatprep.subr.mxu0 %v1973
    %2116 = vmatpush1.msra.mxu0 %v1972
    %2117 = vmatprep.subr.mxu0 %v1975
    %2118 = vmatpush1.msra.mxu0 %v1974
    %2119 = vmatprep.subr.mxu0 %v1977
    %2120 = vmatpush1.msra.mxu0 %v1976
    %2121 = vmatprep.subr.mxu0 %v1979
    %2122 = vmatpush1.msra.mxu0 %v1978
    %2123 = vmatprep.subr.mxu0 %v1981
    %2124 = vmatpush1.msra.mxu0 %v1980
    %2125 = vmatprep.subr.mxu0 0.0
    %2126 = vmatpush1.msra.mxu0 0.0
    %2127 = vmatprep.subr.mxu0 0.0
    %2128 = vmatpush1.msra.mxu0 0.0
    %2129 = vmatprep.subr.mxu0 0.0
    %2130 = vmatpush1.msra.mxu0 0.0
    %2131 = vmatprep.subr.mxu0 0.0
    %2132 = vmatpush1.msra.mxu0 0.0
    %2133 = vmatprep.subr.mxu0 0.0
    %2134 = vmatpush1.msra.mxu0 0.0
    %2135 = vmatprep.subr.mxu0 0.0
    %2136 = vmatpush1.msra.mxu0 0.0
    %2137 = vmatprep.subr.mxu0 0.0
    %2138 = vmatpush1.msra.mxu0 0.0
    %2139 = vmatprep.subr.mxu0 0.0
    %2140 = vmatpush1.msra.mxu0 0.0
    %2141 = vmatprep.subr.mxu0 0.0
    %2142 = vmatpush1.msra.mxu0 0.0
    %2143 = vmatprep.subr.mxu0 0.0
    %2144 = vmatpush1.msra.mxu0 0.0
    %2145 = vmatprep.subr.mxu0 0.0
    %2146 = vmatpush1.msra.mxu0 0.0
    %2147 = vmatprep.subr.mxu0 0.0
    %2148 = vmatpush1.msra.mxu0 0.0
    %2149 = vmatprep.subr.mxu0 0.0
    %2150 = vmatpush1.msra.mxu0 0.0
    %2151 = vmatprep.subr.mxu0 0.0
    %2152 = vmatpush1.msra.mxu0 0.0
    %2153 = vmatprep.subr.mxu0 0.0
    %2154 = vmatpush1.msra.mxu0 0.0
    %2155 = vmatprep.subr.mxu0 0.0
    %2156 = vmatpush1.msra.mxu0 0.0
    %2157 = vmatprep.subr.mxu0 0.0
    %2158 = vmatpush1.msra.mxu0 0.0
    %2159 = vmatprep.subr.mxu0 0.0
    %2160 = vmatpush1.msra.mxu0 0.0
    %2161 = vmatprep.subr.mxu0 0.0
    %2162 = vmatpush1.msra.mxu0 0.0
    %2163 = vmatprep.subr.mxu0 0.0
    %2164 = vmatpush1.msra.mxu0 0.0
    %2165 = vmatprep.subr.mxu0 0.0
    %2166 = vmatpush1.msra.mxu0 0.0
    %2167 = vmatprep.subr.mxu0 0.0
    %2168 = vmatpush1.msra.mxu0 0.0
    %2169 = vmatprep.subr.mxu0 0.0
    %2170 = vmatpush1.msra.mxu0 0.0
    %2171 = vmatprep.subr.mxu0 0.0
    %2172 = vmatpush1.msra.mxu0 0.0
    %2173 = vmatprep.mubr.f32.mxu0 0.0
    %2174 = vmatmul.mubr.f32.gmra.mrb[0].mxu0 %v2107
    %v2175 = vpop.f32.mrb[0].mxu0
    %v2176 = vadd.f32 %v2099, %v2175
    %v2177 = vpop.f32.mrb[0].mxu0
    %v2178 = vadd.f32 %v2103, %v2177
    %2179 = vdwg.mxu0
    %v2182 = vcombine.low %v2176, %v2178
    %v2184 = vunpack.c.l.s4 1983009808
    %v2185 = vunpack.c.0.s8 %v2184
    %v2186 = vlaneseq
    %v2187 = vshrl.u32 %v2186, 7
    %v2188 = vsub.s32 %v2185, %v2187
    %v2189 = vrot.slane %v2182, %v2188
    %2191 = vst [vmem:[#allocation2] sm:$0xf] %v2189
    %v2192 = vld [vmem:[%s557] sm:$0xf]
    %2193 = vmatprep.subr.mxu0 %v1951
    %2194 = vmatpush1.msra.mxu0 %v1950
    %2195 = vmatprep.subr.mxu0 %v1953
    %2196 = vmatpush1.msra.mxu0 %v1952
    %2197 = vmatprep.subr.mxu0 %v1955
    %2198 = vmatpush1.msra.mxu0 %v1954
    %2199 = vmatprep.subr.mxu0 %v1957
    %2200 = vmatpush1.msra.mxu0 %v1956
    %2201 = vmatprep.subr.mxu0 %v1959
    %2202 = vmatpush1.msra.mxu0 %v1958
    %2203 = vmatprep.subr.mxu0 %v1961
    %2204 = vmatpush1.msra.mxu0 %v1960
    %2205 = vmatprep.subr.mxu0 %v1963
    %2206 = vmatpush1.msra.mxu0 %v1962
    %2207 = vmatprep.subr.mxu0 %v1965
    %2208 = vmatpush1.msra.mxu0 %v1964
    %2209 = vmatprep.subr.mxu0 0.0
    %2210 = vmatpush1.msra.mxu0 0.0
    %2211 = vmatprep.subr.mxu0 0.0
    %2212 = vmatpush1.msra.mxu0 0.0
    %2213 = vmatprep.subr.mxu0 0.0
    %2214 = vmatpush1.msra.mxu0 0.0
    %2215 = vmatprep.subr.mxu0 0.0
    %2216 = vmatpush1.msra.mxu0 0.0
    %2217 = vmatprep.subr.mxu0 0.0
    %2218 = vmatpush1.msra.mxu0 0.0
    %2219 = vmatprep.subr.mxu0 0.0
    %2220 = vmatpush1.msra.mxu0 0.0
    %2221 = vmatprep.subr.mxu0 0.0
    %2222 = vmatpush1.msra.mxu0 0.0
    %2223 = vmatprep.subr.mxu0 0.0
    %2224 = vmatpush1.msra.mxu0 0.0
    %2225 = vmatprep.subr.mxu0 0.0
    %2226 = vmatpush1.msra.mxu0 0.0
    %2227 = vmatprep.subr.mxu0 0.0
    %2228 = vmatpush1.msra.mxu0 0.0
    %2229 = vmatprep.subr.mxu0 0.0
    %2230 = vmatpush1.msra.mxu0 0.0
    %2231 = vmatprep.subr.mxu0 0.0
    %2232 = vmatpush1.msra.mxu0 0.0
    %2233 = vmatprep.subr.mxu0 0.0
    %2234 = vmatpush1.msra.mxu0 0.0
    %2235 = vmatprep.subr.mxu0 0.0
    %2236 = vmatpush1.msra.mxu0 0.0
    %2237 = vmatprep.subr.mxu0 0.0
    %2238 = vmatpush1.msra.mxu0 0.0
    %2239 = vmatprep.subr.mxu0 0.0
    %2240 = vmatpush1.msra.mxu0 0.0
    %2241 = vmatprep.subr.mxu0 0.0
    %2242 = vmatpush1.msra.mxu0 0.0
    %2243 = vmatprep.subr.mxu0 0.0
    %2244 = vmatpush1.msra.mxu0 0.0
    %2245 = vmatprep.subr.mxu0 0.0
    %2246 = vmatpush1.msra.mxu0 0.0
    %2247 = vmatprep.subr.mxu0 0.0
    %2248 = vmatpush1.msra.mxu0 0.0
    %2249 = vmatprep.subr.mxu0 0.0
    %2250 = vmatpush1.msra.mxu0 0.0
    %2251 = vmatprep.subr.mxu0 0.0
    %2252 = vmatpush1.msra.mxu0 0.0
    %2253 = vmatprep.subr.mxu0 0.0
    %2254 = vmatpush1.msra.mxu0 0.0
    %2255 = vmatprep.subr.mxu0 0.0
    %2256 = vmatpush1.msra.mxu0 0.0
    %2257 = vmatprep.mubr.f32.mxu0 0.0
    %2258 = vmatmul.mubr.f32.gmra.mrb[0].mxu0 %v2107
    %v2259 = vpop.f32.mrb[0].mxu0
    %v2260 = vadd.f32 0.0, %v2259
    %v2261 = vpop.f32.mrb[0].mxu0
    %v2262 = vadd.f32 0.0, %v2261
    %2263 = vdwg.mxu0
    %v2266 = vcombine.low %v2260, %v2262
    %v2268 = vunpack.c.l.s4 1983009808
    %v2269 = vunpack.c.0.s8 %v2268
    %v2270 = vlaneseq
    %v2271 = vshrl.u32 %v2270, 7
    %v2272 = vsub.s32 %v2269, %v2271
    %v2273 = vrot.slane %v2266, %v2272
    %v2275 = vadd.f32 %v2192, %v2273
    %v2276 = vxor.u32 %v2275, 2147483648
    %v2277 = vmul.f32 %v2276, 1.442695
    %v2278 = vpow.pop %v2277
    %v2279 = vadd.f32 %v2278, 1.0
    %v2280 = vrcp.pop %v2279
    %v2281 = vmul.f32 1.0, %v2280
    %2283 = vrot.lane.b32.xlu0 %v2275, 64
    %v2284 = vpop.permute.xlu0 %2283
    %v2285 = vrot.slane %v2284, 2
    %v2287 = vtanh.pop %v2285
    %v2288 = vmul.f32 %v2281, %v2085
    %v2289 = vmul.f32 %v2281, %v2287
    %2291 = vrot.lane.b32.xlu0 %v2289, 64
    %v2292 = vpop.permute.xlu0 %2291
    %v2294 = vadd.f32 %v2288, %v2292
    %v2295 = vtanh.pop %v2294
    %v2297 = vrot.slane %v2281, 2
    %2300 = vrot.lane.b32.xlu0 %v2295, 64
    %v2301 = vpop.permute.xlu0 %2300
    %v2303 = vmul.f32 %v2297, %v2301
    %v2305 = vsel %vm345, %v2303, 0
    %2307 = vmatprep.subr.mxu0 %v1967
    %2308 = vmatpush1.msra.mxu0 %v1966
    %2309 = vmatprep.subr.mxu0 %v1969
    %2310 = vmatpush1.msra.mxu0 %v1968
    %2311 = vmatprep.subr.mxu0 %v1971
    %2312 = vmatpush1.msra.mxu0 %v1970
    %2313 = vmatprep.subr.mxu0 %v1973
    %2314 = vmatpush1.msra.mxu0 %v1972
    %2315 = vmatprep.subr.mxu0 %v1975
    %2316 = vmatpush1.msra.mxu0 %v1974
    %2317 = vmatprep.subr.mxu0 %v1977
    %2318 = vmatpush1.msra.mxu0 %v1976
    %2319 = vmatprep.subr.mxu0 %v1979
    %2320 = vmatpush1.msra.mxu0 %v1978
    %2321 = vmatprep.subr.mxu0 %v1981
    %2322 = vmatpush1.msra.mxu0 %v1980
    %2323 = vmatprep.subr.mxu0 0.0
    %2324 = vmatpush1.msra.mxu0 0.0
    %2325 = vmatprep.subr.mxu0 0.0
    %2326 = vmatpush1.msra.mxu0 0.0
    %2327 = vmatprep.subr.mxu0 0.0
    %2328 = vmatpush1.msra.mxu0 0.0
    %2329 = vmatprep.subr.mxu0 0.0
    %2330 = vmatpush1.msra.mxu0 0.0
    %2331 = vmatprep.subr.mxu0 0.0
    %2332 = vmatpush1.msra.mxu0 0.0
    %2333 = vmatprep.subr.mxu0 0.0
    %2334 = vmatpush1.msra.mxu0 0.0
    %2335 = vmatprep.subr.mxu0 0.0
    %2336 = vmatpush1.msra.mxu0 0.0
    %2337 = vmatprep.subr.mxu0 0.0
    %2338 = vmatpush1.msra.mxu0 0.0
    %2339 = vmatprep.subr.mxu0 0.0
    %2340 = vmatpush1.msra.mxu0 0.0
    %2341 = vmatprep.subr.mxu0 0.0
    %2342 = vmatpush1.msra.mxu0 0.0
    %2343 = vmatprep.subr.mxu0 0.0
    %2344 = vmatpush1.msra.mxu0 0.0
    %2345 = vmatprep.subr.mxu0 0.0
    %2346 = vmatpush1.msra.mxu0 0.0
    %2347 = vmatprep.subr.mxu0 0.0
    %2348 = vmatpush1.msra.mxu0 0.0
    %2349 = vmatprep.subr.mxu0 0.0
    %2350 = vmatpush1.msra.mxu0 0.0
    %2351 = vmatprep.subr.mxu0 0.0
    %2352 = vmatpush1.msra.mxu0 0.0
    %2353 = vmatprep.subr.mxu0 0.0
    %2354 = vmatpush1.msra.mxu0 0.0
    %2355 = vmatprep.subr.mxu0 0.0
    %2356 = vmatpush1.msra.mxu0 0.0
    %2357 = vmatprep.subr.mxu0 0.0
    %2358 = vmatpush1.msra.mxu0 0.0
    %2359 = vmatprep.subr.mxu0 0.0
    %2360 = vmatpush1.msra.mxu0 0.0
    %2361 = vmatprep.subr.mxu0 0.0
    %2362 = vmatpush1.msra.mxu0 0.0
    %2363 = vmatprep.subr.mxu0 0.0
    %2364 = vmatpush1.msra.mxu0 0.0
    %2365 = vmatprep.subr.mxu0 0.0
    %2366 = vmatpush1.msra.mxu0 0.0
    %2367 = vmatprep.subr.mxu0 0.0
    %2368 = vmatpush1.msra.mxu0 0.0
    %2369 = vmatprep.subr.mxu0 0.0
    %2370 = vmatpush1.msra.mxu0 0.0
    %2371 = vmatprep.mubr.f32.mxu0 0.0
    %2372 = vmatmul.mubr.f32.gmra.mrb[0].mxu0 %v2305
    %v2373 = vpop.f32.mrb[0].mxu0
    %v2374 = vadd.f32 %v2099, %v2373
    %v2375 = vpop.f32.mrb[0].mxu0
    %v2376 = vadd.f32 %v2103, %v2375
    %2377 = vdwg.mxu0
    %v2380 = vcombine.low %v2374, %v2376
    %v2382 = vunpack.c.l.s4 1983009808
    %v2383 = vunpack.c.0.s8 %v2382
    %v2384 = vlaneseq
    %v2385 = vshrl.u32 %v2384, 7
    %v2386 = vsub.s32 %v2383, %v2385
    %v2387 = vrot.slane %v2380, %v2386
    %2389 = vst [vmem:[%s557] sm:$0xf] %v2387
    %v2390 = vld [vmem:[%s756] sm:$0xf]
    %2391 = vmatprep.subr.mxu0 %v1951
    %2392 = vmatpush1.msra.mxu0 %v1950
    %2393 = vmatprep.subr.mxu0 %v1953
    %2394 = vmatpush1.msra.mxu0 %v1952
    %2395 = vmatprep.subr.mxu0 %v1955
    %2396 = vmatpush1.msra.mxu0 %v1954
    %2397 = vmatprep.subr.mxu0 %v1957
    %2398 = vmatpush1.msra.mxu0 %v1956
    %2399 = vmatprep.subr.mxu0 %v1959
    %2400 = vmatpush1.msra.mxu0 %v1958
    %2401 = vmatprep.subr.mxu0 %v1961
    %2402 = vmatpush1.msra.mxu0 %v1960
    %2403 = vmatprep.subr.mxu0 %v1963
    %2404 = vmatpush1.msra.mxu0 %v1962
    %2405 = vmatprep.subr.mxu0 %v1965
    %2406 = vmatpush1.msra.mxu0 %v1964
    %2407 = vmatprep.subr.mxu0 0.0
    %2408 = vmatpush1.msra.mxu0 0.0
    %2409 = vmatprep.subr.mxu0 0.0
    %2410 = vmatpush1.msra.mxu0 0.0
    %2411 = vmatprep.subr.mxu0 0.0
    %2412 = vmatpush1.msra.mxu0 0.0
    %2413 = vmatprep.subr.mxu0 0.0
    %2414 = vmatpush1.msra.mxu0 0.0
    %2415 = vmatprep.subr.mxu0 0.0
    %2416 = vmatpush1.msra.mxu0 0.0
    %2417 = vmatprep.subr.mxu0 0.0
    %2418 = vmatpush1.msra.mxu0 0.0
    %2419 = vmatprep.subr.mxu0 0.0
    %2420 = vmatpush1.msra.mxu0 0.0
    %2421 = vmatprep.subr.mxu0 0.0
    %2422 = vmatpush1.msra.mxu0 0.0
    %2423 = vmatprep.subr.mxu0 0.0
    %2424 = vmatpush1.msra.mxu0 0.0
    %2425 = vmatprep.subr.mxu0 0.0
    %2426 = vmatpush1.msra.mxu0 0.0
    %2427 = vmatprep.subr.mxu0 0.0
    %2428 = vmatpush1.msra.mxu0 0.0
    %2429 = vmatprep.subr.mxu0 0.0
    %2430 = vmatpush1.msra.mxu0 0.0
    %2431 = vmatprep.subr.mxu0 0.0
    %2432 = vmatpush1.msra.mxu0 0.0
    %2433 = vmatprep.subr.mxu0 0.0
    %2434 = vmatpush1.msra.mxu0 0.0
    %2435 = vmatprep.subr.mxu0 0.0
    %2436 = vmatpush1.msra.mxu0 0.0
    %2437 = vmatprep.subr.mxu0 0.0
    %2438 = vmatpush1.msra.mxu0 0.0
    %2439 = vmatprep.subr.mxu0 0.0
    %2440 = vmatpush1.msra.mxu0 0.0
    %2441 = vmatprep.subr.mxu0 0.0
    %2442 = vmatpush1.msra.mxu0 0.0
    %2443 = vmatprep.subr.mxu0 0.0
    %2444 = vmatpush1.msra.mxu0 0.0
    %2445 = vmatprep.subr.mxu0 0.0
    %2446 = vmatpush1.msra.mxu0 0.0
    %2447 = vmatprep.subr.mxu0 0.0
    %2448 = vmatpush1.msra.mxu0 0.0
    %2449 = vmatprep.subr.mxu0 0.0
    %2450 = vmatpush1.msra.mxu0 0.0
    %2451 = vmatprep.subr.mxu0 0.0
    %2452 = vmatpush1.msra.mxu0 0.0
    %2453 = vmatprep.subr.mxu0 0.0
    %2454 = vmatpush1.msra.mxu0 0.0
    %2455 = vmatprep.mubr.f32.mxu0 0.0
    %2456 = vmatmul.mubr.f32.gmra.mrb[0].mxu0 %v2305
    %v2457 = vpop.f32.mrb[0].mxu0
    %v2458 = vadd.f32 0.0, %v2457
    %v2459 = vpop.f32.mrb[0].mxu0
    %v2460 = vadd.f32 0.0, %v2459
    %2461 = vdwg.mxu0
    %v2464 = vcombine.low %v2458, %v2460
    %v2466 = vunpack.c.l.s4 1983009808
    %v2467 = vunpack.c.0.s8 %v2466
    %v2468 = vlaneseq
    %v2469 = vshrl.u32 %v2468, 7
    %v2470 = vsub.s32 %v2467, %v2469
    %v2471 = vrot.slane %v2464, %v2470
    %v2473 = vadd.f32 %v2390, %v2471
    %v2474 = vxor.u32 %v2473, 2147483648
    %v2475 = vmul.f32 %v2474, 1.442695
    %v2476 = vpow.pop %v2475
    %v2477 = vadd.f32 %v2476, 1.0
    %v2478 = vrcp.pop %v2477
    %v2479 = vmul.f32 1.0, %v2478
    %2481 = vrot.lane.b32.xlu0 %v2473, 64
    %v2482 = vpop.permute.xlu0 %2481
    %v2483 = vrot.slane %v2482, 2
    %v2485 = vtanh.pop %v2483
    %v2486 = vmul.f32 %v2479, %v2294
    %v2487 = vmul.f32 %v2479, %v2485
    %2489 = vrot.lane.b32.xlu0 %v2487, 64
    %v2490 = vpop.permute.xlu0 %2489
    %v2492 = vadd.f32 %v2486, %v2490
    %v2493 = vtanh.pop %v2492
    %v2495 = vrot.slane %v2479, 2
    %2498 = vrot.lane.b32.xlu0 %v2493, 64
    %v2499 = vpop.permute.xlu0 %2498
    %v2501 = vmul.f32 %v2495, %v2499
    %v2503 = vsel %vm345, %v2501, 0
    %2505 = vmatprep.subr.mxu0 %v1967
    %2506 = vmatpush1.msra.mxu0 %v1966
    %2507 = vmatprep.subr.mxu0 %v1969
    %2508 = vmatpush1.msra.mxu0 %v1968
    %2509 = vmatprep.subr.mxu0 %v1971
    %2510 = vmatpush1.msra.mxu0 %v1970
    %2511 = vmatprep.subr.mxu0 %v1973
    %2512 = vmatpush1.msra.mxu0 %v1972
    %2513 = vmatprep.subr.mxu0 %v1975
    %2514 = vmatpush1.msra.mxu0 %v1974
    %2515 = vmatprep.subr.mxu0 %v1977
    %2516 = vmatpush1.msra.mxu0 %v1976
    %2517 = vmatprep.subr.mxu0 %v1979
    %2518 = vmatpush1.msra.mxu0 %v1978
    %2519 = vmatprep.subr.mxu0 %v1981
    %2520 = vmatpush1.msra.mxu0 %v1980
    %2521 = vmatprep.subr.mxu0 0.0
    %2522 = vmatpush1.msra.mxu0 0.0
    %2523 = vmatprep.subr.mxu0 0.0
    %2524 = vmatpush1.msra.mxu0 0.0
    %2525 = vmatprep.subr.mxu0 0.0
    %2526 = vmatpush1.msra.mxu0 0.0
    %2527 = vmatprep.subr.mxu0 0.0
    %2528 = vmatpush1.msra.mxu0 0.0
    %2529 = vmatprep.subr.mxu0 0.0
    %2530 = vmatpush1.msra.mxu0 0.0
    %2531 = vmatprep.subr.mxu0 0.0
    %2532 = vmatpush1.msra.mxu0 0.0
    %2533 = vmatprep.subr.mxu0 0.0
    %2534 = vmatpush1.msra.mxu0 0.0
    %2535 = vmatprep.subr.mxu0 0.0
    %2536 = vmatpush1.msra.mxu0 0.0
    %2537 = vmatprep.subr.mxu0 0.0
    %2538 = vmatpush1.msra.mxu0 0.0
    %2539 = vmatprep.subr.mxu0 0.0
    %2540 = vmatpush1.msra.mxu0 0.0
    %2541 = vmatprep.subr.mxu0 0.0
    %2542 = vmatpush1.msra.mxu0 0.0
    %2543 = vmatprep.subr.mxu0 0.0
    %2544 = vmatpush1.msra.mxu0 0.0
    %2545 = vmatprep.subr.mxu0 0.0
    %2546 = vmatpush1.msra.mxu0 0.0
    %2547 = vmatprep.subr.mxu0 0.0
    %2548 = vmatpush1.msra.mxu0 0.0
    %2549 = vmatprep.subr.mxu0 0.0
    %2550 = vmatpush1.msra.mxu0 0.0
    %2551 = vmatprep.subr.mxu0 0.0
    %2552 = vmatpush1.msra.mxu0 0.0
    %2553 = vmatprep.subr.mxu0 0.0
    %2554 = vmatpush1.msra.mxu0 0.0
    %2555 = vmatprep.subr.mxu0 0.0
    %2556 = vmatpush1.msra.mxu0 0.0
    %2557 = vmatprep.subr.mxu0 0.0
    %2558 = vmatpush1.msra.mxu0 0.0
    %2559 = vmatprep.subr.mxu0 0.0
    %2560 = vmatpush1.msra.mxu0 0.0
    %2561 = vmatprep.subr.mxu0 0.0
    %2562 = vmatpush1.msra.mxu0 0.0
    %2563 = vmatprep.subr.mxu0 0.0
    %2564 = vmatpush1.msra.mxu0 0.0
    %2565 = vmatprep.subr.mxu0 0.0
    %2566 = vmatpush1.msra.mxu0 0.0
    %2567 = vmatprep.subr.mxu0 0.0
    %2568 = vmatpush1.msra.mxu0 0.0
    %2569 = vmatprep.mubr.f32.mxu0 0.0
    %2570 = vmatmul.mubr.f32.gmra.mrb[0].mxu0 %v2503
    %v2571 = vpop.f32.mrb[0].mxu0
    %v2572 = vadd.f32 %v2099, %v2571
    %v2573 = vpop.f32.mrb[0].mxu0
    %v2574 = vadd.f32 %v2103, %v2573
    %2575 = vdwg.mxu0
    %v2578 = vcombine.low %v2572, %v2574
    %v2580 = vunpack.c.l.s4 1983009808
    %v2581 = vunpack.c.0.s8 %v2580
    %v2582 = vlaneseq
    %v2583 = vshrl.u32 %v2582, 7
    %v2584 = vsub.s32 %v2581, %v2583
    %v2585 = vrot.slane %v2578, %v2584
    %2587 = vst [vmem:[%s756] sm:$0xf] %v2585
    %v2588 = vld [vmem:[%s955] sm:$0xf]
    %2589 = vmatprep.subr.mxu0 %v1951
    %2590 = vmatpush1.msra.mxu0 %v1950
    %2591 = vmatprep.subr.mxu0 %v1953
    %2592 = vmatpush1.msra.mxu0 %v1952
    %2593 = vmatprep.subr.mxu0 %v1955
    %2594 = vmatpush1.msra.mxu0 %v1954
    %2595 = vmatprep.subr.mxu0 %v1957
    %2596 = vmatpush1.msra.mxu0 %v1956
    %2597 = vmatprep.subr.mxu0 %v1959
    %2598 = vmatpush1.msra.mxu0 %v1958
    %2599 = vmatprep.subr.mxu0 %v1961
    %2600 = vmatpush1.msra.mxu0 %v1960
    %2601 = vmatprep.subr.mxu0 %v1963
    %2602 = vmatpush1.msra.mxu0 %v1962
    %2603 = vmatprep.subr.mxu0 %v1965
    %2604 = vmatpush1.msra.mxu0 %v1964
    %2605 = vmatprep.subr.mxu0 0.0
    %2606 = vmatpush1.msra.mxu0 0.0
    %2607 = vmatprep.subr.mxu0 0.0
    %2608 = vmatpush1.msra.mxu0 0.0
    %2609 = vmatprep.subr.mxu0 0.0
    %2610 = vmatpush1.msra.mxu0 0.0
    %2611 = vmatprep.subr.mxu0 0.0
    %2612 = vmatpush1.msra.mxu0 0.0
    %2613 = vmatprep.subr.mxu0 0.0
    %2614 = vmatpush1.msra.mxu0 0.0
    %2615 = vmatprep.subr.mxu0 0.0
    %2616 = vmatpush1.msra.mxu0 0.0
    %2617 = vmatprep.subr.mxu0 0.0
    %2618 = vmatpush1.msra.mxu0 0.0
    %2619 = vmatprep.subr.mxu0 0.0
    %2620 = vmatpush1.msra.mxu0 0.0
    %2621 = vmatprep.subr.mxu0 0.0
    %2622 = vmatpush1.msra.mxu0 0.0
    %2623 = vmatprep.subr.mxu0 0.0
    %2624 = vmatpush1.msra.mxu0 0.0
    %2625 = vmatprep.subr.mxu0 0.0
    %2626 = vmatpush1.msra.mxu0 0.0
    %2627 = vmatprep.subr.mxu0 0.0
    %2628 = vmatpush1.msra.mxu0 0.0
    %2629 = vmatprep.subr.mxu0 0.0
    %2630 = vmatpush1.msra.mxu0 0.0
    %2631 = vmatprep.subr.mxu0 0.0
    %2632 = vmatpush1.msra.mxu0 0.0
    %2633 = vmatprep.subr.mxu0 0.0
    %2634 = vmatpush1.msra.mxu0 0.0
    %2635 = vmatprep.subr.mxu0 0.0
    %2636 = vmatpush1.msra.mxu0 0.0
    %2637 = vmatprep.subr.mxu0 0.0
    %2638 = vmatpush1.msra.mxu0 0.0
    %2639 = vmatprep.subr.mxu0 0.0
    %2640 = vmatpush1.msra.mxu0 0.0
    %2641 = vmatprep.subr.mxu0 0.0
    %2642 = vmatpush1.msra.mxu0 0.0
    %2643 = vmatprep.subr.mxu0 0.0
    %2644 = vmatpush1.msra.mxu0 0.0
    %2645 = vmatprep.subr.mxu0 0.0
    %2646 = vmatpush1.msra.mxu0 0.0
    %2647 = vmatprep.subr.mxu0 0.0
    %2648 = vmatpush1.msra.mxu0 0.0
    %2649 = vmatprep.subr.mxu0 0.0
    %2650 = vmatpush1.msra.mxu0 0.0
    %2651 = vmatprep.subr.mxu0 0.0
    %2652 = vmatpush1.msra.mxu0 0.0
    %2653 = vmatprep.mubr.f32.mxu0 0.0
    %2654 = vmatmul.mubr.f32.gmra.mrb[0].mxu0 %v2503
    %v2655 = vpop.f32.mrb[0].mxu0
    %v2656 = vadd.f32 0.0, %v2655
    %v2657 = vpop.f32.mrb[0].mxu0
    %v2658 = vadd.f32 0.0, %v2657
    %2659 = vdwg.mxu0
    %v2662 = vcombine.low %v2656, %v2658
    %v2664 = vunpack.c.l.s4 1983009808
    %v2665 = vunpack.c.0.s8 %v2664
    %v2666 = vlaneseq
    %v2667 = vshrl.u32 %v2666, 7
    %v2668 = vsub.s32 %v2665, %v2667
    %v2669 = vrot.slane %v2662, %v2668
    %v2671 = vadd.f32 %v2588, %v2669
    %v2672 = vxor.u32 %v2671, 2147483648
    %v2673 = vmul.f32 %v2672, 1.442695
    %v2674 = vpow.pop %v2673
    %v2675 = vadd.f32 %v2674, 1.0
    %v2676 = vrcp.pop %v2675
    %v2677 = vmul.f32 1.0, %v2676
    %2679 = vrot.lane.b32.xlu0 %v2671, 64
    %v2680 = vpop.permute.xlu0 %2679
    %v2681 = vrot.slane %v2680, 2
    %v2683 = vtanh.pop %v2681
    %v2684 = vmul.f32 %v2677, %v2492
    %v2685 = vmul.f32 %v2677, %v2683
    %2687 = vrot.lane.b32.xlu0 %v2685, 64
    %v2688 = vpop.permute.xlu0 %2687
    %v2690 = vadd.f32 %v2684, %v2688
    %v2691 = vtanh.pop %v2690
    %v2693 = vrot.slane %v2677, 2
    %2696 = vrot.lane.b32.xlu0 %v2691, 64
    %v2697 = vpop.permute.xlu0 %2696
    %v2699 = vmul.f32 %v2693, %v2697
    %v2701 = vsel %vm345, %v2699, 0
    %2703 = vmatprep.subr.mxu0 %v1967
    %2704 = vmatpush1.msra.mxu0 %v1966
    %2705 = vmatprep.subr.mxu0 %v1969
    %2706 = vmatpush1.msra.mxu0 %v1968
    %2707 = vmatprep.subr.mxu0 %v1971
    %2708 = vmatpush1.msra.mxu0 %v1970
    %2709 = vmatprep.subr.mxu0 %v1973
    %2710 = vmatpush1.msra.mxu0 %v1972
    %2711 = vmatprep.subr.mxu0 %v1975
    %2712 = vmatpush1.msra.mxu0 %v1974
    %2713 = vmatprep.subr.mxu0 %v1977
    %2714 = vmatpush1.msra.mxu0 %v1976
    %2715 = vmatprep.subr.mxu0 %v1979
    %2716 = vmatpush1.msra.mxu0 %v1978
    %2717 = vmatprep.subr.mxu0 %v1981
    %2718 = vmatpush1.msra.mxu0 %v1980
    %2719 = vmatprep.subr.mxu0 0.0
    %2720 = vmatpush1.msra.mxu0 0.0
    %2721 = vmatprep.subr.mxu0 0.0
    %2722 = vmatpush1.msra.mxu0 0.0
    %2723 = vmatprep.subr.mxu0 0.0
    %2724 = vmatpush1.msra.mxu0 0.0
    %2725 = vmatprep.subr.mxu0 0.0
    %2726 = vmatpush1.msra.mxu0 0.0
    %2727 = vmatprep.subr.mxu0 0.0
    %2728 = vmatpush1.msra.mxu0 0.0
    %2729 = vmatprep.subr.mxu0 0.0
    %2730 = vmatpush1.msra.mxu0 0.0
    %2731 = vmatprep.subr.mxu0 0.0
    %2732 = vmatpush1.msra.mxu0 0.0
    %2733 = vmatprep.subr.mxu0 0.0
    %2734 = vmatpush1.msra.mxu0 0.0
    %2735 = vmatprep.subr.mxu0 0.0
    %2736 = vmatpush1.msra.mxu0 0.0
    %2737 = vmatprep.subr.mxu0 0.0
    %2738 = vmatpush1.msra.mxu0 0.0
    %2739 = vmatprep.subr.mxu0 0.0
    %2740 = vmatpush1.msra.mxu0 0.0
    %2741 = vmatprep.subr.mxu0 0.0
    %2742 = vmatpush1.msra.mxu0 0.0
    %2743 = vmatprep.subr.mxu0 0.0
    %2744 = vmatpush1.msra.mxu0 0.0
    %2745 = vmatprep.subr.mxu0 0.0
    %2746 = vmatpush1.msra.mxu0 0.0
    %2747 = vmatprep.subr.mxu0 0.0
    %2748 = vmatpush1.msra.mxu0 0.0
    %2749 = vmatprep.subr.mxu0 0.0
    %2750 = vmatpush1.msra.mxu0 0.0
    %2751 = vmatprep.subr.mxu0 0.0
    %2752 = vmatpush1.msra.mxu0 0.0
    %2753 = vmatprep.subr.mxu0 0.0
    %2754 = vmatpush1.msra.mxu0 0.0
    %2755 = vmatprep.subr.mxu0 0.0
    %2756 = vmatpush1.msra.mxu0 0.0
    %2757 = vmatprep.subr.mxu0 0.0
    %2758 = vmatpush1.msra.mxu0 0.0
    %2759 = vmatprep.subr.mxu0 0.0
    %2760 = vmatpush1.msra.mxu0 0.0
    %2761 = vmatprep.subr.mxu0 0.0
    %2762 = vmatpush1.msra.mxu0 0.0
    %2763 = vmatprep.subr.mxu0 0.0
    %2764 = vmatpush1.msra.mxu0 0.0
    %2765 = vmatprep.subr.mxu0 0.0
    %2766 = vmatpush1.msra.mxu0 0.0
    %2767 = vmatprep.mubr.f32.mxu0 0.0
    %2768 = vmatmul.mubr.f32.gmra.mrb[0].mxu0 %v2701
    %v2769 = vpop.f32.mrb[0].mxu0
    %v2770 = vadd.f32 %v2099, %v2769
    %v2771 = vpop.f32.mrb[0].mxu0
    %v2772 = vadd.f32 %v2103, %v2771
    %2773 = vdwg.mxu0
    %v2776 = vcombine.low %v2770, %v2772
    %v2778 = vunpack.c.l.s4 1983009808
    %v2779 = vunpack.c.0.s8 %v2778
    %v2780 = vlaneseq
    %v2781 = vshrl.u32 %v2780, 7
    %v2782 = vsub.s32 %v2779, %v2781
    %v2783 = vrot.slane %v2776, %v2782
    %2785 = vst [vmem:[%s955] sm:$0xf] %v2783
    %v2786 = vld [vmem:[%s1154] sm:$0xf]
    %2787 = vmatprep.subr.mxu0 %v1951
    %2788 = vmatpush1.msra.mxu0 %v1950
    %2789 = vmatprep.subr.mxu0 %v1953
    %2790 = vmatpush1.msra.mxu0 %v1952
    %2791 = vmatprep.subr.mxu0 %v1955
    %2792 = vmatpush1.msra.mxu0 %v1954
    %2793 = vmatprep.subr.mxu0 %v1957
    %2794 = vmatpush1.msra.mxu0 %v1956
    %2795 = vmatprep.subr.mxu0 %v1959
    %2796 = vmatpush1.msra.mxu0 %v1958
    %2797 = vmatprep.subr.mxu0 %v1961
    %2798 = vmatpush1.msra.mxu0 %v1960
    %2799 = vmatprep.subr.mxu0 %v1963
    %2800 = vmatpush1.msra.mxu0 %v1962
    %2801 = vmatprep.subr.mxu0 %v1965
    %2802 = vmatpush1.msra.mxu0 %v1964
    %2803 = vmatprep.subr.mxu0 0.0
    %2804 = vmatpush1.msra.mxu0 0.0
    %2805 = vmatprep.subr.mxu0 0.0
    %2806 = vmatpush1.msra.mxu0 0.0
    %2807 = vmatprep.subr.mxu0 0.0
    %2808 = vmatpush1.msra.mxu0 0.0
    %2809 = vmatprep.subr.mxu0 0.0
    %2810 = vmatpush1.msra.mxu0 0.0
    %2811 = vmatprep.subr.mxu0 0.0
    %2812 = vmatpush1.msra.mxu0 0.0
    %2813 = vmatprep.subr.mxu0 0.0
    %2814 = vmatpush1.msra.mxu0 0.0
    %2815 = vmatprep.subr.mxu0 0.0
    %2816 = vmatpush1.msra.mxu0 0.0
    %2817 = vmatprep.subr.mxu0 0.0
    %2818 = vmatpush1.msra.mxu0 0.0
    %2819 = vmatprep.subr.mxu0 0.0
    %2820 = vmatpush1.msra.mxu0 0.0
    %2821 = vmatprep.subr.mxu0 0.0
    %2822 = vmatpush1.msra.mxu0 0.0
    %2823 = vmatprep.subr.mxu0 0.0
    %2824 = vmatpush1.msra.mxu0 0.0
    %2825 = vmatprep.subr.mxu0 0.0
    %2826 = vmatpush1.msra.mxu0 0.0
    %2827 = vmatprep.subr.mxu0 0.0
    %2828 = vmatpush1.msra.mxu0 0.0
    %2829 = vmatprep.subr.mxu0 0.0
    %2830 = vmatpush1.msra.mxu0 0.0
    %2831 = vmatprep.subr.mxu0 0.0
    %2832 = vmatpush1.msra.mxu0 0.0
    %2833 = vmatprep.subr.mxu0 0.0
    %2834 = vmatpush1.msra.mxu0 0.0
    %2835 = vmatprep.subr.mxu0 0.0
    %2836 = vmatpush1.msra.mxu0 0.0
    %2837 = vmatprep.subr.mxu0 0.0
    %2838 = vmatpush1.msra.mxu0 0.0
    %2839 = vmatprep.subr.mxu0 0.0
    %2840 = vmatpush1.msra.mxu0 0.0
    %2841 = vmatprep.subr.mxu0 0.0
    %2842 = vmatpush1.msra.mxu0 0.0
    %2843 = vmatprep.subr.mxu0 0.0
    %2844 = vmatpush1.msra.mxu0 0.0
    %2845 = vmatprep.subr.mxu0 0.0
    %2846 = vmatpush1.msra.mxu0 0.0
    %2847 = vmatprep.subr.mxu0 0.0
    %2848 = vmatpush1.msra.mxu0 0.0
    %2849 = vmatprep.subr.mxu0 0.0
    %2850 = vmatpush1.msra.mxu0 0.0
    %2851 = vmatprep.mubr.f32.mxu0 0.0
    %2852 = vmatmul.mubr.f32.gmra.mrb[0].mxu0 %v2701
    %v2853 = vpop.f32.mrb[0].mxu0
    %v2854 = vadd.f32 0.0, %v2853
    %v2855 = vpop.f32.mrb[0].mxu0
    %v2856 = vadd.f32 0.0, %v2855
    %2857 = vdwg.mxu0
    %v2860 = vcombine.low %v2854, %v2856
    %v2862 = vunpack.c.l.s4 1983009808
    %v2863 = vunpack.c.0.s8 %v2862
    %v2864 = vlaneseq
    %v2865 = vshrl.u32 %v2864, 7
    %v2866 = vsub.s32 %v2863, %v2865
    %v2867 = vrot.slane %v2860, %v2866
    %v2869 = vadd.f32 %v2786, %v2867
    %v2870 = vxor.u32 %v2869, 2147483648
    %v2871 = vmul.f32 %v2870, 1.442695
    %v2872 = vpow.pop %v2871
    %v2873 = vadd.f32 %v2872, 1.0
    %v2874 = vrcp.pop %v2873
    %v2875 = vmul.f32 1.0, %v2874
    %2877 = vrot.lane.b32.xlu0 %v2869, 64
    %v2878 = vpop.permute.xlu0 %2877
    %v2879 = vrot.slane %v2878, 2
    %v2881 = vtanh.pop %v2879
    %v2882 = vmul.f32 %v2875, %v2690
    %v2883 = vmul.f32 %v2875, %v2881
    %2885 = vrot.lane.b32.xlu0 %v2883, 64
    %v2886 = vpop.permute.xlu0 %2885
    %v2888 = vadd.f32 %v2882, %v2886
    %v2889 = vtanh.pop %v2888
    %v2891 = vrot.slane %v2875, 2
    %2894 = vrot.lane.b32.xlu0 %v2889, 64
    %v2895 = vpop.permute.xlu0 %2894
    %v2897 = vmul.f32 %v2891, %v2895
    %v2899 = vsel %vm345, %v2897, 0
    %2901 = vmatprep.subr.mxu0 %v1967
    %2902 = vmatpush1.msra.mxu0 %v1966
    %2903 = vmatprep.subr.mxu0 %v1969
    %2904 = vmatpush1.msra.mxu0 %v1968
    %2905 = vmatprep.subr.mxu0 %v1971
    %2906 = vmatpush1.msra.mxu0 %v1970
    %2907 = vmatprep.subr.mxu0 %v1973
    %2908 = vmatpush1.msra.mxu0 %v1972
    %2909 = vmatprep.subr.mxu0 %v1975
    %2910 = vmatpush1.msra.mxu0 %v1974
    %2911 = vmatprep.subr.mxu0 %v1977
    %2912 = vmatpush1.msra.mxu0 %v1976
    %2913 = vmatprep.subr.mxu0 %v1979
    %2914 = vmatpush1.msra.mxu0 %v1978
    %2915 = vmatprep.subr.mxu0 %v1981
    %2916 = vmatpush1.msra.mxu0 %v1980
    %2917 = vmatprep.subr.mxu0 0.0
    %2918 = vmatpush1.msra.mxu0 0.0
    %2919 = vmatprep.subr.mxu0 0.0
    %2920 = vmatpush1.msra.mxu0 0.0
    %2921 = vmatprep.subr.mxu0 0.0
    %2922 = vmatpush1.msra.mxu0 0.0
    %2923 = vmatprep.subr.mxu0 0.0
    %2924 = vmatpush1.msra.mxu0 0.0
    %2925 = vmatprep.subr.mxu0 0.0
    %2926 = vmatpush1.msra.mxu0 0.0
    %2927 = vmatprep.subr.mxu0 0.0
    %2928 = vmatpush1.msra.mxu0 0.0
    %2929 = vmatprep.subr.mxu0 0.0
    %2930 = vmatpush1.msra.mxu0 0.0
    %2931 = vmatprep.subr.mxu0 0.0
    %2932 = vmatpush1.msra.mxu0 0.0
    %2933 = vmatprep.subr.mxu0 0.0
    %2934 = vmatpush1.msra.mxu0 0.0
    %2935 = vmatprep.subr.mxu0 0.0
    %2936 = vmatpush1.msra.mxu0 0.0
    %2937 = vmatprep.subr.mxu0 0.0
    %2938 = vmatpush1.msra.mxu0 0.0
    %2939 = vmatprep.subr.mxu0 0.0
    %2940 = vmatpush1.msra.mxu0 0.0
    %2941 = vmatprep.subr.mxu0 0.0
    %2942 = vmatpush1.msra.mxu0 0.0
    %2943 = vmatprep.subr.mxu0 0.0
    %2944 = vmatpush1.msra.mxu0 0.0
    %2945 = vmatprep.subr.mxu0 0.0
    %2946 = vmatpush1.msra.mxu0 0.0
    %2947 = vmatprep.subr.mxu0 0.0
    %2948 = vmatpush1.msra.mxu0 0.0
    %2949 = vmatprep.subr.mxu0 0.0
    %2950 = vmatpush1.msra.mxu0 0.0
    %2951 = vmatprep.subr.mxu0 0.0
    %2952 = vmatpush1.msra.mxu0 0.0
    %2953 = vmatprep.subr.mxu0 0.0
    %2954 = vmatpush1.msra.mxu0 0.0
    %2955 = vmatprep.subr.mxu0 0.0
    %2956 = vmatpush1.msra.mxu0 0.0
    %2957 = vmatprep.subr.mxu0 0.0
    %2958 = vmatpush1.msra.mxu0 0.0
    %2959 = vmatprep.subr.mxu0 0.0
    %2960 = vmatpush1.msra.mxu0 0.0
    %2961 = vmatprep.subr.mxu0 0.0
    %2962 = vmatpush1.msra.mxu0 0.0
    %2963 = vmatprep.subr.mxu0 0.0
    %2964 = vmatpush1.msra.mxu0 0.0
    %2965 = vmatprep.mubr.f32.mxu0 0.0
    %2966 = vmatmul.mubr.f32.gmra.mrb[0].mxu0 %v2899
    %v2967 = vpop.f32.mrb[0].mxu0
    %v2968 = vadd.f32 %v2099, %v2967
    %v2969 = vpop.f32.mrb[0].mxu0
    %v2970 = vadd.f32 %v2103, %v2969
    %2971 = vdwg.mxu0
    %v2974 = vcombine.low %v2968, %v2970
    %v2976 = vunpack.c.l.s4 1983009808
    %v2977 = vunpack.c.0.s8 %v2976
    %v2978 = vlaneseq
    %v2979 = vshrl.u32 %v2978, 7
    %v2980 = vsub.s32 %v2977, %v2979
    %v2981 = vrot.slane %v2974, %v2980
    %2983 = vst [vmem:[%s1154] sm:$0xf] %v2981
    %v2984 = vld [vmem:[%s1353] sm:$0xf]
    %2985 = vmatprep.subr.mxu0 %v1951
    %2986 = vmatpush1.msra.mxu0 %v1950
    %2987 = vmatprep.subr.mxu0 %v1953
    %2988 = vmatpush1.msra.mxu0 %v1952
    %2989 = vmatprep.subr.mxu0 %v1955
    %2990 = vmatpush1.msra.mxu0 %v1954
    %2991 = vmatprep.subr.mxu0 %v1957
    %2992 = vmatpush1.msra.mxu0 %v1956
    %2993 = vmatprep.subr.mxu0 %v1959
    %2994 = vmatpush1.msra.mxu0 %v1958
    %2995 = vmatprep.subr.mxu0 %v1961
    %2996 = vmatpush1.msra.mxu0 %v1960
    %2997 = vmatprep.subr.mxu0 %v1963
    %2998 = vmatpush1.msra.mxu0 %v1962
    %2999 = vmatprep.subr.mxu0 %v1965
    %3000 = vmatpush1.msra.mxu0 %v1964
    %3001 = vmatprep.subr.mxu0 0.0
    %3002 = vmatpush1.msra.mxu0 0.0
    %3003 = vmatprep.subr.mxu0 0.0
    %3004 = vmatpush1.msra.mxu0 0.0
    %3005 = vmatprep.subr.mxu0 0.0
    %3006 = vmatpush1.msra.mxu0 0.0
    %3007 = vmatprep.subr.mxu0 0.0
    %3008 = vmatpush1.msra.mxu0 0.0
    %3009 = vmatprep.subr.mxu0 0.0
    %3010 = vmatpush1.msra.mxu0 0.0
    %3011 = vmatprep.subr.mxu0 0.0
    %3012 = vmatpush1.msra.mxu0 0.0
    %3013 = vmatprep.subr.mxu0 0.0
    %3014 = vmatpush1.msra.mxu0 0.0
    %3015 = vmatprep.subr.mxu0 0.0
    %3016 = vmatpush1.msra.mxu0 0.0
    %3017 = vmatprep.subr.mxu0 0.0
    %3018 = vmatpush1.msra.mxu0 0.0
    %3019 = vmatprep.subr.mxu0 0.0
    %3020 = vmatpush1.msra.mxu0 0.0
    %3021 = vmatprep.subr.mxu0 0.0
    %3022 = vmatpush1.msra.mxu0 0.0
    %3023 = vmatprep.subr.mxu0 0.0
    %3024 = vmatpush1.msra.mxu0 0.0
    %3025 = vmatprep.subr.mxu0 0.0
    %3026 = vmatpush1.msra.mxu0 0.0
    %3027 = vmatprep.subr.mxu0 0.0
    %3028 = vmatpush1.msra.mxu0 0.0
    %3029 = vmatprep.subr.mxu0 0.0
    %3030 = vmatpush1.msra.mxu0 0.0
    %3031 = vmatprep.subr.mxu0 0.0
    %3032 = vmatpush1.msra.mxu0 0.0
    %3033 = vmatprep.subr.mxu0 0.0
    %3034 = vmatpush1.msra.mxu0 0.0
    %3035 = vmatprep.subr.mxu0 0.0
    %3036 = vmatpush1.msra.mxu0 0.0
    %3037 = vmatprep.subr.mxu0 0.0
    %3038 = vmatpush1.msra.mxu0 0.0
    %3039 = vmatprep.subr.mxu0 0.0
    %3040 = vmatpush1.msra.mxu0 0.0
    %3041 = vmatprep.subr.mxu0 0.0
    %3042 = vmatpush1.msra.mxu0 0.0
    %3043 = vmatprep.subr.mxu0 0.0
    %3044 = vmatpush1.msra.mxu0 0.0
    %3045 = vmatprep.subr.mxu0 0.0
    %3046 = vmatpush1.msra.mxu0 0.0
    %3047 = vmatprep.subr.mxu0 0.0
    %3048 = vmatpush1.msra.mxu0 0.0
    %3049 = vmatprep.mubr.f32.mxu0 0.0
    %3050 = vmatmul.mubr.f32.gmra.mrb[0].mxu0 %v2899
    %v3051 = vpop.f32.mrb[0].mxu0
    %v3052 = vadd.f32 0.0, %v3051
    %v3053 = vpop.f32.mrb[0].mxu0
    %v3054 = vadd.f32 0.0, %v3053
    %3055 = vdwg.mxu0
    %v3058 = vcombine.low %v3052, %v3054
    %v3060 = vunpack.c.l.s4 1983009808
    %v3061 = vunpack.c.0.s8 %v3060
    %v3062 = vlaneseq
    %v3063 = vshrl.u32 %v3062, 7
    %v3064 = vsub.s32 %v3061, %v3063
    %v3065 = vrot.slane %v3058, %v3064
    %v3067 = vadd.f32 %v2984, %v3065
    %v3068 = vxor.u32 %v3067, 2147483648
    %v3069 = vmul.f32 %v3068, 1.442695
    %v3070 = vpow.pop %v3069
    %v3071 = vadd.f32 %v3070, 1.0
    %v3072 = vrcp.pop %v3071
    %v3073 = vmul.f32 1.0, %v3072
    %3075 = vrot.lane.b32.xlu0 %v3067, 64
    %v3076 = vpop.permute.xlu0 %3075
    %v3077 = vrot.slane %v3076, 2
    %v3079 = vtanh.pop %v3077
    %v3080 = vmul.f32 %v3073, %v2888
    %v3081 = vmul.f32 %v3073, %v3079
    %3083 = vrot.lane.b32.xlu0 %v3081, 64
    %v3084 = vpop.permute.xlu0 %3083
    %v3086 = vadd.f32 %v3080, %v3084
    %v3087 = vtanh.pop %v3086
    %v3089 = vrot.slane %v3073, 2
    %3092 = vrot.lane.b32.xlu0 %v3087, 64
    %v3093 = vpop.permute.xlu0 %3092
    %v3095 = vmul.f32 %v3089, %v3093
    %v3097 = vsel %vm345, %v3095, 0
    %3099 = vmatprep.subr.mxu0 %v1967
    %3100 = vmatpush1.msra.mxu0 %v1966
    %3101 = vmatprep.subr.mxu0 %v1969
    %3102 = vmatpush1.msra.mxu0 %v1968
    %3103 = vmatprep.subr.mxu0 %v1971
    %3104 = vmatpush1.msra.mxu0 %v1970
    %3105 = vmatprep.subr.mxu0 %v1973
    %3106 = vmatpush1.msra.mxu0 %v1972
    %3107 = vmatprep.subr.mxu0 %v1975
    %3108 = vmatpush1.msra.mxu0 %v1974
    %3109 = vmatprep.subr.mxu0 %v1977
    %3110 = vmatpush1.msra.mxu0 %v1976
    %3111 = vmatprep.subr.mxu0 %v1979
    %3112 = vmatpush1.msra.mxu0 %v1978
    %3113 = vmatprep.subr.mxu0 %v1981
    %3114 = vmatpush1.msra.mxu0 %v1980
    %3115 = vmatprep.subr.mxu0 0.0
    %3116 = vmatpush1.msra.mxu0 0.0
    %3117 = vmatprep.subr.mxu0 0.0
    %3118 = vmatpush1.msra.mxu0 0.0
    %3119 = vmatprep.subr.mxu0 0.0
    %3120 = vmatpush1.msra.mxu0 0.0
    %3121 = vmatprep.subr.mxu0 0.0
    %3122 = vmatpush1.msra.mxu0 0.0
    %3123 = vmatprep.subr.mxu0 0.0
    %3124 = vmatpush1.msra.mxu0 0.0
    %3125 = vmatprep.subr.mxu0 0.0
    %3126 = vmatpush1.msra.mxu0 0.0
    %3127 = vmatprep.subr.mxu0 0.0
    %3128 = vmatpush1.msra.mxu0 0.0
    %3129 = vmatprep.subr.mxu0 0.0
    %3130 = vmatpush1.msra.mxu0 0.0
    %3131 = vmatprep.subr.mxu0 0.0
    %3132 = vmatpush1.msra.mxu0 0.0
    %3133 = vmatprep.subr.mxu0 0.0
    %3134 = vmatpush1.msra.mxu0 0.0
    %3135 = vmatprep.subr.mxu0 0.0
    %3136 = vmatpush1.msra.mxu0 0.0
    %3137 = vmatprep.subr.mxu0 0.0
    %3138 = vmatpush1.msra.mxu0 0.0
    %3139 = vmatprep.subr.mxu0 0.0
    %3140 = vmatpush1.msra.mxu0 0.0
    %3141 = vmatprep.subr.mxu0 0.0
    %3142 = vmatpush1.msra.mxu0 0.0
    %3143 = vmatprep.subr.mxu0 0.0
    %3144 = vmatpush1.msra.mxu0 0.0
    %3145 = vmatprep.subr.mxu0 0.0
    %3146 = vmatpush1.msra.mxu0 0.0
    %3147 = vmatprep.subr.mxu0 0.0
    %3148 = vmatpush1.msra.mxu0 0.0
    %3149 = vmatprep.subr.mxu0 0.0
    %3150 = vmatpush1.msra.mxu0 0.0
    %3151 = vmatprep.subr.mxu0 0.0
    %3152 = vmatpush1.msra.mxu0 0.0
    %3153 = vmatprep.subr.mxu0 0.0
    %3154 = vmatpush1.msra.mxu0 0.0
    %3155 = vmatprep.subr.mxu0 0.0
    %3156 = vmatpush1.msra.mxu0 0.0
    %3157 = vmatprep.subr.mxu0 0.0
    %3158 = vmatpush1.msra.mxu0 0.0
    %3159 = vmatprep.subr.mxu0 0.0
    %3160 = vmatpush1.msra.mxu0 0.0
    %3161 = vmatprep.subr.mxu0 0.0
    %3162 = vmatpush1.msra.mxu0 0.0
    %3163 = vmatprep.mubr.f32.mxu0 0.0
    %3164 = vmatmul.mubr.f32.gmra.mrb[0].mxu0 %v3097
    %v3165 = vpop.f32.mrb[0].mxu0
    %v3166 = vadd.f32 %v2099, %v3165
    %v3167 = vpop.f32.mrb[0].mxu0
    %v3168 = vadd.f32 %v2103, %v3167
    %3169 = vdwg.mxu0
    %v3172 = vcombine.low %v3166, %v3168
    %v3174 = vunpack.c.l.s4 1983009808
    %v3175 = vunpack.c.0.s8 %v3174
    %v3176 = vlaneseq
    %v3177 = vshrl.u32 %v3176, 7
    %v3178 = vsub.s32 %v3175, %v3177
    %v3179 = vrot.slane %v3172, %v3178
    %3181 = vst [vmem:[%s1353] sm:$0xf] %v3179
    %v3182 = vld [vmem:[%s1552] sm:$0xf]
    %3183 = vmatprep.subr.mxu0 %v1951
    %3184 = vmatpush1.msra.mxu0 %v1950
    %3185 = vmatprep.subr.mxu0 %v1953
    %3186 = vmatpush1.msra.mxu0 %v1952
    %3187 = vmatprep.subr.mxu0 %v1955
    %3188 = vmatpush1.msra.mxu0 %v1954
    %3189 = vmatprep.subr.mxu0 %v1957
    %3190 = vmatpush1.msra.mxu0 %v1956
    %3191 = vmatprep.subr.mxu0 %v1959
    %3192 = vmatpush1.msra.mxu0 %v1958
    %3193 = vmatprep.subr.mxu0 %v1961
    %3194 = vmatpush1.msra.mxu0 %v1960
    %3195 = vmatprep.subr.mxu0 %v1963
    %3196 = vmatpush1.msra.mxu0 %v1962
    %3197 = vmatprep.subr.mxu0 %v1965
    %3198 = vmatpush1.msra.mxu0 %v1964
    %3199 = vmatprep.subr.mxu0 0.0
    %3200 = vmatpush1.msra.mxu0 0.0
    %3201 = vmatprep.subr.mxu0 0.0
    %3202 = vmatpush1.msra.mxu0 0.0
    %3203 = vmatprep.subr.mxu0 0.0
    %3204 = vmatpush1.msra.mxu0 0.0
    %3205 = vmatprep.subr.mxu0 0.0
    %3206 = vmatpush1.msra.mxu0 0.0
    %3207 = vmatprep.subr.mxu0 0.0
    %3208 = vmatpush1.msra.mxu0 0.0
    %3209 = vmatprep.subr.mxu0 0.0
    %3210 = vmatpush1.msra.mxu0 0.0
    %3211 = vmatprep.subr.mxu0 0.0
    %3212 = vmatpush1.msra.mxu0 0.0
    %3213 = vmatprep.subr.mxu0 0.0
    %3214 = vmatpush1.msra.mxu0 0.0
    %3215 = vmatprep.subr.mxu0 0.0
    %3216 = vmatpush1.msra.mxu0 0.0
    %3217 = vmatprep.subr.mxu0 0.0
    %3218 = vmatpush1.msra.mxu0 0.0
    %3219 = vmatprep.subr.mxu0 0.0
    %3220 = vmatpush1.msra.mxu0 0.0
    %3221 = vmatprep.subr.mxu0 0.0
    %3222 = vmatpush1.msra.mxu0 0.0
    %3223 = vmatprep.subr.mxu0 0.0
    %3224 = vmatpush1.msra.mxu0 0.0
    %3225 = vmatprep.subr.mxu0 0.0
    %3226 = vmatpush1.msra.mxu0 0.0
    %3227 = vmatprep.subr.mxu0 0.0
    %3228 = vmatpush1.msra.mxu0 0.0
    %3229 = vmatprep.subr.mxu0 0.0
    %3230 = vmatpush1.msra.mxu0 0.0
    %3231 = vmatprep.subr.mxu0 0.0
    %3232 = vmatpush1.msra.mxu0 0.0
    %3233 = vmatprep.subr.mxu0 0.0
    %3234 = vmatpush1.msra.mxu0 0.0
    %3235 = vmatprep.subr.mxu0 0.0
    %3236 = vmatpush1.msra.mxu0 0.0
    %3237 = vmatprep.subr.mxu0 0.0
    %3238 = vmatpush1.msra.mxu0 0.0
    %3239 = vmatprep.subr.mxu0 0.0
    %3240 = vmatpush1.msra.mxu0 0.0
    %3241 = vmatprep.subr.mxu0 0.0
    %3242 = vmatpush1.msra.mxu0 0.0
    %3243 = vmatprep.subr.mxu0 0.0
    %3244 = vmatpush1.msra.mxu0 0.0
    %3245 = vmatprep.subr.mxu0 0.0
    %3246 = vmatpush1.msra.mxu0 0.0
    %3247 = vmatprep.mubr.f32.mxu0 0.0
    %3248 = vmatmul.mubr.f32.gmra.mrb[0].mxu0 %v3097
    %v3249 = vpop.f32.mrb[0].mxu0
    %v3250 = vadd.f32 0.0, %v3249
    %v3251 = vpop.f32.mrb[0].mxu0
    %v3252 = vadd.f32 0.0, %v3251
    %3253 = vdwg.mxu0
    %v3256 = vcombine.low %v3250, %v3252
    %v3258 = vunpack.c.l.s4 1983009808
    %v3259 = vunpack.c.0.s8 %v3258
    %v3260 = vlaneseq
    %v3261 = vshrl.u32 %v3260, 7
    %v3262 = vsub.s32 %v3259, %v3261
    %v3263 = vrot.slane %v3256, %v3262
    %v3265 = vadd.f32 %v3182, %v3263
    %v3266 = vxor.u32 %v3265, 2147483648
    %v3267 = vmul.f32 %v3266, 1.442695
    %v3268 = vpow.pop %v3267
    %v3269 = vadd.f32 %v3268, 1.0
    %v3270 = vrcp.pop %v3269
    %v3271 = vmul.f32 1.0, %v3270
    %3273 = vrot.lane.b32.xlu0 %v3265, 64
    %v3274 = vpop.permute.xlu0 %3273
    %v3275 = vrot.slane %v3274, 2
    %v3277 = vtanh.pop %v3275
    %v3278 = vmul.f32 %v3271, %v3086
    %v3279 = vmul.f32 %v3271, %v3277
    %3281 = vrot.lane.b32.xlu0 %v3279, 64
    %v3282 = vpop.permute.xlu0 %3281
    %v3284 = vadd.f32 %v3278, %v3282
    %v3285 = vtanh.pop %v3284
    %v3287 = vrot.slane %v3271, 2
    %3290 = vrot.lane.b32.xlu0 %v3285, 64
    %v3291 = vpop.permute.xlu0 %3290
    %v3293 = vmul.f32 %v3287, %v3291
    %v3295 = vsel %vm345, %v3293, 0
    %3297 = vmatprep.subr.mxu0 %v1967
    %3298 = vmatpush1.msra.mxu0 %v1966
    %3299 = vmatprep.subr.mxu0 %v1969
    %3300 = vmatpush1.msra.mxu0 %v1968
    %3301 = vmatprep.subr.mxu0 %v1971
    %3302 = vmatpush1.msra.mxu0 %v1970
    %3303 = vmatprep.subr.mxu0 %v1973
    %3304 = vmatpush1.msra.mxu0 %v1972
    %3305 = vmatprep.subr.mxu0 %v1975
    %3306 = vmatpush1.msra.mxu0 %v1974
    %3307 = vmatprep.subr.mxu0 %v1977
    %3308 = vmatpush1.msra.mxu0 %v1976
    %3309 = vmatprep.subr.mxu0 %v1979
    %3310 = vmatpush1.msra.mxu0 %v1978
    %3311 = vmatprep.subr.mxu0 %v1981
    %3312 = vmatpush1.msra.mxu0 %v1980
    %3313 = vmatprep.subr.mxu0 0.0
    %3314 = vmatpush1.msra.mxu0 0.0
    %3315 = vmatprep.subr.mxu0 0.0
    %3316 = vmatpush1.msra.mxu0 0.0
    %3317 = vmatprep.subr.mxu0 0.0
    %3318 = vmatpush1.msra.mxu0 0.0
    %3319 = vmatprep.subr.mxu0 0.0
    %3320 = vmatpush1.msra.mxu0 0.0
    %3321 = vmatprep.subr.mxu0 0.0
    %3322 = vmatpush1.msra.mxu0 0.0
    %3323 = vmatprep.subr.mxu0 0.0
    %3324 = vmatpush1.msra.mxu0 0.0
    %3325 = vmatprep.subr.mxu0 0.0
    %3326 = vmatpush1.msra.mxu0 0.0
    %3327 = vmatprep.subr.mxu0 0.0
    %3328 = vmatpush1.msra.mxu0 0.0
    %3329 = vmatprep.subr.mxu0 0.0
    %3330 = vmatpush1.msra.mxu0 0.0
    %3331 = vmatprep.subr.mxu0 0.0
    %3332 = vmatpush1.msra.mxu0 0.0
    %3333 = vmatprep.subr.mxu0 0.0
    %3334 = vmatpush1.msra.mxu0 0.0
    %3335 = vmatprep.subr.mxu0 0.0
    %3336 = vmatpush1.msra.mxu0 0.0
    %3337 = vmatprep.subr.mxu0 0.0
    %3338 = vmatpush1.msra.mxu0 0.0
    %3339 = vmatprep.subr.mxu0 0.0
    %3340 = vmatpush1.msra.mxu0 0.0
    %3341 = vmatprep.subr.mxu0 0.0
    %3342 = vmatpush1.msra.mxu0 0.0
    %3343 = vmatprep.subr.mxu0 0.0
    %3344 = vmatpush1.msra.mxu0 0.0
    %3345 = vmatprep.subr.mxu0 0.0
    %3346 = vmatpush1.msra.mxu0 0.0
    %3347 = vmatprep.subr.mxu0 0.0
    %3348 = vmatpush1.msra.mxu0 0.0
    %3349 = vmatprep.subr.mxu0 0.0
    %3350 = vmatpush1.msra.mxu0 0.0
    %3351 = vmatprep.subr.mxu0 0.0
    %3352 = vmatpush1.msra.mxu0 0.0
    %3353 = vmatprep.subr.mxu0 0.0
    %3354 = vmatpush1.msra.mxu0 0.0
    %3355 = vmatprep.subr.mxu0 0.0
    %3356 = vmatpush1.msra.mxu0 0.0
    %3357 = vmatprep.subr.mxu0 0.0
    %3358 = vmatpush1.msra.mxu0 0.0
    %3359 = vmatprep.subr.mxu0 0.0
    %3360 = vmatpush1.msra.mxu0 0.0
    %3361 = vmatprep.mubr.f32.mxu0 0.0
    %3362 = vmatmul.mubr.f32.gmra.mrb[0].mxu0 %v3295
    %v3363 = vpop.f32.mrb[0].mxu0
    %v3364 = vadd.f32 %v2099, %v3363
    %v3365 = vpop.f32.mrb[0].mxu0
    %v3366 = vadd.f32 %v2103, %v3365
    %3367 = vdwg.mxu0
    %v3370 = vcombine.low %v3364, %v3366
    %v3372 = vunpack.c.l.s4 1983009808
    %v3373 = vunpack.c.0.s8 %v3372
    %v3374 = vlaneseq
    %v3375 = vshrl.u32 %v3374, 7
    %v3376 = vsub.s32 %v3373, %v3375
    %v3377 = vrot.slane %v3370, %v3376
    %3379 = vst [vmem:[%s1552] sm:$0xf] %v3377
    %v3380 = vld [vmem:[%s1751] sm:$0xf]
    %3381 = vmatprep.subr.mxu0 %v1951
    %3382 = vmatpush1.msra.mxu0 %v1950
    %3383 = vmatprep.subr.mxu0 %v1953
    %3384 = vmatpush1.msra.mxu0 %v1952
    %3385 = vmatprep.subr.mxu0 %v1955
    %3386 = vmatpush1.msra.mxu0 %v1954
    %3387 = vmatprep.subr.mxu0 %v1957
    %3388 = vmatpush1.msra.mxu0 %v1956
    %3389 = vmatprep.subr.mxu0 %v1959
    %3390 = vmatpush1.msra.mxu0 %v1958
    %3391 = vmatprep.subr.mxu0 %v1961
    %3392 = vmatpush1.msra.mxu0 %v1960
    %3393 = vmatprep.subr.mxu0 %v1963
    %3394 = vmatpush1.msra.mxu0 %v1962
    %3395 = vmatprep.subr.mxu0 %v1965
    %3396 = vmatpush1.msra.mxu0 %v1964
    %3397 = vmatprep.subr.mxu0 0.0
    %3398 = vmatpush1.msra.mxu0 0.0
    %3399 = vmatprep.subr.mxu0 0.0
    %3400 = vmatpush1.msra.mxu0 0.0
    %3401 = vmatprep.subr.mxu0 0.0
    %3402 = vmatpush1.msra.mxu0 0.0
    %3403 = vmatprep.subr.mxu0 0.0
    %3404 = vmatpush1.msra.mxu0 0.0
    %3405 = vmatprep.subr.mxu0 0.0
    %3406 = vmatpush1.msra.mxu0 0.0
    %3407 = vmatprep.subr.mxu0 0.0
    %3408 = vmatpush1.msra.mxu0 0.0
    %3409 = vmatprep.subr.mxu0 0.0
    %3410 = vmatpush1.msra.mxu0 0.0
    %3411 = vmatprep.subr.mxu0 0.0
    %3412 = vmatpush1.msra.mxu0 0.0
    %3413 = vmatprep.subr.mxu0 0.0
    %3414 = vmatpush1.msra.mxu0 0.0
    %3415 = vmatprep.subr.mxu0 0.0
    %3416 = vmatpush1.msra.mxu0 0.0
    %3417 = vmatprep.subr.mxu0 0.0
    %3418 = vmatpush1.msra.mxu0 0.0
    %3419 = vmatprep.subr.mxu0 0.0
    %3420 = vmatpush1.msra.mxu0 0.0
    %3421 = vmatprep.subr.mxu0 0.0
    %3422 = vmatpush1.msra.mxu0 0.0
    %3423 = vmatprep.subr.mxu0 0.0
    %3424 = vmatpush1.msra.mxu0 0.0
    %3425 = vmatprep.subr.mxu0 0.0
    %3426 = vmatpush1.msra.mxu0 0.0
    %3427 = vmatprep.subr.mxu0 0.0
    %3428 = vmatpush1.msra.mxu0 0.0
    %3429 = vmatprep.subr.mxu0 0.0
    %3430 = vmatpush1.msra.mxu0 0.0
    %3431 = vmatprep.subr.mxu0 0.0
    %3432 = vmatpush1.msra.mxu0 0.0
    %3433 = vmatprep.subr.mxu0 0.0
    %3434 = vmatpush1.msra.mxu0 0.0
    %3435 = vmatprep.subr.mxu0 0.0
    %3436 = vmatpush1.msra.mxu0 0.0
    %3437 = vmatprep.subr.mxu0 0.0
    %3438 = vmatpush1.msra.mxu0 0.0
    %3439 = vmatprep.subr.mxu0 0.0
    %3440 = vmatpush1.msra.mxu0 0.0
    %3441 = vmatprep.subr.mxu0 0.0
    %3442 = vmatpush1.msra.mxu0 0.0
    %3443 = vmatprep.subr.mxu0 0.0
    %3444 = vmatpush1.msra.mxu0 0.0
    %3445 = vmatprep.mubr.f32.mxu0 0.0
    %3446 = vmatmul.mubr.f32.gmra.mrb[0].mxu0 %v3295
    %v3447 = vpop.f32.mrb[0].mxu0
    %v3448 = vadd.f32 0.0, %v3447
    %v3449 = vpop.f32.mrb[0].mxu0
    %v3450 = vadd.f32 0.0, %v3449
    %3451 = vdwg.mxu0
    %v3454 = vcombine.low %v3448, %v3450
    %v3456 = vunpack.c.l.s4 1983009808
    %v3457 = vunpack.c.0.s8 %v3456
    %v3458 = vlaneseq
    %v3459 = vshrl.u32 %v3458, 7
    %v3460 = vsub.s32 %v3457, %v3459
    %v3461 = vrot.slane %v3454, %v3460
    %v3463 = vadd.f32 %v3380, %v3461
    %v3464 = vxor.u32 %v3463, 2147483648
    %v3465 = vmul.f32 %v3464, 1.442695
    %v3466 = vpow.pop %v3465
    %v3467 = vadd.f32 %v3466, 1.0
    %v3468 = vrcp.pop %v3467
    %v3469 = vmul.f32 1.0, %v3468
    %3471 = vrot.lane.b32.xlu0 %v3463, 64
    %v3472 = vpop.permute.xlu0 %3471
    %v3473 = vrot.slane %v3472, 2
    %v3475 = vtanh.pop %v3473
    %v3476 = vmul.f32 %v3469, %v3284
    %v3477 = vmul.f32 %v3469, %v3475
    %3479 = vrot.lane.b32.xlu0 %v3477, 64
    %v3480 = vpop.permute.xlu0 %3479
    %v3482 = vadd.f32 %v3476, %v3480
    %v3483 = vtanh.pop %v3482
    %v3485 = vrot.slane %v3469, 2
    %3488 = vrot.lane.b32.xlu0 %v3483, 64
    %v3489 = vpop.permute.xlu0 %3488
    %v3491 = vmul.f32 %v3485, %v3489
    %v3493 = vsel %vm345, %v3491, 0
    %3495 = vmatprep.subr.mxu0 %v1967
    %3496 = vmatpush1.msra.mxu0 %v1966
    %3497 = vmatprep.subr.mxu0 %v1969
    %3498 = vmatpush1.msra.mxu0 %v1968
    %3499 = vmatprep.subr.mxu0 %v1971
    %3500 = vmatpush1.msra.mxu0 %v1970
    %3501 = vmatprep.subr.mxu0 %v1973
    %3502 = vmatpush1.msra.mxu0 %v1972
    %3503 = vmatprep.subr.mxu0 %v1975
    %3504 = vmatpush1.msra.mxu0 %v1974
    %3505 = vmatprep.subr.mxu0 %v1977
    %3506 = vmatpush1.msra.mxu0 %v1976
    %3507 = vmatprep.subr.mxu0 %v1979
    %3508 = vmatpush1.msra.mxu0 %v1978
    %3509 = vmatprep.subr.mxu0 %v1981
    %3510 = vmatpush1.msra.mxu0 %v1980
    %3511 = vmatprep.subr.mxu0 0.0
    %3512 = vmatpush1.msra.mxu0 0.0
    %3513 = vmatprep.subr.mxu0 0.0
    %3514 = vmatpush1.msra.mxu0 0.0
    %3515 = vmatprep.subr.mxu0 0.0
    %3516 = vmatpush1.msra.mxu0 0.0
    %3517 = vmatprep.subr.mxu0 0.0
    %3518 = vmatpush1.msra.mxu0 0.0
    %3519 = vmatprep.subr.mxu0 0.0
    %3520 = vmatpush1.msra.mxu0 0.0
    %3521 = vmatprep.subr.mxu0 0.0
    %3522 = vmatpush1.msra.mxu0 0.0
    %3523 = vmatprep.subr.mxu0 0.0
    %3524 = vmatpush1.msra.mxu0 0.0
    %3525 = vmatprep.subr.mxu0 0.0
    %3526 = vmatpush1.msra.mxu0 0.0
    %3527 = vmatprep.subr.mxu0 0.0
    %3528 = vmatpush1.msra.mxu0 0.0
    %3529 = vmatprep.subr.mxu0 0.0
    %3530 = vmatpush1.msra.mxu0 0.0
    %3531 = vmatprep.subr.mxu0 0.0
    %3532 = vmatpush1.msra.mxu0 0.0
    %3533 = vmatprep.subr.mxu0 0.0
    %3534 = vmatpush1.msra.mxu0 0.0
    %3535 = vmatprep.subr.mxu0 0.0
    %3536 = vmatpush1.msra.mxu0 0.0
    %3537 = vmatprep.subr.mxu0 0.0
    %3538 = vmatpush1.msra.mxu0 0.0
    %3539 = vmatprep.subr.mxu0 0.0
    %3540 = vmatpush1.msra.mxu0 0.0
    %3541 = vmatprep.subr.mxu0 0.0
    %3542 = vmatpush1.msra.mxu0 0.0
    %3543 = vmatprep.subr.mxu0 0.0
    %3544 = vmatpush1.msra.mxu0 0.0
    %3545 = vmatprep.subr.mxu0 0.0
    %3546 = vmatpush1.msra.mxu0 0.0
    %3547 = vmatprep.subr.mxu0 0.0
    %3548 = vmatpush1.msra.mxu0 0.0
    %3549 = vmatprep.subr.mxu0 0.0
    %3550 = vmatpush1.msra.mxu0 0.0
    %3551 = vmatprep.subr.mxu0 0.0
    %3552 = vmatpush1.msra.mxu0 0.0
    %3553 = vmatprep.subr.mxu0 0.0
    %3554 = vmatpush1.msra.mxu0 0.0
    %3555 = vmatprep.subr.mxu0 0.0
    %3556 = vmatpush1.msra.mxu0 0.0
    %3557 = vmatprep.subr.mxu0 0.0
    %3558 = vmatpush1.msra.mxu0 0.0
    %3559 = vmatprep.mubr.f32.mxu0 0.0
    %3560 = vmatmul.mubr.f32.gmra.mrb[0].mxu0 %v3493
    %v3561 = vpop.f32.mrb[0].mxu0
    %v3562 = vadd.f32 %v2099, %v3561
    %v3563 = vpop.f32.mrb[0].mxu0
    %v3564 = vadd.f32 %v2103, %v3563
    %3565 = vdwg.mxu0
    %v3568 = vcombine.low %v3562, %v3564
    %v3570 = vunpack.c.l.s4 1983009808
    %v3571 = vunpack.c.0.s8 %v3570
    %v3572 = vlaneseq
    %v3573 = vshrl.u32 %v3572, 7
    %v3574 = vsub.s32 %v3571, %v3573
    %v3575 = vrot.slane %v3568, %v3574
    %3577 = vst [vmem:[%s1751] sm:$0xf] %v3575
    %v3578 = vld [vmem:[#allocation11] sm:$0xff]
    %v3579 = vld [vmem:[#allocation11 + $0x8] sm:$0xff]
    %v3580 = vld [vmem:[#allocation11 + $0x10] sm:$0xff]
    %v3581 = vld [vmem:[#allocation11 + $0x18] sm:$0xff]
    %v3582 = vld [vmem:[#allocation11 + $0x20] sm:$0xff]
    %v3583 = vld [vmem:[#allocation11 + $0x28] sm:$0xff]
    %v3584 = vld [vmem:[#allocation11 + $0x30] sm:$0xff]
    %v3585 = vld [vmem:[#allocation11 + $0x38] sm:$0xff]
    %v3586 = vld [vmem:[#allocation11 + $0x40] sm:$0xff]
    %v3587 = vld [vmem:[#allocation11 + $0x48] sm:$0xff]
    %v3588 = vld [vmem:[#allocation11 + $0x50] sm:$0xff]
    %v3589 = vld [vmem:[#allocation11 + $0x58] sm:$0xff]
    %v3590 = vld [vmem:[#allocation11 + $0x60] sm:$0xff]
    %v3591 = vld [vmem:[#allocation11 + $0x68] sm:$0xff]
    %v3592 = vld [vmem:[#allocation11 + $0x70] sm:$0xff]
    %v3593 = vld [vmem:[#allocation11 + $0x78] sm:$0xff]
    %v3594 = vld [vmem:[#allocation2] sm:$0xf]
    %3595 = vmatprep.subr.mxu0 %v3579
    %3596 = vmatpush1.msra.mxu0 %v3578
    %3597 = vmatprep.subr.mxu0 %v3581
    %3598 = vmatpush1.msra.mxu0 %v3580
    %3599 = vmatprep.subr.mxu0 %v3583
    %3600 = vmatpush1.msra.mxu0 %v3582
    %3601 = vmatprep.subr.mxu0 %v3585
    %3602 = vmatpush1.msra.mxu0 %v3584
    %3603 = vmatprep.subr.mxu0 %v3587
    %3604 = vmatpush1.msra.mxu0 %v3586
    %3605 = vmatprep.subr.mxu0 %v3589
    %3606 = vmatpush1.msra.mxu0 %v3588
    %3607 = vmatprep.subr.mxu0 %v3591
    %3608 = vmatpush1.msra.mxu0 %v3590
    %3609 = vmatprep.subr.mxu0 %v3593
    %3610 = vmatpush1.msra.mxu0 %v3592
    %3611 = vmatprep.subr.mxu0 0.0
    %3612 = vmatpush1.msra.mxu0 0.0
    %3613 = vmatprep.subr.mxu0 0.0
    %3614 = vmatpush1.msra.mxu0 0.0
    %3615 = vmatprep.subr.mxu0 0.0
    %3616 = vmatpush1.msra.mxu0 0.0
    %3617 = vmatprep.subr.mxu0 0.0
    %3618 = vmatpush1.msra.mxu0 0.0
    %3619 = vmatprep.subr.mxu0 0.0
    %3620 = vmatpush1.msra.mxu0 0.0
    %3621 = vmatprep.subr.mxu0 0.0
    %3622 = vmatpush1.msra.mxu0 0.0
    %3623 = vmatprep.subr.mxu0 0.0
    %3624 = vmatpush1.msra.mxu0 0.0
    %3625 = vmatprep.subr.mxu0 0.0
    %3626 = vmatpush1.msra.mxu0 0.0
    %3627 = vmatprep.subr.mxu0 0.0
    %3628 = vmatpush1.msra.mxu0 0.0
    %3629 = vmatprep.subr.mxu0 0.0
    %3630 = vmatpush1.msra.mxu0 0.0
    %3631 = vmatprep.subr.mxu0 0.0
    %3632 = vmatpush1.msra.mxu0 0.0
    %3633 = vmatprep.subr.mxu0 0.0
    %3634 = vmatpush1.msra.mxu0 0.0
    %3635 = vmatprep.subr.mxu0 0.0
    %3636 = vmatpush1.msra.mxu0 0.0
    %3637 = vmatprep.subr.mxu0 0.0
    %3638 = vmatpush1.msra.mxu0 0.0
    %3639 = vmatprep.subr.mxu0 0.0
    %3640 = vmatpush1.msra.mxu0 0.0
    %3641 = vmatprep.subr.mxu0 0.0
    %3642 = vmatpush1.msra.mxu0 0.0
    %3643 = vmatprep.subr.mxu0 0.0
    %3644 = vmatpush1.msra.mxu0 0.0
    %3645 = vmatprep.subr.mxu0 0.0
    %3646 = vmatpush1.msra.mxu0 0.0
    %3647 = vmatprep.subr.mxu0 0.0
    %3648 = vmatpush1.msra.mxu0 0.0
    %3649 = vmatprep.subr.mxu0 0.0
    %3650 = vmatpush1.msra.mxu0 0.0
    %3651 = vmatprep.subr.mxu0 0.0
    %3652 = vmatpush1.msra.mxu0 0.0
    %3653 = vmatprep.subr.mxu0 0.0
    %3654 = vmatpush1.msra.mxu0 0.0
    %3655 = vmatprep.subr.mxu0 0.0
    %3656 = vmatpush1.msra.mxu0 0.0
    %3657 = vmatprep.subr.mxu0 0.0
    %3658 = vmatpush1.msra.mxu0 0.0
    %3659 = vmatprep.mubr.f32.mxu0 0.0
    %3660 = vmatmul.mubr.f32.gmra.mrb[0].mxu0 %v347
    %v3661 = vpop.f32.mrb[0].mxu0
    %v3662 = vadd.f32 0.0, %v3661
    %v3663 = vpop.f32.mrb[0].mxu0
    %v3664 = vadd.f32 0.0, %v3663
    %3665 = vdwg.mxu0
    %v3668 = vcombine.low %v3662, %v3664
    %v3670 = vunpack.c.l.s4 1983009808
    %v3671 = vunpack.c.0.s8 %v3670
    %v3672 = vlaneseq
    %v3673 = vshrl.u32 %v3672, 7
    %v3674 = vsub.s32 %v3671, %v3673
    %v3675 = vrot.slane %v3668, %v3674
    %v3677 = vadd.f32 %v3594, %v3675
    %v3678 = vxor.u32 %v3677, 2147483648
    %v3679 = vmul.f32 %v3678, 1.442695
    %v3680 = vpow.pop %v3679
    %v3681 = vadd.f32 %v3680, 1.0
    %v3682 = vrcp.pop %v3681
    %v3683 = vmul.f32 1.0, %v3682
    %3685 = vrot.lane.b32.xlu0 %v3677, 64
    %v3686 = vpop.permute.xlu0 %3685
    %v3687 = vrot.slane %v3686, 2
    %v3689 = vtanh.pop %v3687
    %v3690 = vmul.f32 %v3683, 0.0
    %v3691 = vmul.f32 %v3683, %v3689
    %3693 = vrot.lane.b32.xlu0 %v3691, 64
    %v3694 = vpop.permute.xlu0 %3693
    %v3696 = vadd.f32 %v3690, %v3694
    %v3697 = vtanh.pop %v3696
    %v3699 = vrot.slane %v3683, 2
    %3702 = vrot.lane.b32.xlu0 %v3697, 64
    %v3703 = vpop.permute.xlu0 %3702
    %v3705 = vmul.f32 %v3699, %v3703
    %v3706 = vld [vmem:[%s557] sm:$0xf]
    %v3708 = vsel %vm345, %v3705, 0
    %3710 = vmatprep.subr.mxu0 %v3579
    %3711 = vmatpush1.msra.mxu0 %v3578
    %3712 = vmatprep.subr.mxu0 %v3581
    %3713 = vmatpush1.msra.mxu0 %v3580
    %3714 = vmatprep.subr.mxu0 %v3583
    %3715 = vmatpush1.msra.mxu0 %v3582
    %3716 = vmatprep.subr.mxu0 %v3585
    %3717 = vmatpush1.msra.mxu0 %v3584
    %3718 = vmatprep.subr.mxu0 %v3587
    %3719 = vmatpush1.msra.mxu0 %v3586
    %3720 = vmatprep.subr.mxu0 %v3589
    %3721 = vmatpush1.msra.mxu0 %v3588
    %3722 = vmatprep.subr.mxu0 %v3591
    %3723 = vmatpush1.msra.mxu0 %v3590
    %3724 = vmatprep.subr.mxu0 %v3593
    %3725 = vmatpush1.msra.mxu0 %v3592
    %3726 = vmatprep.subr.mxu0 0.0
    %3727 = vmatpush1.msra.mxu0 0.0
    %3728 = vmatprep.subr.mxu0 0.0
    %3729 = vmatpush1.msra.mxu0 0.0
    %3730 = vmatprep.subr.mxu0 0.0
    %3731 = vmatpush1.msra.mxu0 0.0
    %3732 = vmatprep.subr.mxu0 0.0
    %3733 = vmatpush1.msra.mxu0 0.0
    %3734 = vmatprep.subr.mxu0 0.0
    %3735 = vmatpush1.msra.mxu0 0.0
    %3736 = vmatprep.subr.mxu0 0.0
    %3737 = vmatpush1.msra.mxu0 0.0
    %3738 = vmatprep.subr.mxu0 0.0
    %3739 = vmatpush1.msra.mxu0 0.0
    %3740 = vmatprep.subr.mxu0 0.0
    %3741 = vmatpush1.msra.mxu0 0.0
    %3742 = vmatprep.subr.mxu0 0.0
    %3743 = vmatpush1.msra.mxu0 0.0
    %3744 = vmatprep.subr.mxu0 0.0
    %3745 = vmatpush1.msra.mxu0 0.0
    %3746 = vmatprep.subr.mxu0 0.0
    %3747 = vmatpush1.msra.mxu0 0.0
    %3748 = vmatprep.subr.mxu0 0.0
    %3749 = vmatpush1.msra.mxu0 0.0
    %3750 = vmatprep.subr.mxu0 0.0
    %3751 = vmatpush1.msra.mxu0 0.0
    %3752 = vmatprep.subr.mxu0 0.0
    %3753 = vmatpush1.msra.mxu0 0.0
    %3754 = vmatprep.subr.mxu0 0.0
    %3755 = vmatpush1.msra.mxu0 0.0
    %3756 = vmatprep.subr.mxu0 0.0
    %3757 = vmatpush1.msra.mxu0 0.0
    %3758 = vmatprep.subr.mxu0 0.0
    %3759 = vmatpush1.msra.mxu0 0.0
    %3760 = vmatprep.subr.mxu0 0.0
    %3761 = vmatpush1.msra.mxu0 0.0
    %3762 = vmatprep.subr.mxu0 0.0
    %3763 = vmatpush1.msra.mxu0 0.0
    %3764 = vmatprep.subr.mxu0 0.0
    %3765 = vmatpush1.msra.mxu0 0.0
    %3766 = vmatprep.subr.mxu0 0.0
    %3767 = vmatpush1.msra.mxu0 0.0
    %3768 = vmatprep.subr.mxu0 0.0
    %3769 = vmatpush1.msra.mxu0 0.0
    %3770 = vmatprep.subr.mxu0 0.0
    %3771 = vmatpush1.msra.mxu0 0.0
    %3772 = vmatprep.subr.mxu0 0.0
    %3773 = vmatpush1.msra.mxu0 0.0
    %3774 = vmatprep.mubr.f32.mxu0 0.0
    %3775 = vmatmul.mubr.f32.gmra.mrb[0].mxu0 %v3708
    %v3776 = vpop.f32.mrb[0].mxu0
    %v3777 = vadd.f32 0.0, %v3776
    %v3778 = vpop.f32.mrb[0].mxu0
    %v3779 = vadd.f32 0.0, %v3778
    %3780 = vdwg.mxu0
    %v3783 = vcombine.low %v3777, %v3779
    %v3785 = vunpack.c.l.s4 1983009808
    %v3786 = vunpack.c.0.s8 %v3785
    %v3787 = vlaneseq
    %v3788 = vshrl.u32 %v3787, 7
    %v3789 = vsub.s32 %v3786, %v3788
    %v3790 = vrot.slane %v3783, %v3789
    %v3792 = vadd.f32 %v3706, %v3790
    %v3793 = vxor.u32 %v3792, 2147483648
    %v3794 = vmul.f32 %v3793, 1.442695
    %v3795 = vpow.pop %v3794
    %v3796 = vadd.f32 %v3795, 1.0
    %v3797 = vrcp.pop %v3796
    %v3798 = vmul.f32 1.0, %v3797
    %3800 = vrot.lane.b32.xlu0 %v3792, 64
    %v3801 = vpop.permute.xlu0 %3800
    %v3802 = vrot.slane %v3801, 2
    %v3804 = vtanh.pop %v3802
    %v3805 = vmul.f32 %v3798, %v3696
    %v3806 = vmul.f32 %v3798, %v3804
    %3808 = vrot.lane.b32.xlu0 %v3806, 64
    %v3809 = vpop.permute.xlu0 %3808
    %v3811 = vadd.f32 %v3805, %v3809
    %v3812 = vtanh.pop %v3811
    %v3814 = vrot.slane %v3798, 2
    %3817 = vrot.lane.b32.xlu0 %v3812, 64
    %v3818 = vpop.permute.xlu0 %3817
    %v3820 = vmul.f32 %v3814, %v3818
    %v3821 = vld [vmem:[%s756] sm:$0xf]
    %v3823 = vsel %vm345, %v3820, 0
    %3825 = vmatprep.subr.mxu0 %v3579
    %3826 = vmatpush1.msra.mxu0 %v3578
    %3827 = vmatprep.subr.mxu0 %v3581
    %3828 = vmatpush1.msra.mxu0 %v3580
    %3829 = vmatprep.subr.mxu0 %v3583
    %3830 = vmatpush1.msra.mxu0 %v3582
    %3831 = vmatprep.subr.mxu0 %v3585
    %3832 = vmatpush1.msra.mxu0 %v3584
    %3833 = vmatprep.subr.mxu0 %v3587
    %3834 = vmatpush1.msra.mxu0 %v3586
    %3835 = vmatprep.subr.mxu0 %v3589
    %3836 = vmatpush1.msra.mxu0 %v3588
    %3837 = vmatprep.subr.mxu0 %v3591
    %3838 = vmatpush1.msra.mxu0 %v3590
    %3839 = vmatprep.subr.mxu0 %v3593
    %3840 = vmatpush1.msra.mxu0 %v3592
    %3841 = vmatprep.subr.mxu0 0.0
    %3842 = vmatpush1.msra.mxu0 0.0
    %3843 = vmatprep.subr.mxu0 0.0
    %3844 = vmatpush1.msra.mxu0 0.0
    %3845 = vmatprep.subr.mxu0 0.0
    %3846 = vmatpush1.msra.mxu0 0.0
    %3847 = vmatprep.subr.mxu0 0.0
    %3848 = vmatpush1.msra.mxu0 0.0
    %3849 = vmatprep.subr.mxu0 0.0
    %3850 = vmatpush1.msra.mxu0 0.0
    %3851 = vmatprep.subr.mxu0 0.0
    %3852 = vmatpush1.msra.mxu0 0.0
    %3853 = vmatprep.subr.mxu0 0.0
    %3854 = vmatpush1.msra.mxu0 0.0
    %3855 = vmatprep.subr.mxu0 0.0
    %3856 = vmatpush1.msra.mxu0 0.0
    %3857 = vmatprep.subr.mxu0 0.0
    %3858 = vmatpush1.msra.mxu0 0.0
    %3859 = vmatprep.subr.mxu0 0.0
    %3860 = vmatpush1.msra.mxu0 0.0
    %3861 = vmatprep.subr.mxu0 0.0
    %3862 = vmatpush1.msra.mxu0 0.0
    %3863 = vmatprep.subr.mxu0 0.0
    %3864 = vmatpush1.msra.mxu0 0.0
    %3865 = vmatprep.subr.mxu0 0.0
    %3866 = vmatpush1.msra.mxu0 0.0
    %3867 = vmatprep.subr.mxu0 0.0
    %3868 = vmatpush1.msra.mxu0 0.0
    %3869 = vmatprep.subr.mxu0 0.0
    %3870 = vmatpush1.msra.mxu0 0.0
    %3871 = vmatprep.subr.mxu0 0.0
    %3872 = vmatpush1.msra.mxu0 0.0
    %3873 = vmatprep.subr.mxu0 0.0
    %3874 = vmatpush1.msra.mxu0 0.0
    %3875 = vmatprep.subr.mxu0 0.0
    %3876 = vmatpush1.msra.mxu0 0.0
    %3877 = vmatprep.subr.mxu0 0.0
    %3878 = vmatpush1.msra.mxu0 0.0
    %3879 = vmatprep.subr.mxu0 0.0
    %3880 = vmatpush1.msra.mxu0 0.0
    %3881 = vmatprep.subr.mxu0 0.0
    %3882 = vmatpush1.msra.mxu0 0.0
    %3883 = vmatprep.subr.mxu0 0.0
    %3884 = vmatpush1.msra.mxu0 0.0
    %3885 = vmatprep.subr.mxu0 0.0
    %3886 = vmatpush1.msra.mxu0 0.0
    %3887 = vmatprep.subr.mxu0 0.0
    %3888 = vmatpush1.msra.mxu0 0.0
    %3889 = vmatprep.mubr.f32.mxu0 0.0
    %3890 = vmatmul.mubr.f32.gmra.mrb[0].mxu0 %v3823
    %v3891 = vpop.f32.mrb[0].mxu0
    %v3892 = vadd.f32 0.0, %v3891
    %v3893 = vpop.f32.mrb[0].mxu0
    %v3894 = vadd.f32 0.0, %v3893
    %3895 = vdwg.mxu0
    %v3898 = vcombine.low %v3892, %v3894
    %v3900 = vunpack.c.l.s4 1983009808
    %v3901 = vunpack.c.0.s8 %v3900
    %v3902 = vlaneseq
    %v3903 = vshrl.u32 %v3902, 7
    %v3904 = vsub.s32 %v3901, %v3903
    %v3905 = vrot.slane %v3898, %v3904
    %v3907 = vadd.f32 %v3821, %v3905
    %v3908 = vxor.u32 %v3907, 2147483648
    %v3909 = vmul.f32 %v3908, 1.442695
    %v3910 = vpow.pop %v3909
    %v3911 = vadd.f32 %v3910, 1.0
    %v3912 = vrcp.pop %v3911
    %v3913 = vmul.f32 1.0, %v3912
    %3915 = vrot.lane.b32.xlu0 %v3907, 64
    %v3916 = vpop.permute.xlu0 %3915
    %v3917 = vrot.slane %v3916, 2
    %v3919 = vtanh.pop %v3917
    %v3920 = vmul.f32 %v3913, %v3811
    %v3921 = vmul.f32 %v3913, %v3919
    %3923 = vrot.lane.b32.xlu0 %v3921, 64
    %v3924 = vpop.permute.xlu0 %3923
    %v3926 = vadd.f32 %v3920, %v3924
    %v3927 = vtanh.pop %v3926
    %v3929 = vrot.slane %v3913, 2
    %3932 = vrot.lane.b32.xlu0 %v3927, 64
    %v3933 = vpop.permute.xlu0 %3932
    %v3935 = vmul.f32 %v3929, %v3933
    %v3936 = vld [vmem:[%s955] sm:$0xf]
    %v3938 = vsel %vm345, %v3935, 0
    %3940 = vmatprep.subr.mxu0 %v3579
    %3941 = vmatpush1.msra.mxu0 %v3578
    %3942 = vmatprep.subr.mxu0 %v3581
    %3943 = vmatpush1.msra.mxu0 %v3580
    %3944 = vmatprep.subr.mxu0 %v3583
    %3945 = vmatpush1.msra.mxu0 %v3582
    %3946 = vmatprep.subr.mxu0 %v3585
    %3947 = vmatpush1.msra.mxu0 %v3584
    %3948 = vmatprep.subr.mxu0 %v3587
    %3949 = vmatpush1.msra.mxu0 %v3586
    %3950 = vmatprep.subr.mxu0 %v3589
    %3951 = vmatpush1.msra.mxu0 %v3588
    %3952 = vmatprep.subr.mxu0 %v3591
    %3953 = vmatpush1.msra.mxu0 %v3590
    %3954 = vmatprep.subr.mxu0 %v3593
    %3955 = vmatpush1.msra.mxu0 %v3592
    %3956 = vmatprep.subr.mxu0 0.0
    %3957 = vmatpush1.msra.mxu0 0.0
    %3958 = vmatprep.subr.mxu0 0.0
    %3959 = vmatpush1.msra.mxu0 0.0
    %3960 = vmatprep.subr.mxu0 0.0
    %3961 = vmatpush1.msra.mxu0 0.0
    %3962 = vmatprep.subr.mxu0 0.0
    %3963 = vmatpush1.msra.mxu0 0.0
    %3964 = vmatprep.subr.mxu0 0.0
    %3965 = vmatpush1.msra.mxu0 0.0
    %3966 = vmatprep.subr.mxu0 0.0
    %3967 = vmatpush1.msra.mxu0 0.0
    %3968 = vmatprep.subr.mxu0 0.0
    %3969 = vmatpush1.msra.mxu0 0.0
    %3970 = vmatprep.subr.mxu0 0.0
    %3971 = vmatpush1.msra.mxu0 0.0
    %3972 = vmatprep.subr.mxu0 0.0
    %3973 = vmatpush1.msra.mxu0 0.0
    %3974 = vmatprep.subr.mxu0 0.0
    %3975 = vmatpush1.msra.mxu0 0.0
    %3976 = vmatprep.subr.mxu0 0.0
    %3977 = vmatpush1.msra.mxu0 0.0
    %3978 = vmatprep.subr.mxu0 0.0
    %3979 = vmatpush1.msra.mxu0 0.0
    %3980 = vmatprep.subr.mxu0 0.0
    %3981 = vmatpush1.msra.mxu0 0.0
    %3982 = vmatprep.subr.mxu0 0.0
    %3983 = vmatpush1.msra.mxu0 0.0
    %3984 = vmatprep.subr.mxu0 0.0
    %3985 = vmatpush1.msra.mxu0 0.0
    %3986 = vmatprep.subr.mxu0 0.0
    %3987 = vmatpush1.msra.mxu0 0.0
    %3988 = vmatprep.subr.mxu0 0.0
    %3989 = vmatpush1.msra.mxu0 0.0
    %3990 = vmatprep.subr.mxu0 0.0
    %3991 = vmatpush1.msra.mxu0 0.0
    %3992 = vmatprep.subr.mxu0 0.0
    %3993 = vmatpush1.msra.mxu0 0.0
    %3994 = vmatprep.subr.mxu0 0.0
    %3995 = vmatpush1.msra.mxu0 0.0
    %3996 = vmatprep.subr.mxu0 0.0
    %3997 = vmatpush1.msra.mxu0 0.0
    %3998 = vmatprep.subr.mxu0 0.0
    %3999 = vmatpush1.msra.mxu0 0.0
    %4000 = vmatprep.subr.mxu0 0.0
    %4001 = vmatpush1.msra.mxu0 0.0
    %4002 = vmatprep.subr.mxu0 0.0
    %4003 = vmatpush1.msra.mxu0 0.0
    %4004 = vmatprep.mubr.f32.mxu0 0.0
    %4005 = vmatmul.mubr.f32.gmra.mrb[0].mxu0 %v3938
    %v4006 = vpop.f32.mrb[0].mxu0
    %v4007 = vadd.f32 0.0, %v4006
    %v4008 = vpop.f32.mrb[0].mxu0
    %v4009 = vadd.f32 0.0, %v4008
    %4010 = vdwg.mxu0
    %v4013 = vcombine.low %v4007, %v4009
    %v4015 = vunpack.c.l.s4 1983009808
    %v4016 = vunpack.c.0.s8 %v4015
    %v4017 = vlaneseq
    %v4018 = vshrl.u32 %v4017, 7
    %v4019 = vsub.s32 %v4016, %v4018
    %v4020 = vrot.slane %v4013, %v4019
    %v4022 = vadd.f32 %v3936, %v4020
    %v4023 = vxor.u32 %v4022, 2147483648
    %v4024 = vmul.f32 %v4023, 1.442695
    %v4025 = vpow.pop %v4024
    %v4026 = vadd.f32 %v4025, 1.0
    %v4027 = vrcp.pop %v4026
    %v4028 = vmul.f32 1.0, %v4027
    %4030 = vrot.lane.b32.xlu0 %v4022, 64
    %v4031 = vpop.permute.xlu0 %4030
    %v4032 = vrot.slane %v4031, 2
    %v4034 = vtanh.pop %v4032
    %v4035 = vmul.f32 %v4028, %v3926
    %v4036 = vmul.f32 %v4028, %v4034
    %4038 = vrot.lane.b32.xlu0 %v4036, 64
    %v4039 = vpop.permute.xlu0 %4038
    %v4041 = vadd.f32 %v4035, %v4039
    %v4042 = vtanh.pop %v4041
    %v4044 = vrot.slane %v4028, 2
    %4047 = vrot.lane.b32.xlu0 %v4042, 64
    %v4048 = vpop.permute.xlu0 %4047
    %v4050 = vmul.f32 %v4044, %v4048
    %v4051 = vld [vmem:[%s1154] sm:$0xf]
    %v4053 = vsel %vm345, %v4050, 0
    %4055 = vmatprep.subr.mxu0 %v3579
    %4056 = vmatpush1.msra.mxu0 %v3578
    %4057 = vmatprep.subr.mxu0 %v3581
    %4058 = vmatpush1.msra.mxu0 %v3580
    %4059 = vmatprep.subr.mxu0 %v3583
    %4060 = vmatpush1.msra.mxu0 %v3582
    %4061 = vmatprep.subr.mxu0 %v3585
    %4062 = vmatpush1.msra.mxu0 %v3584
    %4063 = vmatprep.subr.mxu0 %v3587
    %4064 = vmatpush1.msra.mxu0 %v3586
    %4065 = vmatprep.subr.mxu0 %v3589
    %4066 = vmatpush1.msra.mxu0 %v3588
    %4067 = vmatprep.subr.mxu0 %v3591
    %4068 = vmatpush1.msra.mxu0 %v3590
    %4069 = vmatprep.subr.mxu0 %v3593
    %4070 = vmatpush1.msra.mxu0 %v3592
    %4071 = vmatprep.subr.mxu0 0.0
    %4072 = vmatpush1.msra.mxu0 0.0
    %4073 = vmatprep.subr.mxu0 0.0
    %4074 = vmatpush1.msra.mxu0 0.0
    %4075 = vmatprep.subr.mxu0 0.0
    %4076 = vmatpush1.msra.mxu0 0.0
    %4077 = vmatprep.subr.mxu0 0.0
    %4078 = vmatpush1.msra.mxu0 0.0
    %4079 = vmatprep.subr.mxu0 0.0
    %4080 = vmatpush1.msra.mxu0 0.0
    %4081 = vmatprep.subr.mxu0 0.0
    %4082 = vmatpush1.msra.mxu0 0.0
    %4083 = vmatprep.subr.mxu0 0.0
    %4084 = vmatpush1.msra.mxu0 0.0
    %4085 = vmatprep.subr.mxu0 0.0
    %4086 = vmatpush1.msra.mxu0 0.0
    %4087 = vmatprep.subr.mxu0 0.0
    %4088 = vmatpush1.msra.mxu0 0.0
    %4089 = vmatprep.subr.mxu0 0.0
    %4090 = vmatpush1.msra.mxu0 0.0
    %4091 = vmatprep.subr.mxu0 0.0
    %4092 = vmatpush1.msra.mxu0 0.0
    %4093 = vmatprep.subr.mxu0 0.0
    %4094 = vmatpush1.msra.mxu0 0.0
    %4095 = vmatprep.subr.mxu0 0.0
    %4096 = vmatpush1.msra.mxu0 0.0
    %4097 = vmatprep.subr.mxu0 0.0
    %4098 = vmatpush1.msra.mxu0 0.0
    %4099 = vmatprep.subr.mxu0 0.0
    %4100 = vmatpush1.msra.mxu0 0.0
    %4101 = vmatprep.subr.mxu0 0.0
    %4102 = vmatpush1.msra.mxu0 0.0
    %4103 = vmatprep.subr.mxu0 0.0
    %4104 = vmatpush1.msra.mxu0 0.0
    %4105 = vmatprep.subr.mxu0 0.0
    %4106 = vmatpush1.msra.mxu0 0.0
    %4107 = vmatprep.subr.mxu0 0.0
    %4108 = vmatpush1.msra.mxu0 0.0
    %4109 = vmatprep.subr.mxu0 0.0
    %4110 = vmatpush1.msra.mxu0 0.0
    %4111 = vmatprep.subr.mxu0 0.0
    %4112 = vmatpush1.msra.mxu0 0.0
    %4113 = vmatprep.subr.mxu0 0.0
    %4114 = vmatpush1.msra.mxu0 0.0
    %4115 = vmatprep.subr.mxu0 0.0
    %4116 = vmatpush1.msra.mxu0 0.0
    %4117 = vmatprep.subr.mxu0 0.0
    %4118 = vmatpush1.msra.mxu0 0.0
    %4119 = vmatprep.mubr.f32.mxu0 0.0
    %4120 = vmatmul.mubr.f32.gmra.mrb[0].mxu0 %v4053
    %v4121 = vpop.f32.mrb[0].mxu0
    %v4122 = vadd.f32 0.0, %v4121
    %v4123 = vpop.f32.mrb[0].mxu0
    %v4124 = vadd.f32 0.0, %v4123
    %4125 = vdwg.mxu0
    %v4128 = vcombine.low %v4122, %v4124
    %v4130 = vunpack.c.l.s4 1983009808
    %v4131 = vunpack.c.0.s8 %v4130
    %v4132 = vlaneseq
    %v4133 = vshrl.u32 %v4132, 7
    %v4134 = vsub.s32 %v4131, %v4133
    %v4135 = vrot.slane %v4128, %v4134
    %v4137 = vadd.f32 %v4051, %v4135
    %v4138 = vxor.u32 %v4137, 2147483648
    %v4139 = vmul.f32 %v4138, 1.442695
    %v4140 = vpow.pop %v4139
    %v4141 = vadd.f32 %v4140, 1.0
    %v4142 = vrcp.pop %v4141
    %v4143 = vmul.f32 1.0, %v4142
    %4145 = vrot.lane.b32.xlu0 %v4137, 64
    %v4146 = vpop.permute.xlu0 %4145
    %v4147 = vrot.slane %v4146, 2
    %v4149 = vtanh.pop %v4147
    %v4150 = vmul.f32 %v4143, %v4041
    %v4151 = vmul.f32 %v4143, %v4149
    %4153 = vrot.lane.b32.xlu0 %v4151, 64
    %v4154 = vpop.permute.xlu0 %4153
    %v4156 = vadd.f32 %v4150, %v4154
    %v4157 = vtanh.pop %v4156
    %v4159 = vrot.slane %v4143, 2
    %4162 = vrot.lane.b32.xlu0 %v4157, 64
    %v4163 = vpop.permute.xlu0 %4162
    %v4165 = vmul.f32 %v4159, %v4163
    %v4166 = vld [vmem:[%s1353] sm:$0xf]
    %v4168 = vsel %vm345, %v4165, 0
    %4170 = vmatprep.subr.mxu0 %v3579
    %4171 = vmatpush1.msra.mxu0 %v3578
    %4172 = vmatprep.subr.mxu0 %v3581
    %4173 = vmatpush1.msra.mxu0 %v3580
    %4174 = vmatprep.subr.mxu0 %v3583
    %4175 = vmatpush1.msra.mxu0 %v3582
    %4176 = vmatprep.subr.mxu0 %v3585
    %4177 = vmatpush1.msra.mxu0 %v3584
    %4178 = vmatprep.subr.mxu0 %v3587
    %4179 = vmatpush1.msra.mxu0 %v3586
    %4180 = vmatprep.subr.mxu0 %v3589
    %4181 = vmatpush1.msra.mxu0 %v3588
    %4182 = vmatprep.subr.mxu0 %v3591
    %4183 = vmatpush1.msra.mxu0 %v3590
    %4184 = vmatprep.subr.mxu0 %v3593
    %4185 = vmatpush1.msra.mxu0 %v3592
    %4186 = vmatprep.subr.mxu0 0.0
    %4187 = vmatpush1.msra.mxu0 0.0
    %4188 = vmatprep.subr.mxu0 0.0
    %4189 = vmatpush1.msra.mxu0 0.0
    %4190 = vmatprep.subr.mxu0 0.0
    %4191 = vmatpush1.msra.mxu0 0.0
    %4192 = vmatprep.subr.mxu0 0.0
    %4193 = vmatpush1.msra.mxu0 0.0
    %4194 = vmatprep.subr.mxu0 0.0
    %4195 = vmatpush1.msra.mxu0 0.0
    %4196 = vmatprep.subr.mxu0 0.0
    %4197 = vmatpush1.msra.mxu0 0.0
    %4198 = vmatprep.subr.mxu0 0.0
    %4199 = vmatpush1.msra.mxu0 0.0
    %4200 = vmatprep.subr.mxu0 0.0
    %4201 = vmatpush1.msra.mxu0 0.0
    %4202 = vmatprep.subr.mxu0 0.0
    %4203 = vmatpush1.msra.mxu0 0.0
    %4204 = vmatprep.subr.mxu0 0.0
    %4205 = vmatpush1.msra.mxu0 0.0
    %4206 = vmatprep.subr.mxu0 0.0
    %4207 = vmatpush1.msra.mxu0 0.0
    %4208 = vmatprep.subr.mxu0 0.0
    %4209 = vmatpush1.msra.mxu0 0.0
    %4210 = vmatprep.subr.mxu0 0.0
    %4211 = vmatpush1.msra.mxu0 0.0
    %4212 = vmatprep.subr.mxu0 0.0
    %4213 = vmatpush1.msra.mxu0 0.0
    %4214 = vmatprep.subr.mxu0 0.0
    %4215 = vmatpush1.msra.mxu0 0.0
    %4216 = vmatprep.subr.mxu0 0.0
    %4217 = vmatpush1.msra.mxu0 0.0
    %4218 = vmatprep.subr.mxu0 0.0
    %4219 = vmatpush1.msra.mxu0 0.0
    %4220 = vmatprep.subr.mxu0 0.0
    %4221 = vmatpush1.msra.mxu0 0.0
    %4222 = vmatprep.subr.mxu0 0.0
    %4223 = vmatpush1.msra.mxu0 0.0
    %4224 = vmatprep.subr.mxu0 0.0
    %4225 = vmatpush1.msra.mxu0 0.0
    %4226 = vmatprep.subr.mxu0 0.0
    %4227 = vmatpush1.msra.mxu0 0.0
    %4228 = vmatprep.subr.mxu0 0.0
    %4229 = vmatpush1.msra.mxu0 0.0
    %4230 = vmatprep.subr.mxu0 0.0
    %4231 = vmatpush1.msra.mxu0 0.0
    %4232 = vmatprep.subr.mxu0 0.0
    %4233 = vmatpush1.msra.mxu0 0.0
    %4234 = vmatprep.mubr.f32.mxu0 0.0
    %4235 = vmatmul.mubr.f32.gmra.mrb[0].mxu0 %v4168
    %v4236 = vpop.f32.mrb[0].mxu0
    %v4237 = vadd.f32 0.0, %v4236
    %v4238 = vpop.f32.mrb[0].mxu0
    %v4239 = vadd.f32 0.0, %v4238
    %4240 = vdwg.mxu0
    %v4243 = vcombine.low %v4237, %v4239
    %v4245 = vunpack.c.l.s4 1983009808
    %v4246 = vunpack.c.0.s8 %v4245
    %v4247 = vlaneseq
    %v4248 = vshrl.u32 %v4247, 7
    %v4249 = vsub.s32 %v4246, %v4248
    %v4250 = vrot.slane %v4243, %v4249
    %v4252 = vadd.f32 %v4166, %v4250
    %v4253 = vxor.u32 %v4252, 2147483648
    %v4254 = vmul.f32 %v4253, 1.442695
    %v4255 = vpow.pop %v4254
    %v4256 = vadd.f32 %v4255, 1.0
    %v4257 = vrcp.pop %v4256
    %v4258 = vmul.f32 1.0, %v4257
    %4260 = vrot.lane.b32.xlu0 %v4252, 64
    %v4261 = vpop.permute.xlu0 %4260
    %v4262 = vrot.slane %v4261, 2
    %v4264 = vtanh.pop %v4262
    %v4265 = vmul.f32 %v4258, %v4156
    %v4266 = vmul.f32 %v4258, %v4264
    %4268 = vrot.lane.b32.xlu0 %v4266, 64
    %v4269 = vpop.permute.xlu0 %4268
    %v4271 = vadd.f32 %v4265, %v4269
    %v4272 = vtanh.pop %v4271
    %v4274 = vrot.slane %v4258, 2
    %4277 = vrot.lane.b32.xlu0 %v4272, 64
    %v4278 = vpop.permute.xlu0 %4277
    %v4280 = vmul.f32 %v4274, %v4278
    %v4281 = vld [vmem:[%s1552] sm:$0xf]
    %v4283 = vsel %vm345, %v4280, 0
    %4285 = vmatprep.subr.mxu0 %v3579
    %4286 = vmatpush1.msra.mxu0 %v3578
    %4287 = vmatprep.subr.mxu0 %v3581
    %4288 = vmatpush1.msra.mxu0 %v3580
    %4289 = vmatprep.subr.mxu0 %v3583
    %4290 = vmatpush1.msra.mxu0 %v3582
    %4291 = vmatprep.subr.mxu0 %v3585
    %4292 = vmatpush1.msra.mxu0 %v3584
    %4293 = vmatprep.subr.mxu0 %v3587
    %4294 = vmatpush1.msra.mxu0 %v3586
    %4295 = vmatprep.subr.mxu0 %v3589
    %4296 = vmatpush1.msra.mxu0 %v3588
    %4297 = vmatprep.subr.mxu0 %v3591
    %4298 = vmatpush1.msra.mxu0 %v3590
    %4299 = vmatprep.subr.mxu0 %v3593
    %4300 = vmatpush1.msra.mxu0 %v3592
    %4301 = vmatprep.subr.mxu0 0.0
    %4302 = vmatpush1.msra.mxu0 0.0
    %4303 = vmatprep.subr.mxu0 0.0
    %4304 = vmatpush1.msra.mxu0 0.0
    %4305 = vmatprep.subr.mxu0 0.0
    %4306 = vmatpush1.msra.mxu0 0.0
    %4307 = vmatprep.subr.mxu0 0.0
    %4308 = vmatpush1.msra.mxu0 0.0
    %4309 = vmatprep.subr.mxu0 0.0
    %4310 = vmatpush1.msra.mxu0 0.0
    %4311 = vmatprep.subr.mxu0 0.0
    %4312 = vmatpush1.msra.mxu0 0.0
    %4313 = vmatprep.subr.mxu0 0.0
    %4314 = vmatpush1.msra.mxu0 0.0
    %4315 = vmatprep.subr.mxu0 0.0
    %4316 = vmatpush1.msra.mxu0 0.0
    %4317 = vmatprep.subr.mxu0 0.0
    %4318 = vmatpush1.msra.mxu0 0.0
    %4319 = vmatprep.subr.mxu0 0.0
    %4320 = vmatpush1.msra.mxu0 0.0
    %4321 = vmatprep.subr.mxu0 0.0
    %4322 = vmatpush1.msra.mxu0 0.0
    %4323 = vmatprep.subr.mxu0 0.0
    %4324 = vmatpush1.msra.mxu0 0.0
    %4325 = vmatprep.subr.mxu0 0.0
    %4326 = vmatpush1.msra.mxu0 0.0
    %4327 = vmatprep.subr.mxu0 0.0
    %4328 = vmatpush1.msra.mxu0 0.0
    %4329 = vmatprep.subr.mxu0 0.0
    %4330 = vmatpush1.msra.mxu0 0.0
    %4331 = vmatprep.subr.mxu0 0.0
    %4332 = vmatpush1.msra.mxu0 0.0
    %4333 = vmatprep.subr.mxu0 0.0
    %4334 = vmatpush1.msra.mxu0 0.0
    %4335 = vmatprep.subr.mxu0 0.0
    %4336 = vmatpush1.msra.mxu0 0.0
    %4337 = vmatprep.subr.mxu0 0.0
    %4338 = vmatpush1.msra.mxu0 0.0
    %4339 = vmatprep.subr.mxu0 0.0
    %4340 = vmatpush1.msra.mxu0 0.0
    %4341 = vmatprep.subr.mxu0 0.0
    %4342 = vmatpush1.msra.mxu0 0.0
    %4343 = vmatprep.subr.mxu0 0.0
    %4344 = vmatpush1.msra.mxu0 0.0
    %4345 = vmatprep.subr.mxu0 0.0
    %4346 = vmatpush1.msra.mxu0 0.0
    %4347 = vmatprep.subr.mxu0 0.0
    %4348 = vmatpush1.msra.mxu0 0.0
    %4349 = vmatprep.mubr.f32.mxu0 0.0
    %4350 = vmatmul.mubr.f32.gmra.mrb[0].mxu0 %v4283
    %v4351 = vpop.f32.mrb[0].mxu0
    %v4352 = vadd.f32 0.0, %v4351
    %v4353 = vpop.f32.mrb[0].mxu0
    %v4354 = vadd.f32 0.0, %v4353
    %4355 = vdwg.mxu0
    %v4358 = vcombine.low %v4352, %v4354
    %v4360 = vunpack.c.l.s4 1983009808
    %v4361 = vunpack.c.0.s8 %v4360
    %v4362 = vlaneseq
    %v4363 = vshrl.u32 %v4362, 7
    %v4364 = vsub.s32 %v4361, %v4363
    %v4365 = vrot.slane %v4358, %v4364
    %v4367 = vadd.f32 %v4281, %v4365
    %v4368 = vxor.u32 %v4367, 2147483648
    %v4369 = vmul.f32 %v4368, 1.442695
    %v4370 = vpow.pop %v4369
    %v4371 = vadd.f32 %v4370, 1.0
    %v4372 = vrcp.pop %v4371
    %v4373 = vmul.f32 1.0, %v4372
    %4375 = vrot.lane.b32.xlu0 %v4367, 64
    %v4376 = vpop.permute.xlu0 %4375
    %v4377 = vrot.slane %v4376, 2
    %v4379 = vtanh.pop %v4377
    %v4380 = vmul.f32 %v4373, %v4271
    %v4381 = vmul.f32 %v4373, %v4379
    %4383 = vrot.lane.b32.xlu0 %v4381, 64
    %v4384 = vpop.permute.xlu0 %4383
    %v4386 = vadd.f32 %v4380, %v4384
    %v4387 = vtanh.pop %v4386
    %v4389 = vrot.slane %v4373, 2
    %4392 = vrot.lane.b32.xlu0 %v4387, 64
    %v4393 = vpop.permute.xlu0 %4392
    %v4395 = vmul.f32 %v4389, %v4393
    %v4396 = vld [vmem:[%s1751] sm:$0xf]
    %v4398 = vsel %vm345, %v4395, 0
    %4400 = vmatprep.subr.mxu0 %v3579
    %4401 = vmatpush1.msra.mxu0 %v3578
    %4402 = vmatprep.subr.mxu0 %v3581
    %4403 = vmatpush1.msra.mxu0 %v3580
    %4404 = vmatprep.subr.mxu0 %v3583
    %4405 = vmatpush1.msra.mxu0 %v3582
    %4406 = vmatprep.subr.mxu0 %v3585
    %4407 = vmatpush1.msra.mxu0 %v3584
    %4408 = vmatprep.subr.mxu0 %v3587
    %4409 = vmatpush1.msra.mxu0 %v3586
    %4410 = vmatprep.subr.mxu0 %v3589
    %4411 = vmatpush1.msra.mxu0 %v3588
    %4412 = vmatprep.subr.mxu0 %v3591
    %4413 = vmatpush1.msra.mxu0 %v3590
    %4414 = vmatprep.subr.mxu0 %v3593
    %4415 = vmatpush1.msra.mxu0 %v3592
    %4416 = vmatprep.subr.mxu0 0.0
    %4417 = vmatpush1.msra.mxu0 0.0
    %4418 = vmatprep.subr.mxu0 0.0
    %4419 = vmatpush1.msra.mxu0 0.0
    %4420 = vmatprep.subr.mxu0 0.0
    %4421 = vmatpush1.msra.mxu0 0.0
    %4422 = vmatprep.subr.mxu0 0.0
    %4423 = vmatpush1.msra.mxu0 0.0
    %4424 = vmatprep.subr.mxu0 0.0
    %4425 = vmatpush1.msra.mxu0 0.0
    %4426 = vmatprep.subr.mxu0 0.0
    %4427 = vmatpush1.msra.mxu0 0.0
    %4428 = vmatprep.subr.mxu0 0.0
    %4429 = vmatpush1.msra.mxu0 0.0
    %4430 = vmatprep.subr.mxu0 0.0
    %4431 = vmatpush1.msra.mxu0 0.0
    %4432 = vmatprep.subr.mxu0 0.0
    %4433 = vmatpush1.msra.mxu0 0.0
    %4434 = vmatprep.subr.mxu0 0.0
    %4435 = vmatpush1.msra.mxu0 0.0
    %4436 = vmatprep.subr.mxu0 0.0
    %4437 = vmatpush1.msra.mxu0 0.0
    %4438 = vmatprep.subr.mxu0 0.0
    %4439 = vmatpush1.msra.mxu0 0.0
    %4440 = vmatprep.subr.mxu0 0.0
    %4441 = vmatpush1.msra.mxu0 0.0
    %4442 = vmatprep.subr.mxu0 0.0
    %4443 = vmatpush1.msra.mxu0 0.0
    %4444 = vmatprep.subr.mxu0 0.0
    %4445 = vmatpush1.msra.mxu0 0.0
    %4446 = vmatprep.subr.mxu0 0.0
    %4447 = vmatpush1.msra.mxu0 0.0
    %4448 = vmatprep.subr.mxu0 0.0
    %4449 = vmatpush1.msra.mxu0 0.0
    %4450 = vmatprep.subr.mxu0 0.0
    %4451 = vmatpush1.msra.mxu0 0.0
    %4452 = vmatprep.subr.mxu0 0.0
    %4453 = vmatpush1.msra.mxu0 0.0
    %4454 = vmatprep.subr.mxu0 0.0
    %4455 = vmatpush1.msra.mxu0 0.0
    %4456 = vmatprep.subr.mxu0 0.0
    %4457 = vmatpush1.msra.mxu0 0.0
    %4458 = vmatprep.subr.mxu0 0.0
    %4459 = vmatpush1.msra.mxu0 0.0
    %4460 = vmatprep.subr.mxu0 0.0
    %4461 = vmatpush1.msra.mxu0 0.0
    %4462 = vmatprep.subr.mxu0 0.0
    %4463 = vmatpush1.msra.mxu0 0.0
    %4464 = vmatprep.mubr.f32.mxu0 0.0
    %4465 = vmatmul.mubr.f32.gmra.mrb[0].mxu0 %v4398
    %v4466 = vpop.f32.mrb[0].mxu0
    %v4467 = vadd.f32 0.0, %v4466
    %v4468 = vpop.f32.mrb[0].mxu0
    %v4469 = vadd.f32 0.0, %v4468
    %4470 = vdwg.mxu0
    %v4473 = vcombine.low %v4467, %v4469
    %v4475 = vunpack.c.l.s4 1983009808
    %v4476 = vunpack.c.0.s8 %v4475
    %v4477 = vlaneseq
    %v4478 = vshrl.u32 %v4477, 7
    %v4479 = vsub.s32 %v4476, %v4478
    %v4480 = vrot.slane %v4473, %v4479
    %v4482 = vadd.f32 %v4396, %v4480
    %v4483 = vxor.u32 %v4482, 2147483648
    %v4484 = vmul.f32 %v4483, 1.442695
    %v4485 = vpow.pop %v4484
    %v4486 = vadd.f32 %v4485, 1.0
    %v4487 = vrcp.pop %v4486
    %v4488 = vmul.f32 1.0, %v4487
    %4490 = vrot.lane.b32.xlu0 %v4482, 64
    %v4491 = vpop.permute.xlu0 %4490
    %v4492 = vrot.slane %v4491, 2
    %v4494 = vtanh.pop %v4492
    %v4495 = vmul.f32 %v4488, %v4386
    %v4496 = vmul.f32 %v4488, %v4494
    %4498 = vrot.lane.b32.xlu0 %v4496, 64
    %v4499 = vpop.permute.xlu0 %4498
    %v4501 = vadd.f32 %v4495, %v4499
    %v4502 = vtanh.pop %v4501
    %v4504 = vrot.slane %v4488, 2
    %4507 = vrot.lane.b32.xlu0 %v4502, 64
    %v4508 = vpop.permute.xlu0 %4507
    %v4510 = vmul.f32 %v4504, %v4508
    %v4511 = vld [vmem:[%s10] sm:$0x1]
    %v4513 = vlaneseq
    %v4514 = vshrl.u32 %v4513, 7
    %v4515 = vsub.s32 0, %v4514
    %v4516 = vrot.slane %v4511, %v4515
    %v4518 = vmul.f32 %v4510, %v4516
    %vm4519 = vcmask 517120
    %v4520 = vsel %vm4519, %v4518, 0.0
    %4521 = vadd.xlane.f32.xlu0 %v4520
    %v4522 = vpop.xlane.xlu0 %4521
    %v4523 = vld [vmem:[#allocation3] sm:$0x1]
    %v4525 = vlaneseq
    %v4526 = vshrl.u32 %v4525, 7
    %v4527 = vsub.s32 0, %v4526
    %v4528 = vrot.slane %v4523, %v4527
    %v4530 = vadd.f32 %v4522, %v4528
    %vm4531 = vcmask 1024
    %4532 = vst.msk [vmem:[%s12] sm:$0x3] %vm4531, %v4530
    // Predicated region
    $region70: #{stock_lstm_forward.1} parent=1 // pred_check
      _
    $region71: #{stock_lstm_forward.1} parent=1 // pred_check_branch
      %4534 = sbr.rel (0) target = $region73
    $region72: #{stock_lstm_forward.1} parent=1 // pred_region
      _
    $region73: #{stock_lstm_forward.1} parent=1 // pred_fallthru
      _
    // Predicated region
    $region74: #{stock_lstm_forward.1} parent=1 // pred_check
      _
    $region75: #{stock_lstm_forward.1} parent=1 // pred_check_branch
      %4536 = sbr.rel (0) target = $region77
    $region76: #{stock_lstm_forward.1} parent=1 // pred_region
      _
    $region77: #{stock_lstm_forward.1} parent=1 // pred_fallthru
      _
    %4537 = vsyncpa [#allocation5], 1
    %4538 = vsyncpa [#allocation7], 1
    %4539 = vsyncpa [#allocation10], 1

</llo_original>
